<compile_context>
chip_gen: v7x
topology: tpu7x:2x2x1
jax: 0.10.0
libtpu: 0.0.40
codegen_flags: <defaults>
</compile_context>

<pallas_src>
import functools

import jax
import jax.numpy as jnp
from jax.experimental import pallas as pl
from jax.experimental.pallas import tpu as pltpu


# ----------------------------- Pallas kernel -------------------------------

def _matmul_epilogue_kernel(a_ref, b_ref, bias_ref, o_ref, acc_ref, *, act):
    """Tiled matmul with f32 accumulation and fused bias+activation epilogue."""
    @pl.when(pl.program_id(2) == 0)
    def _():
        acc_ref[...] = jnp.zeros_like(acc_ref)

    acc_ref[...] += jnp.dot(
        a_ref[...], b_ref[...], preferred_element_type=jnp.float32
    )

    @pl.when(pl.program_id(2) == pl.num_programs(2) - 1)
    def _():
        y = acc_ref[...] + bias_ref[...]
        if act == "leaky_relu":
            y = jnp.where(y >= 0.0, y, 0.2 * y)
        elif act == "sigmoid":
            y = jax.nn.sigmoid(y)
        o_ref[...] = y


def _round_up(x, m):
    return (x + m - 1) // m * m


def matmul_bias_act(a, b, bias, act="none"):
    """a: (M, K) f32, b: (K, N) f32, bias: (N,) f32 -> (M, N) f32.

    Operands are zero-padded to tile multiples and cast to bf16 for the MXU;
    accumulation / bias / activation stay in f32.
    """
    M, K = a.shape
    _, N = b.shape

    # Per-layer adaptive tiles: sublane-multiple M tile, 128-lane N/K tiles.
    tm = min(256, _round_up(M, 8))
    tn = min(256, _round_up(N, 128))
    tk = min(512, _round_up(K, 128))
    Mp, Kp, Np = _round_up(M, tm), _round_up(K, tk), _round_up(N, tn)

    a_p = jnp.pad(a, ((0, Mp - M), (0, Kp - K))).astype(jnp.bfloat16)
    b_p = jnp.pad(b, ((0, Kp - K), (0, Np - N))).astype(jnp.bfloat16)
    bias_p = jnp.pad(bias, (0, Np - N)).reshape(1, Np).astype(jnp.float32)

    grid = (Mp // tm, Np // tn, Kp // tk)
    kernel = functools.partial(_matmul_epilogue_kernel, act=act)

    cost = pl.CostEstimate(
        flops=2 * Mp * Np * Kp,
        transcendentals=Mp * Np if act == "sigmoid" else 0,
        bytes_accessed=(Mp * Kp + Kp * Np) * 2 + Mp * Np * 4,
    )

    out = pl.pallas_call(
        kernel,
        out_shape=jax.ShapeDtypeStruct((Mp, Np), jnp.float32),
        grid_spec=pltpu.PrefetchScalarGridSpec(
            num_scalar_prefetch=0,
            grid=grid,
            in_specs=[
                pl.BlockSpec((tm, tk), lambda i, j, k: (i, k)),
                pl.BlockSpec((tk, tn), lambda i, j, k: (k, j)),
                pl.BlockSpec((1, tn), lambda i, j, k: (0, j)),
            ],
            out_specs=pl.BlockSpec((tm, tn), lambda i, j, k: (i, j)),
            scratch_shapes=[pltpu.VMEM((tm, tn), jnp.float32)],
        ),
        compiler_params=pltpu.CompilerParams(
            dimension_semantics=("parallel", "parallel", "arbitrary"),
            vmem_limit_bytes=64 * 1024 * 1024,  # safe on v7x's 64 MiB VMEM
        ),
        cost_estimate=cost,
    )(a_p, b_p, bias_p)

    return out[:M, :N]


# -------------------------------- JAX glue ---------------------------------

def conv2d_fused(x, w, bias, *, stride, padding, act):
    """x: NHWC f32; w: PyTorch layout (Cout, Cin, KH, KW); bias: (Cout,) or None.

    Conv lowered to im2col + one tiled Pallas matmul with fused epilogue.
    """
    # TODO(synk): im2col is still materialized by XLA (KH*KW blow-up of the
    # activation); folding the tap loop into an extra K-grid reduction axis
    # with per-tap window offsets would remove that HBM traffic at scale.
    cout, cin, kh, kw = w.shape
    xp = jnp.pad(x, ((0, 0), (padding, padding), (padding, padding), (0, 0)))
    N, H, W, C = xp.shape
    oh = (H - kh) // stride + 1
    ow = (W - kw) // stride + 1

    cols = []
    for i in range(kh):
        for j in range(kw):
            cols.append(
                xp[:, i:i + stride * (oh - 1) + 1:stride,
                      j:j + stride * (ow - 1) + 1:stride, :]
            )
    patches = jnp.stack(cols, axis=3).reshape(N * oh * ow, kh * kw * cin)
    wmat = jnp.transpose(w, (2, 3, 1, 0)).reshape(kh * kw * cin, cout)
    if bias is None:
        bias = jnp.zeros((cout,), jnp.float32)

    y = matmul_bias_act(patches, wmat, bias, act=act)
    return y.reshape(N, oh, ow, cout)


def spectral_normalize(w, key, n_iters=3, eps=1e-12):
    """W / sigma_max(W) with power iteration on W viewed as (Cout, -1)."""
    # TODO(synk): PyTorch's spectral_norm carries a persistent `u` vector and
    # does one power-iteration per training forward; here we approximate sigma
    # with a fixed number of iterations from a deterministic start vector.
    cout = w.shape[0]
    wmat = w.reshape(cout, -1).astype(jnp.float32)
    u = jax.random.normal(key, (cout,), jnp.float32)
    u = u / (jnp.linalg.norm(u) + eps)
    v = None
    for _ in range(n_iters):
        v = wmat.T @ u
        v = v / (jnp.linalg.norm(v) + eps)
        u = wmat @ v
        u = u / (jnp.linalg.norm(u) + eps)
    sigma = u @ (wmat @ v)
    return w / sigma


# ------------------------------- parameters --------------------------------

def init_params(key, in_channels=3, gain=0.02, use_spectral_norm=True):
    """BaseNetwork.init_weights('normal', 0.02): w ~ N(0, 0.02); no bias when SN."""
    specs = [(64, in_channels), (128, 64), (256, 128), (512, 256), (1, 512)]
    keys = jax.random.split(key, 2 * len(specs))
    params = {}
    for idx, (cout, cin) in enumerate(specs):
        w = gain * jax.random.normal(keys[2 * idx], (cout, cin, 4, 4), jnp.float32)
        if use_spectral_norm:
            w = spectral_normalize(w, keys[2 * idx + 1])
            b = None
        else:
            b = jnp.zeros((cout,), jnp.float32)
        params[f"conv{idx + 1}"] = (w, b)
    return params


# --------------------------------- forward ---------------------------------

def discriminator_forward(params, x_nchw, use_sigmoid=True):
    x = jnp.transpose(x_nchw, (0, 2, 3, 1)).astype(jnp.float32)  # -> NHWC

    w, b = params["conv1"]
    x = conv2d_fused(x, w, b, stride=2, padding=1, act="leaky_relu")
    w, b = params["conv2"]
    x = conv2d_fused(x, w, b, stride=2, padding=1, act="leaky_relu")
    w, b = params["conv3"]
    x = conv2d_fused(x, w, b, stride=2, padding=1, act="leaky_relu")
    w, b = params["conv4"]
    x = conv2d_fused(x, w, b, stride=1, padding=1, act="leaky_relu")
    w, b = params["conv5"]
    x = conv2d_fused(x, w, b, stride=1, padding=1,
                     act="sigmoid" if use_sigmoid else "none")

    return jnp.transpose(x, (0, 3, 1, 2))                        # back to NCHW


# ----------------------------------- main -----------------------------------

if __name__ == "__main__":
    key = jax.random.PRNGKey(0)
    pkey, xkey = jax.random.split(key)

    in_channels = 3
    params = init_params(pkey, in_channels=in_channels)
    x = jax.random.normal(xkey, (2, in_channels, 32, 32), jnp.float32)  # NCHW

    fwd = jax.jit(functools.partial(discriminator_forward, params))
    y = fwd(x)
    jax.block_until_ready(y)

    # 32 -> 16 -> 8 -> 4 -> 3 -> 2 spatial; 1 output channel; sigmoid range.
    assert y.shape == (2, 1, 2, 2), y.shape
    assert bool(jnp.all(jnp.isfinite(y)))
    assert bool(jnp.all((y >= 0.0) & (y <= 1.0)))
    print("KERNEL_OK")
</pallas_src>

<mosaic_0001>
module attributes {stable_mosaic.version = 11 : i64} {
  func.func @_matmul_epilogue_kernel(%arg0: i32, %arg1: i32, %arg2: i32, %arg3: memref<256x128xbf16, #tpu.memory_space<vmem>>, %arg4: memref<128x128xbf16, #tpu.memory_space<vmem>>, %arg5: memref<1x128xf32, #tpu.memory_space<vmem>>, %arg6: memref<256x128xf32, #tpu.memory_space<vmem>>, %arg7: memref<256x128xf32, #tpu.memory_space<vmem>>) attributes {dimension_semantics = [#tpu.dimension_semantics<parallel>, #tpu.dimension_semantics<parallel>, #tpu.dimension_semantics<arbitrary>], iteration_bounds = array<i64: 2, 1, 1>, scalar_prefetch = 0 : i64, scratch_operands = 1 : i64, tpu.core_type = #tpu.core_type<tc>, window_params = [{transform_indices = @transform_0, window_bounds = array<i64: 256, 128>}, {transform_indices = @transform_1, window_bounds = array<i64: 128, 128>}, {transform_indices = @transform_2, window_bounds = array<i64: 1, 128>}, {transform_indices = @transform_3, window_bounds = array<i64: 256, 128>}]} {
    %c0_i32 = arith.constant 0 : i32
    %0 = arith.cmpi eq, %arg2, %c0_i32 : i32
    %1 = arith.extui %0 : i1 to i32
    %c0_i32_0 = arith.constant 0 : i32
    %2 = arith.cmpi ne, %1, %c0_i32_0 : i32
    scf.if %2 {
      %cst_10 = arith.constant 0.000000e+00 : f32
      %12 = vector.broadcast %cst_10 : f32 to vector<256x128xf32>
      %c0_11 = arith.constant 0 : index
      %c0_12 = arith.constant 0 : index
      %13 = vector.load %arg7[%c0_11, %c0_12] : memref<256x128xf32, #tpu.memory_space<vmem>>, vector<256x128xf32>
      tpu.vector_store %arg7[%c0_11, %c0_12], %12 {strides = array<i32>} : memref<256x128xf32, #tpu.memory_space<vmem>>, vector<256x128xf32>,
    } else {
    }
    %c0 = arith.constant 0 : index
    %c0_1 = arith.constant 0 : index
    %3 = vector.load %arg7[%c0, %c0_1] : memref<256x128xf32, #tpu.memory_space<vmem>>, vector<256x128xf32>
    %c0_2 = arith.constant 0 : index
    %c0_3 = arith.constant 0 : index
    %4 = vector.load %arg3[%c0_2, %c0_3] : memref<256x128xbf16, #tpu.memory_space<vmem>>, vector<256x128xbf16>
    %c0_4 = arith.constant 0 : index
    %c0_5 = arith.constant 0 : index
    %5 = vector.load %arg4[%c0_4, %c0_5] : memref<128x128xbf16, #tpu.memory_space<vmem>>, vector<128x128xbf16>
    %cst = arith.constant dense<0.000000e+00> : vector<256x128xf32>
    %6 = tpu.matmul %4, %5, %cst {dimension_numbers = #tpu.dot_dimension_numbers<[1], [0], [0], [1], [0, 0, 1, 1], [], []>} : vector<256x128xbf16>, vector<128x128xbf16>, vector<256x128xf32> -> vector<256x128xf32>
    %7 = arith.addf %3, %6 : vector<256x128xf32>
    %c0_6 = arith.constant 0 : index
    %c0_7 = arith.constant 0 : index
    %8 = vector.load %arg7[%c0_6, %c0_7] : memref<256x128xf32, #tpu.memory_space<vmem>>, vector<256x128xf32>
    tpu.vector_store %arg7[%c0_6, %c0_7], %7 {strides = array<i32>} : memref<256x128xf32, #tpu.memory_space<vmem>>, vector<256x128xf32>,
    %c0_i32_8 = arith.constant 0 : i32
    %9 = arith.cmpi eq, %arg2, %c0_i32_8 : i32
    %10 = arith.extui %9 : i1 to i32
    %c0_i32_9 = arith.constant 0 : i32
    %11 = arith.cmpi ne, %10, %c0_i32_9 : i32
    scf.if %11 {
      %c0_10 = arith.constant 0 : index
      %c0_11 = arith.constant 0 : index
      %12 = vector.load %arg7[%c0_10, %c0_11] : memref<256x128xf32, #tpu.memory_space<vmem>>, vector<256x128xf32>
      %c0_12 = arith.constant 0 : index
      %c0_13 = arith.constant 0 : index
      %13 = vector.load %arg5[%c0_12, %c0_13] : memref<1x128xf32, #tpu.memory_space<vmem>>, vector<1x128xf32>
      %14 = vector.broadcast %13 : vector<1x128xf32> to vector<256x128xf32>
      %15 = arith.addf %12, %14 : vector<256x128xf32>
      %cst_14 = arith.constant 0.000000e+00 : f32
      %16 = vector.broadcast %cst_14 : f32 to vector<256x128xf32>
      %17 = arith.cmpf oge, %15, %16 : vector<256x128xf32>
      %cst_15 = arith.constant 2.000000e-01 : f32
      %18 = vector.broadcast %cst_15 : f32 to vector<256x128xf32>
      %19 = arith.mulf %18, %15 : vector<256x128xf32>
      %20 = arith.select %17, %15, %19 : vector<256x128xi1>, vector<256x128xf32>
      %c0_16 = arith.constant 0 : index
      %c0_17 = arith.constant 0 : index
      %21 = vector.load %arg6[%c0_16, %c0_17] : memref<256x128xf32, #tpu.memory_space<vmem>>, vector<256x128xf32>
      tpu.vector_store %arg6[%c0_16, %c0_17], %20 {strides = array<i32>} : memref<256x128xf32, #tpu.memory_space<vmem>>, vector<256x128xf32>,
    } else {
    }
    return
  }
  func.func @transform_0(%arg0: i32, %arg1: i32, %arg2: i32) -> (i32, i32) {
    %c0_i32 = arith.constant 0 : i32
    return %arg0, %arg2 : i32, i32
  }
  func.func @transform_1(%arg0: i32, %arg1: i32, %arg2: i32) -> (i32, i32) {
    %c0_i32 = arith.constant 0 : i32
    return %arg2, %arg1 : i32, i32
  }
  func.func @transform_2(%arg0: i32, %arg1: i32, %arg2: i32) -> (i32, i32) {
    %c0_i32 = arith.constant 0 : i32
    %c0_i32_0 = arith.constant 0 : i32
    return %c0_i32, %arg1 : i32, i32
  }
  func.func @transform_3(%arg0: i32, %arg1: i32, %arg2: i32) -> (i32, i32) {
    %c0_i32 = arith.constant 0 : i32
    return %arg0, %arg1 : i32, i32
  }
}

module attributes {stable_mosaic.version = 11 : i64} {
  func.func @_matmul_epilogue_kernel(%arg0: i32, %arg1: i32, %arg2: i32, %arg3: memref<128x512xbf16, #tpu.memory_space<vmem>>, %arg4: memref<512x128xbf16, #tpu.memory_space<vmem>>, %arg5: memref<1x128xf32, #tpu.memory_space<vmem>>, %arg6: memref<128x128xf32, #tpu.memory_space<vmem>>, %arg7: memref<128x128xf32, #tpu.memory_space<vmem>>) attributes {dimension_semantics = [#tpu.dimension_semantics<parallel>, #tpu.dimension_semantics<parallel>, #tpu.dimension_semantics<arbitrary>], iteration_bounds = array<i64: 1, 1, 2>, scalar_prefetch = 0 : i64, scratch_operands = 1 : i64, tpu.core_type = #tpu.core_type<tc>, window_params = [{transform_indices = @transform_0, window_bounds = array<i64: 128, 512>}, {transform_indices = @transform_1, window_bounds = array<i64: 512, 128>}, {transform_indices = @transform_2, window_bounds = array<i64: 1, 128>}, {transform_indices = @transform_3, window_bounds = array<i64: 128, 128>}]} {
    %c0_i32 = arith.constant 0 : i32
    %0 = arith.cmpi eq, %arg2, %c0_i32 : i32
    %1 = arith.extui %0 : i1 to i32
    %c0_i32_0 = arith.constant 0 : i32
    %2 = arith.cmpi ne, %1, %c0_i32_0 : i32
    scf.if %2 {
      %cst_9 = arith.constant 0.000000e+00 : f32
      %12 = vector.broadcast %cst_9 : f32 to vector<128x128xf32>
      %c0_10 = arith.constant 0 : index
      %c0_11 = arith.constant 0 : index
      %13 = vector.load %arg7[%c0_10, %c0_11] : memref<128x128xf32, #tpu.memory_space<vmem>>, vector<128x128xf32>
      tpu.vector_store %arg7[%c0_10, %c0_11], %12 {strides = array<i32>} : memref<128x128xf32, #tpu.memory_space<vmem>>, vector<128x128xf32>,
    } else {
    }
    %c0 = arith.constant 0 : index
    %c0_1 = arith.constant 0 : index
    %3 = vector.load %arg7[%c0, %c0_1] : memref<128x128xf32, #tpu.memory_space<vmem>>, vector<128x128xf32>
    %c0_2 = arith.constant 0 : index
    %c0_3 = arith.constant 0 : index
    %4 = vector.load %arg3[%c0_2, %c0_3] : memref<128x512xbf16, #tpu.memory_space<vmem>>, vector<128x512xbf16>
    %c0_4 = arith.constant 0 : index
    %c0_5 = arith.constant 0 : index
    %5 = vector.load %arg4[%c0_4, %c0_5] : memref<512x128xbf16, #tpu.memory_space<vmem>>, vector<512x128xbf16>
    %cst = arith.constant dense<0.000000e+00> : vector<128x128xf32>
    %6 = tpu.matmul %4, %5, %cst {dimension_numbers = #tpu.dot_dimension_numbers<[1], [0], [0], [1], [0, 0, 1, 1], [], []>} : vector<128x512xbf16>, vector<512x128xbf16>, vector<128x128xf32> -> vector<128x128xf32>
    %7 = arith.addf %3, %6 : vector<128x128xf32>
    %c0_6 = arith.constant 0 : index
    %c0_7 = arith.constant 0 : index
    %8 = vector.load %arg7[%c0_6, %c0_7] : memref<128x128xf32, #tpu.memory_space<vmem>>, vector<128x128xf32>
    tpu.vector_store %arg7[%c0_6, %c0_7], %7 {strides = array<i32>} : memref<128x128xf32, #tpu.memory_space<vmem>>, vector<128x128xf32>,
    %c1_i32 = arith.constant 1 : i32
    %9 = arith.cmpi eq, %arg2, %c1_i32 : i32
    %10 = arith.extui %9 : i1 to i32
    %c0_i32_8 = arith.constant 0 : i32
    %11 = arith.cmpi ne, %10, %c0_i32_8 : i32
    scf.if %11 {
      %c0_9 = arith.constant 0 : index
      %c0_10 = arith.constant 0 : index
      %12 = vector.load %arg7[%c0_9, %c0_10] : memref<128x128xf32, #tpu.memory_space<vmem>>, vector<128x128xf32>
      %c0_11 = arith.constant 0 : index
      %c0_12 = arith.constant 0 : index
      %13 = vector.load %arg5[%c0_11, %c0_12] : memref<1x128xf32, #tpu.memory_space<vmem>>, vector<1x128xf32>
      %14 = vector.broadcast %13 : vector<1x128xf32> to vector<128x128xf32>
      %15 = arith.addf %12, %14 : vector<128x128xf32>
      %cst_13 = arith.constant 0.000000e+00 : f32
      %16 = vector.broadcast %cst_13 : f32 to vector<128x128xf32>
      %17 = arith.cmpf oge, %15, %16 : vector<128x128xf32>
      %cst_14 = arith.constant 2.000000e-01 : f32
      %18 = vector.broadcast %cst_14 : f32 to vector<128x128xf32>
      %19 = arith.mulf %18, %15 : vector<128x128xf32>
      %20 = arith.select %17, %15, %19 : vector<128x128xi1>, vector<128x128xf32>
      %c0_15 = arith.constant 0 : index
      %c0_16 = arith.constant 0 : index
      %21 = vector.load %arg6[%c0_15, %c0_16] : memref<128x128xf32, #tpu.memory_space<vmem>>, vector<128x128xf32>
      tpu.vector_store %arg6[%c0_15, %c0_16], %20 {strides = array<i32>} : memref<128x128xf32, #tpu.memory_space<vmem>>, vector<128x128xf32>,
    } else {
    }
    return
  }
  func.func @transform_0(%arg0: i32, %arg1: i32, %arg2: i32) -> (i32, i32) {
    %c0_i32 = arith.constant 0 : i32
    return %arg0, %arg2 : i32, i32
  }
  func.func @transform_1(%arg0: i32, %arg1: i32, %arg2: i32) -> (i32, i32) {
    %c0_i32 = arith.constant 0 : i32
    return %arg2, %arg1 : i32, i32
  }
  func.func @transform_2(%arg0: i32, %arg1: i32, %arg2: i32) -> (i32, i32) {
    %c0_i32 = arith.constant 0 : i32
    %c0_i32_0 = arith.constant 0 : i32
    return %c0_i32, %arg1 : i32, i32
  }
  func.func @transform_3(%arg0: i32, %arg1: i32, %arg2: i32) -> (i32, i32) {
    %c0_i32 = arith.constant 0 : i32
    return %arg0, %arg1 : i32, i32
  }
}

module attributes {stable_mosaic.version = 11 : i64} {
  func.func @_matmul_epilogue_kernel(%arg0: i32, %arg1: i32, %arg2: i32, %arg3: memref<32x512xbf16, #tpu.memory_space<vmem>>, %arg4: memref<512x256xbf16, #tpu.memory_space<vmem>>, %arg5: memref<1x256xf32, #tpu.memory_space<vmem>>, %arg6: memref<32x256xf32, #tpu.memory_space<vmem>>, %arg7: memref<32x256xf32, #tpu.memory_space<vmem>>) attributes {dimension_semantics = [#tpu.dimension_semantics<parallel>, #tpu.dimension_semantics<parallel>, #tpu.dimension_semantics<arbitrary>], iteration_bounds = array<i64: 1, 1, 4>, scalar_prefetch = 0 : i64, scratch_operands = 1 : i64, tpu.core_type = #tpu.core_type<tc>, window_params = [{transform_indices = @transform_0, window_bounds = array<i64: 32, 512>}, {transform_indices = @transform_1, window_bounds = array<i64: 512, 256>}, {transform_indices = @transform_2, window_bounds = array<i64: 1, 256>}, {transform_indices = @transform_3, window_bounds = array<i64: 32, 256>}]} {
    %c0_i32 = arith.constant 0 : i32
    %0 = arith.cmpi eq, %arg2, %c0_i32 : i32
    %1 = arith.extui %0 : i1 to i32
    %c0_i32_0 = arith.constant 0 : i32
    %2 = arith.cmpi ne, %1, %c0_i32_0 : i32
    scf.if %2 {
      %cst_9 = arith.constant 0.000000e+00 : f32
      %12 = vector.broadcast %cst_9 : f32 to vector<32x256xf32>
      %c0_10 = arith.constant 0 : index
      %c0_11 = arith.constant 0 : index
      %13 = vector.load %arg7[%c0_10, %c0_11] : memref<32x256xf32, #tpu.memory_space<vmem>>, vector<32x256xf32>
      tpu.vector_store %arg7[%c0_10, %c0_11], %12 {strides = array<i32>} : memref<32x256xf32, #tpu.memory_space<vmem>>, vector<32x256xf32>,
    } else {
    }
    %c0 = arith.constant 0 : index
    %c0_1 = arith.constant 0 : index
    %3 = vector.load %arg7[%c0, %c0_1] : memref<32x256xf32, #tpu.memory_space<vmem>>, vector<32x256xf32>
    %c0_2 = arith.constant 0 : index
    %c0_3 = arith.constant 0 : index
    %4 = vector.load %arg3[%c0_2, %c0_3] : memref<32x512xbf16, #tpu.memory_space<vmem>>, vector<32x512xbf16>
    %c0_4 = arith.constant 0 : index
    %c0_5 = arith.constant 0 : index
    %5 = vector.load %arg4[%c0_4, %c0_5] : memref<512x256xbf16, #tpu.memory_space<vmem>>, vector<512x256xbf16>
    %cst = arith.constant dense<0.000000e+00> : vector<32x256xf32>
    %6 = tpu.matmul %4, %5, %cst {dimension_numbers = #tpu.dot_dimension_numbers<[1], [0], [0], [1], [0, 0, 1, 1], [], []>} : vector<32x512xbf16>, vector<512x256xbf16>, vector<32x256xf32> -> vector<32x256xf32>
    %7 = arith.addf %3, %6 : vector<32x256xf32>
    %c0_6 = arith.constant 0 : index
    %c0_7 = arith.constant 0 : index
    %8 = vector.load %arg7[%c0_6, %c0_7] : memref<32x256xf32, #tpu.memory_space<vmem>>, vector<32x256xf32>
    tpu.vector_store %arg7[%c0_6, %c0_7], %7 {strides = array<i32>} : memref<32x256xf32, #tpu.memory_space<vmem>>, vector<32x256xf32>,
    %c3_i32 = arith.constant 3 : i32
    %9 = arith.cmpi eq, %arg2, %c3_i32 : i32
    %10 = arith.extui %9 : i1 to i32
    %c0_i32_8 = arith.constant 0 : i32
    %11 = arith.cmpi ne, %10, %c0_i32_8 : i32
    scf.if %11 {
      %c0_9 = arith.constant 0 : index
      %c0_10 = arith.constant 0 : index
      %12 = vector.load %arg7[%c0_9, %c0_10] : memref<32x256xf32, #tpu.memory_space<vmem>>, vector<32x256xf32>
      %c0_11 = arith.constant 0 : index
      %c0_12 = arith.constant 0 : index
      %13 = vector.load %arg5[%c0_11, %c0_12] : memref<1x256xf32, #tpu.memory_space<vmem>>, vector<1x256xf32>
      %14 = vector.broadcast %13 : vector<1x256xf32> to vector<32x256xf32>
      %15 = arith.addf %12, %14 : vector<32x256xf32>
      %cst_13 = arith.constant 0.000000e+00 : f32
      %16 = vector.broadcast %cst_13 : f32 to vector<32x256xf32>
      %17 = arith.cmpf oge, %15, %16 : vector<32x256xf32>
      %cst_14 = arith.constant 2.000000e-01 : f32
      %18 = vector.broadcast %cst_14 : f32 to vector<32x256xf32>
      %19 = arith.mulf %18, %15 : vector<32x256xf32>
      %20 = arith.select %17, %15, %19 : vector<32x256xi1>, vector<32x256xf32>
      %c0_15 = arith.constant 0 : index
      %c0_16 = arith.constant 0 : index
      %21 = vector.load %arg6[%c0_15, %c0_16] : memref<32x256xf32, #tpu.memory_space<vmem>>, vector<32x256xf32>
      tpu.vector_store %arg6[%c0_15, %c0_16], %20 {strides = array<i32>} : memref<32x256xf32, #tpu.memory_space<vmem>>, vector<32x256xf32>,
    } else {
    }
    return
  }
  func.func @transform_0(%arg0: i32, %arg1: i32, %arg2: i32) -> (i32, i32) {
    %c0_i32 = arith.constant 0 : i32
    return %arg0, %arg2 : i32, i32
  }
  func.func @transform_1(%arg0: i32, %arg1: i32, %arg2: i32) -> (i32, i32) {
    %c0_i32 = arith.constant 0 : i32
    return %arg2, %arg1 : i32, i32
  }
  func.func @transform_2(%arg0: i32, %arg1: i32, %arg2: i32) -> (i32, i32) {
    %c0_i32 = arith.constant 0 : i32
    %c0_i32_0 = arith.constant 0 : i32
    return %c0_i32, %arg1 : i32, i32
  }
  func.func @transform_3(%arg0: i32, %arg1: i32, %arg2: i32) -> (i32, i32) {
    %c0_i32 = arith.constant 0 : i32
    return %arg0, %arg1 : i32, i32
  }
}

module attributes {stable_mosaic.version = 11 : i64} {
  func.func @_matmul_epilogue_kernel(%arg0: i32, %arg1: i32, %arg2: i32, %arg3: memref<24x512xbf16, #tpu.memory_space<vmem>>, %arg4: memref<512x256xbf16, #tpu.memory_space<vmem>>, %arg5: memref<1x256xf32, #tpu.memory_space<vmem>>, %arg6: memref<24x256xf32, #tpu.memory_space<vmem>>, %arg7: memref<24x256xf32, #tpu.memory_space<vmem>>) attributes {dimension_semantics = [#tpu.dimension_semantics<parallel>, #tpu.dimension_semantics<parallel>, #tpu.dimension_semantics<arbitrary>], iteration_bounds = array<i64: 1, 2, 8>, scalar_prefetch = 0 : i64, scratch_operands = 1 : i64, tpu.core_type = #tpu.core_type<tc>, window_params = [{transform_indices = @transform_0, window_bounds = array<i64: 24, 512>}, {transform_indices = @transform_1, window_bounds = array<i64: 512, 256>}, {transform_indices = @transform_2, window_bounds = array<i64: 1, 256>}, {transform_indices = @transform_3, window_bounds = array<i64: 24, 256>}]} {
    %c0_i32 = arith.constant 0 : i32
    %0 = arith.cmpi eq, %arg2, %c0_i32 : i32
    %1 = arith.extui %0 : i1 to i32
    %c0_i32_0 = arith.constant 0 : i32
    %2 = arith.cmpi ne, %1, %c0_i32_0 : i32
    scf.if %2 {
      %cst_9 = arith.constant 0.000000e+00 : f32
      %12 = vector.broadcast %cst_9 : f32 to vector<24x256xf32>
      %c0_10 = arith.constant 0 : index
      %c0_11 = arith.constant 0 : index
      %13 = vector.load %arg7[%c0_10, %c0_11] : memref<24x256xf32, #tpu.memory_space<vmem>>, vector<24x256xf32>
      tpu.vector_store %arg7[%c0_10, %c0_11], %12 {strides = array<i32>} : memref<24x256xf32, #tpu.memory_space<vmem>>, vector<24x256xf32>,
    } else {
    }
    %c0 = arith.constant 0 : index
    %c0_1 = arith.constant 0 : index
    %3 = vector.load %arg7[%c0, %c0_1] : memref<24x256xf32, #tpu.memory_space<vmem>>, vector<24x256xf32>
    %c0_2 = arith.constant 0 : index
    %c0_3 = arith.constant 0 : index
    %4 = vector.load %arg3[%c0_2, %c0_3] : memref<24x512xbf16, #tpu.memory_space<vmem>>, vector<24x512xbf16>
    %c0_4 = arith.constant 0 : index
    %c0_5 = arith.constant 0 : index
    %5 = vector.load %arg4[%c0_4, %c0_5] : memref<512x256xbf16, #tpu.memory_space<vmem>>, vector<512x256xbf16>
    %cst = arith.constant dense<0.000000e+00> : vector<24x256xf32>
    %6 = tpu.matmul %4, %5, %cst {dimension_numbers = #tpu.dot_dimension_numbers<[1], [0], [0], [1], [0, 0, 1, 1], [], []>} : vector<24x512xbf16>, vector<512x256xbf16>, vector<24x256xf32> -> vector<24x256xf32>
    %7 = arith.addf %3, %6 : vector<24x256xf32>
    %c0_6 = arith.constant 0 : index
    %c0_7 = arith.constant 0 : index
    %8 = vector.load %arg7[%c0_6, %c0_7] : memref<24x256xf32, #tpu.memory_space<vmem>>, vector<24x256xf32>
    tpu.vector_store %arg7[%c0_6, %c0_7], %7 {strides = array<i32>} : memref<24x256xf32, #tpu.memory_space<vmem>>, vector<24x256xf32>,
    %c7_i32 = arith.constant 7 : i32
    %9 = arith.cmpi eq, %arg2, %c7_i32 : i32
    %10 = arith.extui %9 : i1 to i32
    %c0_i32_8 = arith.constant 0 : i32
    %11 = arith.cmpi ne, %10, %c0_i32_8 : i32
    scf.if %11 {
      %c0_9 = arith.constant 0 : index
      %c0_10 = arith.constant 0 : index
      %12 = vector.load %arg7[%c0_9, %c0_10] : memref<24x256xf32, #tpu.memory_space<vmem>>, vector<24x256xf32>
      %c0_11 = arith.constant 0 : index
      %c0_12 = arith.constant 0 : index
      %13 = vector.load %arg5[%c0_11, %c0_12] : memref<1x256xf32, #tpu.memory_space<vmem>>, vector<1x256xf32>
      %14 = vector.broadcast %13 : vector<1x256xf32> to vector<24x256xf32>
      %15 = arith.addf %12, %14 : vector<24x256xf32>
      %cst_13 = arith.constant 0.000000e+00 : f32
      %16 = vector.broadcast %cst_13 : f32 to vector<24x256xf32>
      %17 = arith.cmpf oge, %15, %16 : vector<24x256xf32>
      %cst_14 = arith.constant 2.000000e-01 : f32
      %18 = vector.broadcast %cst_14 : f32 to vector<24x256xf32>
      %19 = arith.mulf %18, %15 : vector<24x256xf32>
      %20 = arith.select %17, %15, %19 : vector<24x256xi1>, vector<24x256xf32>
      %c0_15 = arith.constant 0 : index
      %c0_16 = arith.constant 0 : index
      %21 = vector.load %arg6[%c0_15, %c0_16] : memref<24x256xf32, #tpu.memory_space<vmem>>, vector<24x256xf32>
      tpu.vector_store %arg6[%c0_15, %c0_16], %20 {strides = array<i32>} : memref<24x256xf32, #tpu.memory_space<vmem>>, vector<24x256xf32>,
    } else {
    }
    return
  }
  func.func @transform_0(%arg0: i32, %arg1: i32, %arg2: i32) -> (i32, i32) {
    %c0_i32 = arith.constant 0 : i32
    return %arg0, %arg2 : i32, i32
  }
  func.func @transform_1(%arg0: i32, %arg1: i32, %arg2: i32) -> (i32, i32) {
    %c0_i32 = arith.constant 0 : i32
    return %arg2, %arg1 : i32, i32
  }
  func.func @transform_2(%arg0: i32, %arg1: i32, %arg2: i32) -> (i32, i32) {
    %c0_i32 = arith.constant 0 : i32
    %c0_i32_0 = arith.constant 0 : i32
    return %c0_i32, %arg1 : i32, i32
  }
  func.func @transform_3(%arg0: i32, %arg1: i32, %arg2: i32) -> (i32, i32) {
    %c0_i32 = arith.constant 0 : i32
    return %arg0, %arg1 : i32, i32
  }
}

module attributes {stable_mosaic.version = 11 : i64} {
  func.func @_matmul_epilogue_kernel(%arg0: i32, %arg1: i32, %arg2: i32, %arg3: memref<8x512xbf16, #tpu.memory_space<vmem>>, %arg4: memref<512x128xbf16, #tpu.memory_space<vmem>>, %arg5: memref<1x128xf32, #tpu.memory_space<vmem>>, %arg6: memref<8x128xf32, #tpu.memory_space<vmem>>, %arg7: memref<8x128xf32, #tpu.memory_space<vmem>>) attributes {dimension_semantics = [#tpu.dimension_semantics<parallel>, #tpu.dimension_semantics<parallel>, #tpu.dimension_semantics<arbitrary>], iteration_bounds = array<i64: 1, 1, 16>, scalar_prefetch = 0 : i64, scratch_operands = 1 : i64, tpu.core_type = #tpu.core_type<tc>, window_params = [{transform_indices = @transform_0, window_bounds = array<i64: 8, 512>}, {transform_indices = @transform_1, window_bounds = array<i64: 512, 128>}, {transform_indices = @transform_2, window_bounds = array<i64: 1, 128>}, {transform_indices = @transform_3, window_bounds = array<i64: 8, 128>}]} {
    %c0_i32 = arith.constant 0 : i32
    %0 = arith.cmpi eq, %arg2, %c0_i32 : i32
    %1 = arith.extui %0 : i1 to i32
    %c0_i32_0 = arith.constant 0 : i32
    %2 = arith.cmpi ne, %1, %c0_i32_0 : i32
    scf.if %2 {
      %cst_9 = arith.constant 0.000000e+00 : f32
      %12 = vector.broadcast %cst_9 : f32 to vector<8x128xf32>
      %c0_10 = arith.constant 0 : index
      %c0_11 = arith.constant 0 : index
      %13 = vector.load %arg7[%c0_10, %c0_11] : memref<8x128xf32, #tpu.memory_space<vmem>>, vector<8x128xf32>
      tpu.vector_store %arg7[%c0_10, %c0_11], %12 {strides = array<i32>} : memref<8x128xf32, #tpu.memory_space<vmem>>, vector<8x128xf32>,
    } else {
    }
    %c0 = arith.constant 0 : index
    %c0_1 = arith.constant 0 : index
    %3 = vector.load %arg7[%c0, %c0_1] : memref<8x128xf32, #tpu.memory_space<vmem>>, vector<8x128xf32>
    %c0_2 = arith.constant 0 : index
    %c0_3 = arith.constant 0 : index
    %4 = vector.load %arg3[%c0_2, %c0_3] : memref<8x512xbf16, #tpu.memory_space<vmem>>, vector<8x512xbf16>
    %c0_4 = arith.constant 0 : index
    %c0_5 = arith.constant 0 : index
    %5 = vector.load %arg4[%c0_4, %c0_5] : memref<512x128xbf16, #tpu.memory_space<vmem>>, vector<512x128xbf16>
    %cst = arith.constant dense<0.000000e+00> : vector<8x128xf32>
    %6 = tpu.matmul %4, %5, %cst {dimension_numbers = #tpu.dot_dimension_numbers<[1], [0], [0], [1], [0, 0, 1, 1], [], []>} : vector<8x512xbf16>, vector<512x128xbf16>, vector<8x128xf32> -> vector<8x128xf32>
    %7 = arith.addf %3, %6 : vector<8x128xf32>
    %c0_6 = arith.constant 0 : index
    %c0_7 = arith.constant 0 : index
    %8 = vector.load %arg7[%c0_6, %c0_7] : memref<8x128xf32, #tpu.memory_space<vmem>>, vector<8x128xf32>
    tpu.vector_store %arg7[%c0_6, %c0_7], %7 {strides = array<i32>} : memref<8x128xf32, #tpu.memory_space<vmem>>, vector<8x128xf32>,
    %c15_i32 = arith.constant 15 : i32
    %9 = arith.cmpi eq, %arg2, %c15_i32 : i32
    %10 = arith.extui %9 : i1 to i32
    %c0_i32_8 = arith.constant 0 : i32
    %11 = arith.cmpi ne, %10, %c0_i32_8 : i32
    scf.if %11 {
      %c0_9 = arith.constant 0 : index
      %c0_10 = arith.constant 0 : index
      %12 = vector.load %arg7[%c0_9, %c0_10] : memref<8x128xf32, #tpu.memory_space<vmem>>, vector<8x128xf32>
      %c0_11 = arith.constant 0 : index
      %c0_12 = arith.constant 0 : index
      %13 = vector.load %arg5[%c0_11, %c0_12] : memref<1x128xf32, #tpu.memory_space<vmem>>, vector<1x128xf32>
      %14 = vector.broadcast %13 : vector<1x128xf32> to vector<8x128xf32>
      %15 = arith.addf %12, %14 : vector<8x128xf32>
      %16 = arith.negf %15 : vector<8x128xf32>
      %17 = math.exp %16 : vector<8x128xf32>
      %cst_13 = arith.constant 1.000000e+00 : f32
      %18 = vector.broadcast %cst_13 : f32 to vector<8x128xf32>
      %19 = arith.addf %18, %17 : vector<8x128xf32>
      %20 = arith.divf %18, %19 : vector<8x128xf32>
      %c0_14 = arith.constant 0 : index
      %c0_15 = arith.constant 0 : index
      %21 = vector.load %arg6[%c0_14, %c0_15] : memref<8x128xf32, #tpu.memory_space<vmem>>, vector<8x128xf32>
      tpu.vector_store %arg6[%c0_14, %c0_15], %20 {strides = array<i32>} : memref<8x128xf32, #tpu.memory_space<vmem>>, vector<8x128xf32>,
    } else {
    }
    return
  }
  func.func @transform_0(%arg0: i32, %arg1: i32, %arg2: i32) -> (i32, i32) {
    %c0_i32 = arith.constant 0 : i32
    return %arg0, %arg2 : i32, i32
  }
  func.func @transform_1(%arg0: i32, %arg1: i32, %arg2: i32) -> (i32, i32) {
    %c0_i32 = arith.constant 0 : i32
    return %arg2, %arg1 : i32, i32
  }
  func.func @transform_2(%arg0: i32, %arg1: i32, %arg2: i32) -> (i32, i32) {
    %c0_i32 = arith.constant 0 : i32
    %c0_i32_0 = arith.constant 0 : i32
    return %c0_i32, %arg1 : i32, i32
  }
  func.func @transform_3(%arg0: i32, %arg1: i32, %arg2: i32) -> (i32, i32) {
    %c0_i32 = arith.constant 0 : i32
    return %arg0, %arg1 : i32, i32
  }
}

</mosaic_0001>

<llo_original>
// kernel: discriminator_forward.5
$region0: #{discriminator_forward.5}
  #allocation0 [shape = 'u32[]', space=smem, size = 0x4, offset = 0x4, fixed_abs, tag = 'smem constant byte address 0x4 - core index']
  #allocation1 [shape = 'u32[144,128]{1,0:T(1,128)}', space=vmem, size = 0x12000, scoped, tag = 'internal scratch']
  #allocation2 [shape = 'f32[256,128]{1,0:T(8,128)}', space=vmem, size = 0x20000, scoped, tag = 'scratch operand']
  %s0 = inlined_call_operand.hbm [shape: bf16[512,128], index: 0, kind: input, shape index: {}]
  %s1 = inlined_call_operand.hbm [shape: bf16[128,128], index: 1, kind: input, shape index: {}]
  %s2 = inlined_call_operand.hbm [shape: f32[1,128], index: 2, kind: input, shape index: {}]
  %s3 = inlined_call_operand.hbm [shape: f32[512,128], index: 3, kind: output, shape index: {}]
  %s4 = sld [smem:[#allocation0]]
  $region65: #{discriminator_forward.5} parent=0
    _
  %s6 = ssub.s32 1, %s4
  %s7 = scalar_select 0, %s6, %s4
  $region1: #{discriminator_forward.5} parent=0
    #allocation3 [shape = 'u8[131072]{0}', space=vmem, size = 0x20000, scoped, tag = 'input window, operand 0']
    #allocation4 [shape = 's32[2]{0}', space=sflag, size = 0x8, scoped, tag = 'scoped memory for discriminator_forward.5']
    #allocation5 [shape = 's32[2]{0}', space=sflag, size = 0x8, scoped, tag = 'scoped memory for discriminator_forward.5']
    #allocation6 [shape = 'u8[32768]{0}', space=vmem, size = 0x8000, scoped, tag = 'input window, operand 1, single buffered']
    #allocation7 [shape = 's32[1]{0}', space=sflag, size = 0x4, scoped, tag = 'scoped memory for discriminator_forward.5']
    #allocation8 [shape = 'u8[512]{0}', space=vmem, size = 0x400, scoped, tag = 'input window, operand 2, single buffered']
    #allocation9 [shape = 'u8[262144]{0}', space=vmem, size = 0x40000, scoped, tag = 'output window, operand 0']
    %8 = vsyncpa [#allocation4], 0
    %s9 = scalar_lea.sflag [#allocation4], 1
    %10 = vsyncpa %s9, 0
    %11 = vsyncpa [#allocation7], 0
    %12 = vsyncpa [#allocation5], 0
    %s13 = scalar_lea.sflag [#allocation5], 1
    %14 = vsyncpa %s13, 0
    loop: start=0, step=1, limit=4
    $region2: #{discriminator_forward.5} parent=1 // loop_pre_header
      _
    $region3: #{discriminator_forward.5} parent=1 // loop_header
      %s16 = sphi 0, %s20
      %p17 = scmp.ge.s32.totalorder %s16, 4
      %s23 = sphi 0, %s42
      %s24 = sphi 0, %s38
      %s25 = sphi 0, %s34
      %s26 = sphi 0, %s23
      %s27 = sphi 0, %s24
      %s28 = sphi 0, %s25
      %s29 = sphi 0, %s26
      %s30 = sphi 0, %s27
      %s31 = sphi 0, %s28
      %s47 = sphi 0, %s49
      %s50 = sphi 0, %s47
      %s51 = sphi 0, %s50
      %s67 = sphi 0, %s51
      %s75 = sphi 0, %s77
      %s78 = sphi 0, %s75
      %s79 = sphi 0, %s78
      %s95 = sphi 0, %s79
      %s101 = sphi 0, %s103
      %s104 = sphi 0, %s101
      %s105 = sphi 0, %s104
      %s121 = sphi 0, %s105
      %s129 = sphi 0, %s131
      %s132 = sphi 0, %s129
      %s133 = sphi 0, %s132
      %s149 = sphi 0, %s133
    $region4: #{discriminator_forward.5} parent=1 // loop_header_branch
      %19 = sbr.rel (%p17) target = $region8
    $region5: #{discriminator_forward.5} parent=1 // loop_body
      %s21 = ssub.s32 %s16, 1
      %s22 = ssub.s32 %s16, 2
      %s32 = sadd.s32 1, %s25
      %p33 = scmp.ge.s32.totalorder %s32, 1
      %s34 = scalar_select %p33, 0, %s32
      %s35 = sadd.s32 1, %s24
      %s36 = scalar_select %p33, %s35, %s24
      %p37 = scmp.ge.s32.totalorder %s36, 1
      %s38 = scalar_select %p37, 0, %s36
      %s39 = sadd.s32 1, %s23
      %s40 = scalar_select %p37, %s39, %s23
      %p41 = scmp.ge.s32.totalorder %s40, 2
      %s42 = scalar_select %p41, 0, %s40
      %s43 = ssub.s32 %s23, %s42
      %s44 = ssub.s32 %s25, %s34
      %s45 = sor.u32 %s43, %s44
      %p46 = scmp.eq.s32.totalorder %s45, 0
      %s48 = sadd.s32 %s47, 1
      %s49 = scalar_select %p46, %s47, %s48
      %p52 = pneg %p46
      %p53 = scmp.eq.s32.totalorder %s16, 1
      %p54 = por %p52, %p53
      %p55 = scmp.ne.s32.totalorder %s47, %s50
      %p56 = scmp.eq.s32.totalorder %s16, 0
      %p57 = por %p55, %p56
      %p58 = scmp.ne.s32.totalorder %s47, %s50
      %p59 = scmp.eq.s32.totalorder %s21, 1
      %p60 = por %p58, %p59
      %p61 = scmp.ne.s32.totalorder %s50, %s51
      %p62 = scmp.eq.s32.totalorder %s21, 0
      %p63 = por %p61, %p62
      %p64 = scmp.ne.s32.totalorder %s50, %s51
      %p65 = scmp.eq.s32.totalorder %s22, 1
      %p66 = por %p64, %p65
      %p68 = scmp.ne.s32.totalorder %s51, %s67
      %p69 = scmp.eq.s32.totalorder %s22, 0
      %p70 = por %p68, %p69
      %s71 = ssub.s32 %s25, %s34
      %s72 = ssub.s32 %s24, %s38
      %s73 = sor.u32 %s71, %s72
      %p74 = scmp.eq.s32.totalorder %s73, 0
      %s76 = sadd.s32 %s75, 1
      %s77 = scalar_select %p74, %s75, %s76
      %p80 = pneg %p74
      %p81 = scmp.eq.s32.totalorder %s16, 1
      %p82 = por %p80, %p81
      %p83 = scmp.ne.s32.totalorder %s75, %s78
      %p84 = scmp.eq.s32.totalorder %s16, 0
      %p85 = por %p83, %p84
      %p86 = scmp.ne.s32.totalorder %s75, %s78
      %p87 = scmp.eq.s32.totalorder %s21, 1
      %p88 = por %p86, %p87
      %p89 = scmp.ne.s32.totalorder %s78, %s79
      %p90 = scmp.eq.s32.totalorder %s21, 0
      %p91 = por %p89, %p90
      %p92 = scmp.ne.s32.totalorder %s78, %s79
      %p93 = scmp.eq.s32.totalorder %s22, 1
      %p94 = por %p92, %p93
      %p96 = scmp.ne.s32.totalorder %s79, %s95
      %p97 = scmp.eq.s32.totalorder %s22, 0
      %p98 = por %p96, %p97
      %s99 = ssub.s32 %s24, %s38
      %p100 = scmp.eq.s32.totalorder %s99, 0
      %s102 = sadd.s32 %s101, 1
      %s103 = scalar_select %p100, %s101, %s102
      %p106 = pneg %p100
      %p107 = scmp.eq.s32.totalorder %s16, 1
      %p108 = por %p106, %p107
      %p109 = scmp.ne.s32.totalorder %s101, %s104
      %p110 = scmp.eq.s32.totalorder %s16, 0
      %p111 = por %p109, %p110
      %p112 = scmp.ne.s32.totalorder %s101, %s104
      %p113 = scmp.eq.s32.totalorder %s21, 1
      %p114 = por %p112, %p113
      %p115 = scmp.ne.s32.totalorder %s104, %s105
      %p116 = scmp.eq.s32.totalorder %s21, 0
      %p117 = por %p115, %p116
      %p118 = scmp.ne.s32.totalorder %s104, %s105
      %p119 = scmp.eq.s32.totalorder %s22, 1
      %p120 = por %p118, %p119
      %p122 = scmp.ne.s32.totalorder %s105, %s121
      %p123 = scmp.eq.s32.totalorder %s22, 0
      %p124 = por %p122, %p123
      %s125 = ssub.s32 %s23, %s42
      %s126 = ssub.s32 %s24, %s38
      %s127 = sor.u32 %s125, %s126
      %p128 = scmp.eq.s32.totalorder %s127, 0
      %s130 = sadd.s32 %s129, 1
      %s131 = scalar_select %p128, %s129, %s130
      %p134 = pneg %p128
      %p135 = scmp.eq.s32.totalorder %s16, 1
      %p136 = por %p134, %p135
      %p137 = scmp.ne.s32.totalorder %s129, %s132
      %p138 = scmp.eq.s32.totalorder %s16, 0
      %p139 = por %p137, %p138
      %p140 = scmp.ne.s32.totalorder %s129, %s132
      %p141 = scmp.eq.s32.totalorder %s21, 1
      %p142 = por %p140, %p141
      %p143 = scmp.ne.s32.totalorder %s132, %s133
      %p144 = scmp.eq.s32.totalorder %s21, 0
      %p145 = por %p143, %p144
      %p146 = scmp.ne.s32.totalorder %s132, %s133
      %p147 = scmp.eq.s32.totalorder %s22, 1
      %p148 = por %p146, %p147
      %p150 = scmp.ne.s32.totalorder %s133, %s149
      %p151 = scmp.eq.s32.totalorder %s22, 0
      %p152 = por %p150, %p151
      %p153 = scmp.le.s32.totalorder 1, %s16
      %p154 = scmp.lt.s32.totalorder %s16, 3
      %p155 = pnand %p153, %p154
      %p156 = pneg %p155
      // Predicated region
      $region9: #{discriminator_forward.5} parent=5 // pred_check
        _
      $region10: #{discriminator_forward.5} parent=5 // pred_check_branch
        %158 = sbr.rel (%p155) target = $region12
      $region11: #{discriminator_forward.5} parent=5 // pred_region
        %s159 = ssub.s32 %s16, 1
        // Predicated region
        $region13: #{discriminator_forward.5} parent=11 // pred_check
          %p160 = pneg %p91
        $region14: #{discriminator_forward.5} parent=11 // pred_check_branch
          %162 = sbr.rel (%p160) target = $region16
        $region15: #{discriminator_forward.5} parent=11 // pred_region
          %s163 = smul.u32 16, %s28
          %s165 = ssub.s32 1024, 1024
          %166 = vsyncadd [#allocation7], %s165
          %s167 = sadd.s32 %s27, %s163
          %s168 = smul.addr %s167, 64
          %s169 = scalar_lea.hbm %s1, %s168
          %s170 = sshll.u32 [#allocation6], 4
          %s171 = int_to_ptr.vmem [resolvable:$true] %s170
          %176 = dma.hbm_to_vmem [thread:$0]  %s169, 1024, %s171, [#allocation7], 64, 64, 4
        $region16: #{discriminator_forward.5} parent=11 // pred_fallthru
          _
        // Predicated region
        $region17: #{discriminator_forward.5} parent=11 // pred_check
          %p177 = pneg %p117
        $region18: #{discriminator_forward.5} parent=11 // pred_check_branch
          %179 = sbr.rel (%p177) target = $region20
        $region19: #{discriminator_forward.5} parent=11 // pred_region
          %s181 = ssub.s32 16, 16
          %182 = vsyncadd [#allocation7], %s181
          %s183 = smul.addr %s27, 16
          %s184 = scalar_lea.hbm %s2, %s183
          %s186 = sshll.u32 [#allocation8], 4
          %s187 = int_to_ptr.vmem [resolvable:$true] %s186
          %189 = dma.hbm_to_vmem [thread:$0]  %s184, 16, %s187, [#allocation7]
        $region20: #{discriminator_forward.5} parent=11 // pred_fallthru
          _
      $region12: #{discriminator_forward.5} parent=5 // pred_fallthru
        _
      %p190 = scmp.lt.s32.totalorder %s16, 2
      // Predicated region
      $region21: #{discriminator_forward.5} parent=5 // pred_check
        %p191 = pneg %p190
      $region22: #{discriminator_forward.5} parent=5 // pred_check_branch
        %193 = sbr.rel (%p191) target = $region24
      $region23: #{discriminator_forward.5} parent=5 // pred_region
        // Predicated region
        $region25: #{discriminator_forward.5} parent=23 // pred_check
          %p194 = pneg %p57
        $region26: #{discriminator_forward.5} parent=23 // pred_check_branch
          %196 = sbr.rel (%p194) target = $region28
        $region27: #{discriminator_forward.5} parent=23 // pred_region
          %s197 = sand.u32 %s47, 1
          %s198 = scalar_lea.sflag [#allocation4], %s197
          %s199 = sand.u32 %s47, 1
          %s200 = smul.addr %s199, 128
          %s201 = scalar_lea.vmem [#allocation3], %s200
          %s202 = smul.u32 32, %s23
          %s204 = ssub.s32 2048, 2048
          %205 = vsyncadd %s198, %s204
          %s206 = sadd.s32 %s25, %s202
          %s207 = smul.addr %s206, 64
          %s208 = scalar_lea.hbm %s0, %s207
          %s209 = sshll.u32 %s201, 4
          %s210 = int_to_ptr.vmem [resolvable:$true] %s209
          %215 = dma.hbm_to_vmem [thread:$0]  %s208, 2048, %s210, %s198, 64, 64, 4
        $region28: #{discriminator_forward.5} parent=23 // pred_fallthru
          _
      $region24: #{discriminator_forward.5} parent=5 // pred_fallthru
        _
      %p216 = scmp.le.s32.totalorder 1, %s16
      %p217 = scmp.lt.s32.totalorder %s16, 3
      %p218 = pnand %p216, %p217
      %p219 = pneg %p218
      // Predicated region
      $region29: #{discriminator_forward.5} parent=5 // pred_check
        _
      $region30: #{discriminator_forward.5} parent=5 // pred_check_branch
        %221 = sbr.rel (%p218) target = $region32
      $region31: #{discriminator_forward.5} parent=5 // pred_region
        %s222 = ssub.s32 %s16, 1
        %s223 = sand.u32 %s50, 1
        %s224 = scalar_lea.sflag [#allocation4], %s223
        %s225 = sand.u32 %s50, 1
        %s226 = smul.addr %s225, 128
        %s227 = scalar_lea.vmem [#allocation3], %s226
        // Predicated region
        $region33: #{discriminator_forward.5} parent=31 // pred_check
          %p228 = pneg %p63
        $region34: #{discriminator_forward.5} parent=31 // pred_check_branch
          %230 = sbr.rel (%p228) target = $region36
        $region35: #{discriminator_forward.5} parent=31 // pred_region
          %231 = dma.done %s224, 2048
        $region36: #{discriminator_forward.5} parent=31 // pred_fallthru
          _
        // Predicated region
        $region37: #{discriminator_forward.5} parent=31 // pred_check
          %p232 = pneg %p91
        $region38: #{discriminator_forward.5} parent=31 // pred_check_branch
          %234 = sbr.rel (%p232) target = $region40
        $region39: #{discriminator_forward.5} parent=31 // pred_region
          %235 = dma.done [#allocation7], 1024
        $region40: #{discriminator_forward.5} parent=31 // pred_fallthru
          _
        // Predicated region
        $region41: #{discriminator_forward.5} parent=31 // pred_check
          %p236 = pneg %p117
        $region42: #{discriminator_forward.5} parent=31 // pred_check_branch
          %238 = sbr.rel (%p236) target = $region44
        $region43: #{discriminator_forward.5} parent=31 // pred_region
          %239 = dma.done [#allocation7], 16
        $region44: #{discriminator_forward.5} parent=31 // pred_fallthru
          _
        %s240 = sand.u32 %s50, 1
        %s241 = scalar_lea.sflag [#allocation4], %s240
        %s242 = sand.u32 %s50, 1
        %s243 = smul.addr %s242, 128
        %s244 = scalar_lea.vmem [#allocation3], %s243
        %p245 = pneg %p63
        %p246 = pneg %p60
        %p247 = pneg %p91
        %p248 = pneg %p88
        %p249 = pneg %p117
        %p250 = pneg %p114
        %p251 = pneg %p145
        %p252 = pneg %p142
        %s253 = sand.u32 %s132, 1
        %s254 = scalar_lea.sflag [#allocation5], %s253
        %s255 = sand.u32 %s132, 1
        %s256 = smul.addr %s255, 256
        %s257 = scalar_lea.vmem [#allocation9], %s256
        %s258 = smul.u32 32, %s26
        %s259 = smul.u32 16, %s28
        %s260 = smul.u32 32, %s26
        %p262 = scmp.eq.s32.totalorder %s28, 0
        // Predicated region
        $region45: #{discriminator_forward.5} parent=31 // pred_check
          %p263 = pneg %p262
        $region46: #{discriminator_forward.5} parent=31 // pred_check_branch
          %265 = sbr.rel (%p263) target = $region48
        $region47: #{discriminator_forward.5} parent=31 // pred_region
          %266 = vst [vmem:[#allocation2] sm:$0xff] 0.0
          %267 = vst [vmem:[#allocation2 + $0x8] sm:$0xff] 0.0
          %268 = vst [vmem:[#allocation2 + $0x10] sm:$0xff] 0.0
          %269 = vst [vmem:[#allocation2 + $0x18] sm:$0xff] 0.0
          %270 = vst [vmem:[#allocation2 + $0x20] sm:$0xff] 0.0
          %271 = vst [vmem:[#allocation2 + $0x28] sm:$0xff] 0.0
          %272 = vst [vmem:[#allocation2 + $0x30] sm:$0xff] 0.0
          %273 = vst [vmem:[#allocation2 + $0x38] sm:$0xff] 0.0
          %274 = vst [vmem:[#allocation2 + $0x40] sm:$0xff] 0.0
          %275 = vst [vmem:[#allocation2 + $0x48] sm:$0xff] 0.0
          %276 = vst [vmem:[#allocation2 + $0x50] sm:$0xff] 0.0
          %277 = vst [vmem:[#allocation2 + $0x58] sm:$0xff] 0.0
          %278 = vst [vmem:[#allocation2 + $0x60] sm:$0xff] 0.0
          %279 = vst [vmem:[#allocation2 + $0x68] sm:$0xff] 0.0
          %280 = vst [vmem:[#allocation2 + $0x70] sm:$0xff] 0.0
          %281 = vst [vmem:[#allocation2 + $0x78] sm:$0xff] 0.0
          %282 = vst [vmem:[#allocation2 + $0x80] sm:$0xff] 0.0
          %283 = vst [vmem:[#allocation2 + $0x88] sm:$0xff] 0.0
          %284 = vst [vmem:[#allocation2 + $0x90] sm:$0xff] 0.0
          %285 = vst [vmem:[#allocation2 + $0x98] sm:$0xff] 0.0
          %286 = vst [vmem:[#allocation2 + $0xa0] sm:$0xff] 0.0
          %287 = vst [vmem:[#allocation2 + $0xa8] sm:$0xff] 0.0
          %288 = vst [vmem:[#allocation2 + $0xb0] sm:$0xff] 0.0
          %289 = vst [vmem:[#allocation2 + $0xb8] sm:$0xff] 0.0
          %290 = vst [vmem:[#allocation2 + $0xc0] sm:$0xff] 0.0
          %291 = vst [vmem:[#allocation2 + $0xc8] sm:$0xff] 0.0
          %292 = vst [vmem:[#allocation2 + $0xd0] sm:$0xff] 0.0
          %293 = vst [vmem:[#allocation2 + $0xd8] sm:$0xff] 0.0
          %294 = vst [vmem:[#allocation2 + $0xe0] sm:$0xff] 0.0
          %295 = vst [vmem:[#allocation2 + $0xe8] sm:$0xff] 0.0
          %296 = vst [vmem:[#allocation2 + $0xf0] sm:$0xff] 0.0
          %297 = vst [vmem:[#allocation2 + $0xf8] sm:$0xff] 0.0
        $region48: #{discriminator_forward.5} parent=31 // pred_fallthru
          _
        %v298 = vld [vmem:[#allocation2] sm:$0xff]
        %v299 = vld [vmem:[#allocation2 + $0x8] sm:$0xff]
        %v300 = vld [vmem:[#allocation2 + $0x10] sm:$0xff]
        %v301 = vld [vmem:[#allocation2 + $0x18] sm:$0xff]
        %v302 = vld [vmem:[#allocation2 + $0x20] sm:$0xff]
        %v303 = vld [vmem:[#allocation2 + $0x28] sm:$0xff]
        %v304 = vld [vmem:[#allocation2 + $0x30] sm:$0xff]
        %v305 = vld [vmem:[#allocation2 + $0x38] sm:$0xff]
        %v306 = vld [vmem:[#allocation2 + $0x40] sm:$0xff]
        %v307 = vld [vmem:[#allocation2 + $0x48] sm:$0xff]
        %v308 = vld [vmem:[#allocation2 + $0x50] sm:$0xff]
        %v309 = vld [vmem:[#allocation2 + $0x58] sm:$0xff]
        %v310 = vld [vmem:[#allocation2 + $0x60] sm:$0xff]
        %v311 = vld [vmem:[#allocation2 + $0x68] sm:$0xff]
        %v312 = vld [vmem:[#allocation2 + $0x70] sm:$0xff]
        %v313 = vld [vmem:[#allocation2 + $0x78] sm:$0xff]
        %v314 = vld [vmem:[#allocation2 + $0x80] sm:$0xff]
        %v315 = vld [vmem:[#allocation2 + $0x88] sm:$0xff]
        %v316 = vld [vmem:[#allocation2 + $0x90] sm:$0xff]
        %v317 = vld [vmem:[#allocation2 + $0x98] sm:$0xff]
        %v318 = vld [vmem:[#allocation2 + $0xa0] sm:$0xff]
        %v319 = vld [vmem:[#allocation2 + $0xa8] sm:$0xff]
        %v320 = vld [vmem:[#allocation2 + $0xb0] sm:$0xff]
        %v321 = vld [vmem:[#allocation2 + $0xb8] sm:$0xff]
        %v322 = vld [vmem:[#allocation2 + $0xc0] sm:$0xff]
        %v323 = vld [vmem:[#allocation2 + $0xc8] sm:$0xff]
        %v324 = vld [vmem:[#allocation2 + $0xd0] sm:$0xff]
        %v325 = vld [vmem:[#allocation2 + $0xd8] sm:$0xff]
        %v326 = vld [vmem:[#allocation2 + $0xe0] sm:$0xff]
        %v327 = vld [vmem:[#allocation2 + $0xe8] sm:$0xff]
        %v328 = vld [vmem:[#allocation2 + $0xf0] sm:$0xff]
        %v329 = vld [vmem:[#allocation2 + $0xf8] sm:$0xff]
        %v330 = vld [vmem:[%s227] sm:$0xf]
        %v331 = vld [vmem:[%s227 + $0x4] sm:$0xf]
        %v332 = vld [vmem:[%s227 + $0x8] sm:$0xf]
        %v333 = vld [vmem:[%s227 + $0xc] sm:$0xf]
        %v334 = vld [vmem:[%s227 + $0x10] sm:$0xf]
        %v335 = vld [vmem:[%s227 + $0x14] sm:$0xf]
        %v336 = vld [vmem:[%s227 + $0x18] sm:$0xf]
        %v337 = vld [vmem:[%s227 + $0x1c] sm:$0xf]
        %v338 = vld [vmem:[%s227 + $0x20] sm:$0xf]
        %v339 = vld [vmem:[%s227 + $0x24] sm:$0xf]
        %v340 = vld [vmem:[%s227 + $0x28] sm:$0xf]
        %v341 = vld [vmem:[%s227 + $0x2c] sm:$0xf]
        %v342 = vld [vmem:[%s227 + $0x30] sm:$0xf]
        %v343 = vld [vmem:[%s227 + $0x34] sm:$0xf]
        %v344 = vld [vmem:[%s227 + $0x38] sm:$0xf]
        %v345 = vld [vmem:[%s227 + $0x3c] sm:$0xf]
        %v346 = vld [vmem:[%s227 + $0x40] sm:$0xf]
        %v347 = vld [vmem:[%s227 + $0x44] sm:$0xf]
        %v348 = vld [vmem:[%s227 + $0x48] sm:$0xf]
        %v349 = vld [vmem:[%s227 + $0x4c] sm:$0xf]
        %v350 = vld [vmem:[%s227 + $0x50] sm:$0xf]
        %v351 = vld [vmem:[%s227 + $0x54] sm:$0xf]
        %v352 = vld [vmem:[%s227 + $0x58] sm:$0xf]
        %v353 = vld [vmem:[%s227 + $0x5c] sm:$0xf]
        %v354 = vld [vmem:[%s227 + $0x60] sm:$0xf]
        %v355 = vld [vmem:[%s227 + $0x64] sm:$0xf]
        %v356 = vld [vmem:[%s227 + $0x68] sm:$0xf]
        %v357 = vld [vmem:[%s227 + $0x6c] sm:$0xf]
        %v358 = vld [vmem:[%s227 + $0x70] sm:$0xf]
        %v359 = vld [vmem:[%s227 + $0x74] sm:$0xf]
        %v360 = vld [vmem:[%s227 + $0x78] sm:$0xf]
        %v361 = vld [vmem:[%s227 + $0x7c] sm:$0xf]
        %v362 = vld [vmem:[#allocation6] sm:$0xf]
        %v363 = vld [vmem:[#allocation6 + $0x4] sm:$0xf]
        %v364 = vld [vmem:[#allocation6 + $0x8] sm:$0xf]
        %v365 = vld [vmem:[#allocation6 + $0xc] sm:$0xf]
        %v366 = vld [vmem:[#allocation6 + $0x10] sm:$0xf]
        %v367 = vld [vmem:[#allocation6 + $0x14] sm:$0xf]
        %v368 = vld [vmem:[#allocation6 + $0x18] sm:$0xf]
        %v369 = vld [vmem:[#allocation6 + $0x1c] sm:$0xf]
        %v370 = vld [vmem:[#allocation6 + $0x20] sm:$0xf]
        %v371 = vld [vmem:[#allocation6 + $0x24] sm:$0xf]
        %v372 = vld [vmem:[#allocation6 + $0x28] sm:$0xf]
        %v373 = vld [vmem:[#allocation6 + $0x2c] sm:$0xf]
        %v374 = vld [vmem:[#allocation6 + $0x30] sm:$0xf]
        %v375 = vld [vmem:[#allocation6 + $0x34] sm:$0xf]
        %v376 = vld [vmem:[#allocation6 + $0x38] sm:$0xf]
        %v377 = vld [vmem:[#allocation6 + $0x3c] sm:$0xf]
        %v410 = vunpack.c.l.b16 %v330
        %v411 = vunpack.c.l.b16 %v331
        %v412 = vunpack.c.l.b16 %v332
        %v413 = vunpack.c.l.b16 %v333
        %v414 = vunpack.c.l.b16 %v334
        %v415 = vunpack.c.l.b16 %v335
        %v416 = vunpack.c.l.b16 %v336
        %v417 = vunpack.c.l.b16 %v337
        %v418 = vunpack.c.l.b16 %v338
        %v419 = vunpack.c.l.b16 %v339
        %v420 = vunpack.c.l.b16 %v340
        %v421 = vunpack.c.l.b16 %v341
        %v422 = vunpack.c.l.b16 %v342
        %v423 = vunpack.c.l.b16 %v343
        %v424 = vunpack.c.l.b16 %v344
        %v425 = vunpack.c.l.b16 %v345
        %v426 = vunpack.c.l.b16 %v346
        %v427 = vunpack.c.l.b16 %v347
        %v428 = vunpack.c.l.b16 %v348
        %v429 = vunpack.c.l.b16 %v349
        %v430 = vunpack.c.l.b16 %v350
        %v431 = vunpack.c.l.b16 %v351
        %v432 = vunpack.c.l.b16 %v352
        %v433 = vunpack.c.l.b16 %v353
        %v434 = vunpack.c.l.b16 %v354
        %v435 = vunpack.c.l.b16 %v355
        %v436 = vunpack.c.l.b16 %v356
        %v437 = vunpack.c.l.b16 %v357
        %v438 = vunpack.c.l.b16 %v358
        %v439 = vunpack.c.l.b16 %v359
        %v440 = vunpack.c.l.b16 %v360
        %v441 = vunpack.c.l.b16 %v361
        %v442 = vpack.c.b16 %v411, %v410
        %v443 = vpack.c.b16 %v413, %v412
        %v444 = vpack.c.b16 %v415, %v414
        %v445 = vpack.c.b16 %v417, %v416
        %v446 = vpack.c.b16 %v419, %v418
        %v447 = vpack.c.b16 %v421, %v420
        %v448 = vpack.c.b16 %v423, %v422
        %v449 = vpack.c.b16 %v425, %v424
        %v450 = vpack.c.b16 %v427, %v426
        %v451 = vpack.c.b16 %v429, %v428
        %v452 = vpack.c.b16 %v431, %v430
        %v453 = vpack.c.b16 %v433, %v432
        %v454 = vpack.c.b16 %v435, %v434
        %v455 = vpack.c.b16 %v437, %v436
        %v456 = vpack.c.b16 %v439, %v438
        %v457 = vpack.c.b16 %v441, %v440
        %v490 = vunpack.c.l.b16 %v362
        %v491 = vunpack.c.l.b16 %v363
        %v492 = vunpack.c.l.b16 %v364
        %v493 = vunpack.c.l.b16 %v365
        %v494 = vunpack.c.l.b16 %v366
        %v495 = vunpack.c.l.b16 %v367
        %v496 = vunpack.c.l.b16 %v368
        %v497 = vunpack.c.l.b16 %v369
        %v498 = vunpack.c.l.b16 %v370
        %v499 = vunpack.c.l.b16 %v371
        %v500 = vunpack.c.l.b16 %v372
        %v501 = vunpack.c.l.b16 %v373
        %v502 = vunpack.c.l.b16 %v374
        %v503 = vunpack.c.l.b16 %v375
        %v504 = vunpack.c.l.b16 %v376
        %v505 = vunpack.c.l.b16 %v377
        %v506 = vpack.c.b16 %v491, %v490
        %v507 = vpack.c.b16 %v493, %v492
        %v508 = vpack.c.b16 %v495, %v494
        %v509 = vpack.c.b16 %v497, %v496
        %v510 = vpack.c.b16 %v499, %v498
        %v511 = vpack.c.b16 %v501, %v500
        %v512 = vpack.c.b16 %v503, %v502
        %v513 = vpack.c.b16 %v505, %v504
        %522 = vmatprep.subr.bf16.mxu0 0
        %523 = vmatpush1.bf16.msra.mxu0 %v506
        %524 = vmatprep.subr.bf16.mxu0 0
        %525 = vmatpush1.bf16.msra.mxu0 %v507
        %526 = vmatprep.subr.bf16.mxu0 0
        %527 = vmatpush1.bf16.msra.mxu0 %v508
        %528 = vmatprep.subr.bf16.mxu0 0
        %529 = vmatpush1.bf16.msra.mxu0 %v509
        %530 = vmatprep.subr.bf16.mxu0 0
        %531 = vmatpush1.bf16.msra.mxu0 %v510
        %532 = vmatprep.subr.bf16.mxu0 0
        %533 = vmatpush1.bf16.msra.mxu0 %v511
        %534 = vmatprep.subr.bf16.mxu0 0
        %535 = vmatpush1.bf16.msra.mxu0 %v512
        %536 = vmatprep.subr.bf16.mxu0 0
        %537 = vmatpush1.bf16.msra.mxu0 %v513
        %538 = vmatprep.subr.bf16.mxu0 0
        %539 = vmatpush1.bf16.msra.mxu0 0
        %540 = vmatprep.subr.bf16.mxu0 0
        %541 = vmatpush1.bf16.msra.mxu0 0
        %542 = vmatprep.subr.bf16.mxu0 0
        %543 = vmatpush1.bf16.msra.mxu0 0
        %544 = vmatprep.subr.bf16.mxu0 0
        %545 = vmatpush1.bf16.msra.mxu0 0
        %546 = vmatprep.subr.bf16.mxu0 0
        %547 = vmatpush1.bf16.msra.mxu0 0
        %548 = vmatprep.subr.bf16.mxu0 0
        %549 = vmatpush1.bf16.msra.mxu0 0
        %550 = vmatprep.subr.bf16.mxu0 0
        %551 = vmatpush1.bf16.msra.mxu0 0
        %552 = vmatprep.subr.bf16.mxu0 0
        %553 = vmatpush1.bf16.msra.mxu0 0
        %554 = vmatprep.mubr.bf16.mxu0 0
        %555 = vmatmul.mubr.bf16.gmra.mrb[0].mxu0 %v442
        %v556 = vpop.f32.mrb[0].mxu0
        %v557 = vadd.f32 0.0, %v556
        %v558 = vpop.f32.mrb[0].mxu0
        %v559 = vpop.f32.mrb[0].mxu0
        %v560 = vadd.f32 0.0, %v559
        %v561 = vpop.f32.mrb[0].mxu0
        %562 = vmatprep.mubr.bf16.mxu0 0
        %563 = vmatmul.mubr.bf16.gmra.mrb[0].mxu0 %v443
        %v564 = vpop.f32.mrb[0].mxu0
        %v565 = vadd.f32 0.0, %v564
        %v566 = vpop.f32.mrb[0].mxu0
        %v567 = vpop.f32.mrb[0].mxu0
        %v568 = vadd.f32 0.0, %v567
        %v569 = vpop.f32.mrb[0].mxu0
        %570 = vmatprep.mubr.bf16.mxu0 0
        %571 = vmatmul.mubr.bf16.gmra.mrb[0].mxu0 %v444
        %v572 = vpop.f32.mrb[0].mxu0
        %v573 = vadd.f32 0.0, %v572
        %v574 = vpop.f32.mrb[0].mxu0
        %v575 = vpop.f32.mrb[0].mxu0
        %v576 = vadd.f32 0.0, %v575
        %v577 = vpop.f32.mrb[0].mxu0
        %578 = vmatprep.mubr.bf16.mxu0 0
        %579 = vmatmul.mubr.bf16.gmra.mrb[0].mxu0 %v445
        %v580 = vpop.f32.mrb[0].mxu0
        %v581 = vadd.f32 0.0, %v580
        %v582 = vpop.f32.mrb[0].mxu0
        %v583 = vpop.f32.mrb[0].mxu0
        %v584 = vadd.f32 0.0, %v583
        %v585 = vpop.f32.mrb[0].mxu0
        %586 = vmatprep.mubr.bf16.mxu0 0
        %587 = vmatmul.mubr.bf16.gmra.mrb[0].mxu0 %v446
        %v588 = vpop.f32.mrb[0].mxu0
        %v589 = vadd.f32 0.0, %v588
        %v590 = vpop.f32.mrb[0].mxu0
        %v591 = vpop.f32.mrb[0].mxu0
        %v592 = vadd.f32 0.0, %v591
        %v593 = vpop.f32.mrb[0].mxu0
        %594 = vmatprep.mubr.bf16.mxu0 0
        %595 = vmatmul.mubr.bf16.gmra.mrb[0].mxu0 %v447
        %v596 = vpop.f32.mrb[0].mxu0
        %v597 = vadd.f32 0.0, %v596
        %v598 = vpop.f32.mrb[0].mxu0
        %v599 = vpop.f32.mrb[0].mxu0
        %v600 = vadd.f32 0.0, %v599
        %v601 = vpop.f32.mrb[0].mxu0
        %602 = vmatprep.mubr.bf16.mxu0 0
        %603 = vmatmul.mubr.bf16.gmra.mrb[0].mxu0 %v448
        %v604 = vpop.f32.mrb[0].mxu0
        %v605 = vadd.f32 0.0, %v604
        %v606 = vpop.f32.mrb[0].mxu0
        %v607 = vpop.f32.mrb[0].mxu0
        %v608 = vadd.f32 0.0, %v607
        %v609 = vpop.f32.mrb[0].mxu0
        %610 = vmatprep.mubr.bf16.mxu0 0
        %611 = vmatmul.mubr.bf16.gmra.mrb[0].mxu0 %v449
        %v612 = vpop.f32.mrb[0].mxu0
        %v613 = vadd.f32 0.0, %v612
        %v614 = vpop.f32.mrb[0].mxu0
        %v615 = vpop.f32.mrb[0].mxu0
        %v616 = vadd.f32 0.0, %v615
        %v617 = vpop.f32.mrb[0].mxu0
        %618 = vmatprep.mubr.bf16.mxu0 0
        %619 = vmatmul.mubr.bf16.gmra.mrb[0].mxu0 %v450
        %v620 = vpop.f32.mrb[0].mxu0
        %v621 = vadd.f32 0.0, %v620
        %v622 = vpop.f32.mrb[0].mxu0
        %v623 = vpop.f32.mrb[0].mxu0
        %v624 = vadd.f32 0.0, %v623
        %v625 = vpop.f32.mrb[0].mxu0
        %626 = vmatprep.mubr.bf16.mxu0 0
        %627 = vmatmul.mubr.bf16.gmra.mrb[0].mxu0 %v451
        %v628 = vpop.f32.mrb[0].mxu0
        %v629 = vadd.f32 0.0, %v628
        %v630 = vpop.f32.mrb[0].mxu0
        %v631 = vpop.f32.mrb[0].mxu0
        %v632 = vadd.f32 0.0, %v631
        %v633 = vpop.f32.mrb[0].mxu0
        %634 = vmatprep.mubr.bf16.mxu0 0
        %635 = vmatmul.mubr.bf16.gmra.mrb[0].mxu0 %v452
        %v636 = vpop.f32.mrb[0].mxu0
        %v637 = vadd.f32 0.0, %v636
        %v638 = vpop.f32.mrb[0].mxu0
        %v639 = vpop.f32.mrb[0].mxu0
        %v640 = vadd.f32 0.0, %v639
        %v641 = vpop.f32.mrb[0].mxu0
        %642 = vmatprep.mubr.bf16.mxu0 0
        %643 = vmatmul.mubr.bf16.gmra.mrb[0].mxu0 %v453
        %v644 = vpop.f32.mrb[0].mxu0
        %v645 = vadd.f32 0.0, %v644
        %v646 = vpop.f32.mrb[0].mxu0
        %v647 = vpop.f32.mrb[0].mxu0
        %v648 = vadd.f32 0.0, %v647
        %v649 = vpop.f32.mrb[0].mxu0
        %650 = vmatprep.mubr.bf16.mxu0 0
        %651 = vmatmul.mubr.bf16.gmra.mrb[0].mxu0 %v454
        %v652 = vpop.f32.mrb[0].mxu0
        %v653 = vadd.f32 0.0, %v652
        %v654 = vpop.f32.mrb[0].mxu0
        %v655 = vpop.f32.mrb[0].mxu0
        %v656 = vadd.f32 0.0, %v655
        %v657 = vpop.f32.mrb[0].mxu0
        %658 = vmatprep.mubr.bf16.mxu0 0
        %659 = vmatmul.mubr.bf16.gmra.mrb[0].mxu0 %v455
        %v660 = vpop.f32.mrb[0].mxu0
        %v661 = vadd.f32 0.0, %v660
        %v662 = vpop.f32.mrb[0].mxu0
        %v663 = vpop.f32.mrb[0].mxu0
        %v664 = vadd.f32 0.0, %v663
        %v665 = vpop.f32.mrb[0].mxu0
        %666 = vmatprep.mubr.bf16.mxu0 0
        %667 = vmatmul.mubr.bf16.gmra.mrb[0].mxu0 %v456
        %v668 = vpop.f32.mrb[0].mxu0
        %v669 = vadd.f32 0.0, %v668
        %v670 = vpop.f32.mrb[0].mxu0
        %v671 = vpop.f32.mrb[0].mxu0
        %v672 = vadd.f32 0.0, %v671
        %v673 = vpop.f32.mrb[0].mxu0
        %674 = vmatprep.mubr.bf16.mxu0 0
        %675 = vmatmul.mubr.bf16.gmra.mrb[0].mxu0 %v457
        %v676 = vpop.f32.mrb[0].mxu0
        %v677 = vadd.f32 0.0, %v676
        %v678 = vpop.f32.mrb[0].mxu0
        %v679 = vpop.f32.mrb[0].mxu0
        %v680 = vadd.f32 0.0, %v679
        %v681 = vpop.f32.mrb[0].mxu0
        %682 = vdwg.mxu0
        %v683 = vadd.f32 %v298, %v557
        %v684 = vadd.f32 %v299, %v560
        %v685 = vadd.f32 %v300, %v565
        %v686 = vadd.f32 %v301, %v568
        %v687 = vadd.f32 %v302, %v573
        %v688 = vadd.f32 %v303, %v576
        %v689 = vadd.f32 %v304, %v581
        %v690 = vadd.f32 %v305, %v584
        %v691 = vadd.f32 %v306, %v589
        %v692 = vadd.f32 %v307, %v592
        %v693 = vadd.f32 %v308, %v597
        %v694 = vadd.f32 %v309, %v600
        %v695 = vadd.f32 %v310, %v605
        %v696 = vadd.f32 %v311, %v608
        %v697 = vadd.f32 %v312, %v613
        %v698 = vadd.f32 %v313, %v616
        %v699 = vadd.f32 %v314, %v621
        %v700 = vadd.f32 %v315, %v624
        %v701 = vadd.f32 %v316, %v629
        %v702 = vadd.f32 %v317, %v632
        %v703 = vadd.f32 %v318, %v637
        %v704 = vadd.f32 %v319, %v640
        %v705 = vadd.f32 %v320, %v645
        %v706 = vadd.f32 %v321, %v648
        %v707 = vadd.f32 %v322, %v653
        %v708 = vadd.f32 %v323, %v656
        %v709 = vadd.f32 %v324, %v661
        %v710 = vadd.f32 %v325, %v664
        %v711 = vadd.f32 %v326, %v669
        %v712 = vadd.f32 %v327, %v672
        %v713 = vadd.f32 %v328, %v677
        %v714 = vadd.f32 %v329, %v680
        %715 = vst [vmem:[#allocation2] sm:$0xff] %v683
        %716 = vst [vmem:[#allocation2 + $0x8] sm:$0xff] %v684
        %717 = vst [vmem:[#allocation2 + $0x10] sm:$0xff] %v685
        %718 = vst [vmem:[#allocation2 + $0x18] sm:$0xff] %v686
        %719 = vst [vmem:[#allocation2 + $0x20] sm:$0xff] %v687
        %720 = vst [vmem:[#allocation2 + $0x28] sm:$0xff] %v688
        %721 = vst [vmem:[#allocation2 + $0x30] sm:$0xff] %v689
        %722 = vst [vmem:[#allocation2 + $0x38] sm:$0xff] %v690
        %723 = vst [vmem:[#allocation2 + $0x40] sm:$0xff] %v691
        %724 = vst [vmem:[#allocation2 + $0x48] sm:$0xff] %v692
        %725 = vst [vmem:[#allocation2 + $0x50] sm:$0xff] %v693
        %726 = vst [vmem:[#allocation2 + $0x58] sm:$0xff] %v694
        %727 = vst [vmem:[#allocation2 + $0x60] sm:$0xff] %v695
        %728 = vst [vmem:[#allocation2 + $0x68] sm:$0xff] %v696
        %729 = vst [vmem:[#allocation2 + $0x70] sm:$0xff] %v697
        %730 = vst [vmem:[#allocation2 + $0x78] sm:$0xff] %v698
        %731 = vst [vmem:[#allocation2 + $0x80] sm:$0xff] %v699
        %732 = vst [vmem:[#allocation2 + $0x88] sm:$0xff] %v700
        %733 = vst [vmem:[#allocation2 + $0x90] sm:$0xff] %v701
        %734 = vst [vmem:[#allocation2 + $0x98] sm:$0xff] %v702
        %735 = vst [vmem:[#allocation2 + $0xa0] sm:$0xff] %v703
        %736 = vst [vmem:[#allocation2 + $0xa8] sm:$0xff] %v704
        %737 = vst [vmem:[#allocation2 + $0xb0] sm:$0xff] %v705
        %738 = vst [vmem:[#allocation2 + $0xb8] sm:$0xff] %v706
        %739 = vst [vmem:[#allocation2 + $0xc0] sm:$0xff] %v707
        %740 = vst [vmem:[#allocation2 + $0xc8] sm:$0xff] %v708
        %741 = vst [vmem:[#allocation2 + $0xd0] sm:$0xff] %v709
        %742 = vst [vmem:[#allocation2 + $0xd8] sm:$0xff] %v710
        %743 = vst [vmem:[#allocation2 + $0xe0] sm:$0xff] %v711
        %744 = vst [vmem:[#allocation2 + $0xe8] sm:$0xff] %v712
        %745 = vst [vmem:[#allocation2 + $0xf0] sm:$0xff] %v713
        %746 = vst [vmem:[#allocation2 + $0xf8] sm:$0xff] %v714
        // Predicated region
        $region49: #{discriminator_forward.5} parent=31 // pred_check
          %p747 = pneg %p262
        $region50: #{discriminator_forward.5} parent=31 // pred_check_branch
          %749 = sbr.rel (%p747) target = $region52
        $region51: #{discriminator_forward.5} parent=31 // pred_region
          %v750 = vld [vmem:[#allocation2] sm:$0xff]
          %v751 = vld [vmem:[#allocation2 + $0x8] sm:$0xff]
          %v752 = vld [vmem:[#allocation2 + $0x10] sm:$0xff]
          %v753 = vld [vmem:[#allocation2 + $0x18] sm:$0xff]
          %v754 = vld [vmem:[#allocation2 + $0x20] sm:$0xff]
          %v755 = vld [vmem:[#allocation2 + $0x28] sm:$0xff]
          %v756 = vld [vmem:[#allocation2 + $0x30] sm:$0xff]
          %v757 = vld [vmem:[#allocation2 + $0x38] sm:$0xff]
          %v758 = vld [vmem:[#allocation2 + $0x40] sm:$0xff]
          %v759 = vld [vmem:[#allocation2 + $0x48] sm:$0xff]
          %v760 = vld [vmem:[#allocation2 + $0x50] sm:$0xff]
          %v761 = vld [vmem:[#allocation2 + $0x58] sm:$0xff]
          %v762 = vld [vmem:[#allocation2 + $0x60] sm:$0xff]
          %v763 = vld [vmem:[#allocation2 + $0x68] sm:$0xff]
          %v764 = vld [vmem:[#allocation2 + $0x70] sm:$0xff]
          %v765 = vld [vmem:[#allocation2 + $0x78] sm:$0xff]
          %v766 = vld [vmem:[#allocation2 + $0x80] sm:$0xff]
          %v767 = vld [vmem:[#allocation2 + $0x88] sm:$0xff]
          %v768 = vld [vmem:[#allocation2 + $0x90] sm:$0xff]
          %v769 = vld [vmem:[#allocation2 + $0x98] sm:$0xff]
          %v770 = vld [vmem:[#allocation2 + $0xa0] sm:$0xff]
          %v771 = vld [vmem:[#allocation2 + $0xa8] sm:$0xff]
          %v772 = vld [vmem:[#allocation2 + $0xb0] sm:$0xff]
          %v773 = vld [vmem:[#allocation2 + $0xb8] sm:$0xff]
          %v774 = vld [vmem:[#allocation2 + $0xc0] sm:$0xff]
          %v775 = vld [vmem:[#allocation2 + $0xc8] sm:$0xff]
          %v776 = vld [vmem:[#allocation2 + $0xd0] sm:$0xff]
          %v777 = vld [vmem:[#allocation2 + $0xd8] sm:$0xff]
          %v778 = vld [vmem:[#allocation2 + $0xe0] sm:$0xff]
          %v779 = vld [vmem:[#allocation2 + $0xe8] sm:$0xff]
          %v780 = vld [vmem:[#allocation2 + $0xf0] sm:$0xff]
          %v781 = vld [vmem:[#allocation2 + $0xf8] sm:$0xff]
          %v782 = vld [vmem:[#allocation8] sm:$0x1]
          %v784 = vlaneseq
          %v785 = vshrl.u32 %v784, 7
          %v786 = vsub.s32 0, %v785
          %v787 = vrot.slane %v782, %v786
          %v789 = vadd.f32 %v750, %v787
          %v790 = vadd.f32 %v751, %v787
          %v791 = vadd.f32 %v752, %v787
          %v792 = vadd.f32 %v753, %v787
          %v793 = vadd.f32 %v754, %v787
          %v794 = vadd.f32 %v755, %v787
          %v795 = vadd.f32 %v756, %v787
          %v796 = vadd.f32 %v757, %v787
          %v797 = vadd.f32 %v758, %v787
          %v798 = vadd.f32 %v759, %v787
          %v799 = vadd.f32 %v760, %v787
          %v800 = vadd.f32 %v761, %v787
          %v801 = vadd.f32 %v762, %v787
          %v802 = vadd.f32 %v763, %v787
          %v803 = vadd.f32 %v764, %v787
          %v804 = vadd.f32 %v765, %v787
          %v805 = vadd.f32 %v766, %v787
          %v806 = vadd.f32 %v767, %v787
          %v807 = vadd.f32 %v768, %v787
          %v808 = vadd.f32 %v769, %v787
          %v809 = vadd.f32 %v770, %v787
          %v810 = vadd.f32 %v771, %v787
          %v811 = vadd.f32 %v772, %v787
          %v812 = vadd.f32 %v773, %v787
          %v813 = vadd.f32 %v774, %v787
          %v814 = vadd.f32 %v775, %v787
          %v815 = vadd.f32 %v776, %v787
          %v816 = vadd.f32 %v777, %v787
          %v817 = vadd.f32 %v778, %v787
          %v818 = vadd.f32 %v779, %v787
          %v819 = vadd.f32 %v780, %v787
          %v820 = vadd.f32 %v781, %v787
          %vm821 = vcmp.ge.f32.partialorder %v789, 0.0
          %vm822 = vcmp.ge.f32.partialorder %v790, 0.0
          %vm823 = vcmp.ge.f32.partialorder %v791, 0.0
          %vm824 = vcmp.ge.f32.partialorder %v792, 0.0
          %vm825 = vcmp.ge.f32.partialorder %v793, 0.0
          %vm826 = vcmp.ge.f32.partialorder %v794, 0.0
          %vm827 = vcmp.ge.f32.partialorder %v795, 0.0
          %vm828 = vcmp.ge.f32.partialorder %v796, 0.0
          %vm829 = vcmp.ge.f32.partialorder %v797, 0.0
          %vm830 = vcmp.ge.f32.partialorder %v798, 0.0
          %vm831 = vcmp.ge.f32.partialorder %v799, 0.0
          %vm832 = vcmp.ge.f32.partialorder %v800, 0.0
          %vm833 = vcmp.ge.f32.partialorder %v801, 0.0
          %vm834 = vcmp.ge.f32.partialorder %v802, 0.0
          %vm835 = vcmp.ge.f32.partialorder %v803, 0.0
          %vm836 = vcmp.ge.f32.partialorder %v804, 0.0
          %vm837 = vcmp.ge.f32.partialorder %v805, 0.0
          %vm838 = vcmp.ge.f32.partialorder %v806, 0.0
          %vm839 = vcmp.ge.f32.partialorder %v807, 0.0
          %vm840 = vcmp.ge.f32.partialorder %v808, 0.0
          %vm841 = vcmp.ge.f32.partialorder %v809, 0.0
          %vm842 = vcmp.ge.f32.partialorder %v810, 0.0
          %vm843 = vcmp.ge.f32.partialorder %v811, 0.0
          %vm844 = vcmp.ge.f32.partialorder %v812, 0.0
          %vm845 = vcmp.ge.f32.partialorder %v813, 0.0
          %vm846 = vcmp.ge.f32.partialorder %v814, 0.0
          %vm847 = vcmp.ge.f32.partialorder %v815, 0.0
          %vm848 = vcmp.ge.f32.partialorder %v816, 0.0
          %vm849 = vcmp.ge.f32.partialorder %v817, 0.0
          %vm850 = vcmp.ge.f32.partialorder %v818, 0.0
          %vm851 = vcmp.ge.f32.partialorder %v819, 0.0
          %vm852 = vcmp.ge.f32.partialorder %v820, 0.0
          %v853 = vmul.f32 %v789, 0.2
          %v854 = vmul.f32 %v790, 0.2
          %v855 = vmul.f32 %v791, 0.2
          %v856 = vmul.f32 %v792, 0.2
          %v857 = vmul.f32 %v793, 0.2
          %v858 = vmul.f32 %v794, 0.2
          %v859 = vmul.f32 %v795, 0.2
          %v860 = vmul.f32 %v796, 0.2
          %v861 = vmul.f32 %v797, 0.2
          %v862 = vmul.f32 %v798, 0.2
          %v863 = vmul.f32 %v799, 0.2
          %v864 = vmul.f32 %v800, 0.2
          %v865 = vmul.f32 %v801, 0.2
          %v866 = vmul.f32 %v802, 0.2
          %v867 = vmul.f32 %v803, 0.2
          %v868 = vmul.f32 %v804, 0.2
          %v869 = vmul.f32 %v805, 0.2
          %v870 = vmul.f32 %v806, 0.2
          %v871 = vmul.f32 %v807, 0.2
          %v872 = vmul.f32 %v808, 0.2
          %v873 = vmul.f32 %v809, 0.2
          %v874 = vmul.f32 %v810, 0.2
          %v875 = vmul.f32 %v811, 0.2
          %v876 = vmul.f32 %v812, 0.2
          %v877 = vmul.f32 %v813, 0.2
          %v878 = vmul.f32 %v814, 0.2
          %v879 = vmul.f32 %v815, 0.2
          %v880 = vmul.f32 %v816, 0.2
          %v881 = vmul.f32 %v817, 0.2
          %v882 = vmul.f32 %v818, 0.2
          %v883 = vmul.f32 %v819, 0.2
          %v884 = vmul.f32 %v820, 0.2
          %v885 = vsel %vm821, %v789, %v853
          %v886 = vsel %vm822, %v790, %v854
          %v887 = vsel %vm823, %v791, %v855
          %v888 = vsel %vm824, %v792, %v856
          %v889 = vsel %vm825, %v793, %v857
          %v890 = vsel %vm826, %v794, %v858
          %v891 = vsel %vm827, %v795, %v859
          %v892 = vsel %vm828, %v796, %v860
          %v893 = vsel %vm829, %v797, %v861
          %v894 = vsel %vm830, %v798, %v862
          %v895 = vsel %vm831, %v799, %v863
          %v896 = vsel %vm832, %v800, %v864
          %v897 = vsel %vm833, %v801, %v865
          %v898 = vsel %vm834, %v802, %v866
          %v899 = vsel %vm835, %v803, %v867
          %v900 = vsel %vm836, %v804, %v868
          %v901 = vsel %vm837, %v805, %v869
          %v902 = vsel %vm838, %v806, %v870
          %v903 = vsel %vm839, %v807, %v871
          %v904 = vsel %vm840, %v808, %v872
          %v905 = vsel %vm841, %v809, %v873
          %v906 = vsel %vm842, %v810, %v874
          %v907 = vsel %vm843, %v811, %v875
          %v908 = vsel %vm844, %v812, %v876
          %v909 = vsel %vm845, %v813, %v877
          %v910 = vsel %vm846, %v814, %v878
          %v911 = vsel %vm847, %v815, %v879
          %v912 = vsel %vm848, %v816, %v880
          %v913 = vsel %vm849, %v817, %v881
          %v914 = vsel %vm850, %v818, %v882
          %v915 = vsel %vm851, %v819, %v883
          %v916 = vsel %vm852, %v820, %v884
          %917 = vst [vmem:[%s257] sm:$0xff] %v885
          %918 = vst [vmem:[%s257 + $0x8] sm:$0xff] %v886
          %919 = vst [vmem:[%s257 + $0x10] sm:$0xff] %v887
          %920 = vst [vmem:[%s257 + $0x18] sm:$0xff] %v888
          %921 = vst [vmem:[%s257 + $0x20] sm:$0xff] %v889
          %922 = vst [vmem:[%s257 + $0x28] sm:$0xff] %v890
          %923 = vst [vmem:[%s257 + $0x30] sm:$0xff] %v891
          %924 = vst [vmem:[%s257 + $0x38] sm:$0xff] %v892
          %925 = vst [vmem:[%s257 + $0x40] sm:$0xff] %v893
          %926 = vst [vmem:[%s257 + $0x48] sm:$0xff] %v894
          %927 = vst [vmem:[%s257 + $0x50] sm:$0xff] %v895
          %928 = vst [vmem:[%s257 + $0x58] sm:$0xff] %v896
          %929 = vst [vmem:[%s257 + $0x60] sm:$0xff] %v897
          %930 = vst [vmem:[%s257 + $0x68] sm:$0xff] %v898
          %931 = vst [vmem:[%s257 + $0x70] sm:$0xff] %v899
          %932 = vst [vmem:[%s257 + $0x78] sm:$0xff] %v900
          %933 = vst [vmem:[%s257 + $0x80] sm:$0xff] %v901
          %934 = vst [vmem:[%s257 + $0x88] sm:$0xff] %v902
          %935 = vst [vmem:[%s257 + $0x90] sm:$0xff] %v903
          %936 = vst [vmem:[%s257 + $0x98] sm:$0xff] %v904
          %937 = vst [vmem:[%s257 + $0xa0] sm:$0xff] %v905
          %938 = vst [vmem:[%s257 + $0xa8] sm:$0xff] %v906
          %939 = vst [vmem:[%s257 + $0xb0] sm:$0xff] %v907
          %940 = vst [vmem:[%s257 + $0xb8] sm:$0xff] %v908
          %941 = vst [vmem:[%s257 + $0xc0] sm:$0xff] %v909
          %942 = vst [vmem:[%s257 + $0xc8] sm:$0xff] %v910
          %943 = vst [vmem:[%s257 + $0xd0] sm:$0xff] %v911
          %944 = vst [vmem:[%s257 + $0xd8] sm:$0xff] %v912
          %945 = vst [vmem:[%s257 + $0xe0] sm:$0xff] %v913
          %946 = vst [vmem:[%s257 + $0xe8] sm:$0xff] %v914
          %947 = vst [vmem:[%s257 + $0xf0] sm:$0xff] %v915
          %948 = vst [vmem:[%s257 + $0xf8] sm:$0xff] %v916
        $region52: #{discriminator_forward.5} parent=31 // pred_fallthru
          _
        %s949 = sand.u32 %s132, 1
        %s950 = scalar_lea.sflag [#allocation5], %s949
        %s951 = sand.u32 %s132, 1
        %s952 = smul.addr %s951, 256
        %s953 = scalar_lea.vmem [#allocation9], %s952
        // Predicated region
        $region53: #{discriminator_forward.5} parent=31 // pred_check
          %p954 = pneg %p142
        $region54: #{discriminator_forward.5} parent=31 // pred_check_branch
          %956 = sbr.rel (%p954) target = $region56
        $region55: #{discriminator_forward.5} parent=31 // pred_region
          %s957 = smul.u32 32, %s26
          %s959 = ssub.s32 4096, 4096
          %960 = vsyncadd %s950, %s959
          %s961 = sadd.s32 %s27, %s957
          %s962 = smul.addr %s961, 128
          %s963 = scalar_lea.hbm %s3, %s962
          %s964 = sshll.u32 %s953, 4
          %s965 = int_to_ptr.vmem [resolvable:$true] %s964
          %970 = dma.vmem_to_hbm [thread:$0]  %s965, 4096, %s963, %s950, 128, 128, 8
        $region56: #{discriminator_forward.5} parent=31 // pred_fallthru
          _
      $region32: #{discriminator_forward.5} parent=5 // pred_fallthru
        _
      %p971 = scmp.le.s32.totalorder 2, %s16
      // Predicated region
      $region57: #{discriminator_forward.5} parent=5 // pred_check
        %p972 = pneg %p971
      $region58: #{discriminator_forward.5} parent=5 // pred_check_branch
        %974 = sbr.rel (%p972) target = $region60
      $region59: #{discriminator_forward.5} parent=5 // pred_region
        %s975 = ssub.s32 %s16, 2
        // Predicated region
        $region61: #{discriminator_forward.5} parent=59 // pred_check
          %p976 = pneg %p148
        $region62: #{discriminator_forward.5} parent=59 // pred_check_branch
          %978 = sbr.rel (%p976) target = $region64
        $region63: #{discriminator_forward.5} parent=59 // pred_region
          %s979 = sand.u32 %s133, 1
          %s980 = scalar_lea.sflag [#allocation5], %s979
          %s981 = sand.u32 %s133, 1
          %s982 = smul.addr %s981, 256
          %s983 = scalar_lea.vmem [#allocation9], %s982
          %984 = dma.done %s980, 4096
        $region64: #{discriminator_forward.5} parent=59 // pred_fallthru
          _
      $region60: #{discriminator_forward.5} parent=5 // pred_fallthru
        _
    $region6: #{discriminator_forward.5} parent=1 // loop_footer
      %s20 = sadd.s32 1, %s16
    $region7: #{discriminator_forward.5} parent=1 // loop_footer_branch
      %15 = sbr.rel target = $region3
    $region8: #{discriminator_forward.5} parent=1 // loop_exit
      _
    %985 = vsyncpa [#allocation4], 1
    %s986 = scalar_lea.sflag [#allocation4], 1
    %987 = vsyncpa %s986, 1
    %988 = vsyncpa [#allocation7], 1
    %989 = vsyncpa [#allocation5], 1
    %s990 = scalar_lea.sflag [#allocation5], 1
    %991 = vsyncpa %s990, 1

// kernel: discriminator_forward.6
$region0: #{discriminator_forward.6}
  #allocation0 [shape = 'u32[]', space=smem, size = 0x4, offset = 0x4, fixed_abs, tag = 'smem constant byte address 0x4 - core index']
  #allocation1 [shape = 'u32[144,128]{1,0:T(1,128)}', space=vmem, size = 0x12000, scoped, tag = 'internal scratch']
  #allocation2 [shape = 'f32[128,128]{1,0:T(8,128)}', space=vmem, size = 0x10000, scoped, tag = 'scratch operand']
  %s0 = inlined_call_operand.hbm [shape: bf16[128,1024], index: 0, kind: input, shape index: {}]
  %s1 = inlined_call_operand.hbm [shape: bf16[1024,128], index: 1, kind: input, shape index: {}]
  %s2 = inlined_call_operand.hbm [shape: f32[1,128], index: 2, kind: input, shape index: {}]
  %s3 = inlined_call_operand.hbm [shape: f32[128,128], index: 3, kind: output, shape index: {}]
  %s4 = sld [smem:[#allocation0]]
  $region65: #{discriminator_forward.6} parent=0
    _
  %s6 = ssub.s32 1, %s4
  %s7 = scalar_select 0, %s6, %s4
  $region1: #{discriminator_forward.6} parent=0
    #allocation3 [shape = 'u8[262144]{0}', space=vmem, size = 0x40000, scoped, tag = 'input window, operand 0']
    #allocation4 [shape = 's32[2]{0}', space=sflag, size = 0x8, scoped, tag = 'scoped memory for discriminator_forward.6']
    #allocation5 [shape = 's32[2]{0}', space=sflag, size = 0x8, scoped, tag = 'scoped memory for discriminator_forward.6']
    #allocation6 [shape = 'u8[262144]{0}', space=vmem, size = 0x40000, scoped, tag = 'input window, operand 1']
    #allocation7 [shape = 's32[2]{0}', space=sflag, size = 0x8, scoped, tag = 'scoped memory for discriminator_forward.6']
    #allocation8 [shape = 'u8[512]{0}', space=vmem, size = 0x400, scoped, tag = 'input window, operand 2, single buffered']
    #allocation9 [shape = 'u8[65536]{0}', space=vmem, size = 0x10000, scoped, tag = 'output window, operand 0, single buffered']
    %8 = vsyncpa [#allocation4], 0
    %s9 = scalar_lea.sflag [#allocation4], 1
    %10 = vsyncpa %s9, 0
    %11 = vsyncpa [#allocation7], 0
    %s12 = scalar_lea.sflag [#allocation7], 1
    %13 = vsyncpa %s12, 0
    %14 = vsyncpa [#allocation5], 0
    loop: start=0, step=1, limit=4
    $region2: #{discriminator_forward.6} parent=1 // loop_pre_header
      _
    $region3: #{discriminator_forward.6} parent=1 // loop_header
      %s16 = sphi 0, %s20
      %p17 = scmp.ge.s32.totalorder %s16, 4
      %s23 = sphi 0, %s42
      %s24 = sphi 0, %s38
      %s25 = sphi 0, %s34
      %s26 = sphi 0, %s23
      %s27 = sphi 0, %s24
      %s28 = sphi 0, %s25
      %s29 = sphi 0, %s26
      %s30 = sphi 0, %s27
      %s31 = sphi 0, %s28
      %s47 = sphi 0, %s49
      %s50 = sphi 0, %s47
      %s51 = sphi 0, %s50
      %s67 = sphi 0, %s51
      %s75 = sphi 0, %s77
      %s78 = sphi 0, %s75
      %s79 = sphi 0, %s78
      %s95 = sphi 0, %s79
      %s101 = sphi 0, %s103
      %s104 = sphi 0, %s101
      %s105 = sphi 0, %s104
      %s121 = sphi 0, %s105
      %s129 = sphi 0, %s131
      %s132 = sphi 0, %s129
      %s133 = sphi 0, %s132
      %s149 = sphi 0, %s133
    $region4: #{discriminator_forward.6} parent=1 // loop_header_branch
      %19 = sbr.rel (%p17) target = $region8
    $region5: #{discriminator_forward.6} parent=1 // loop_body
      %s21 = ssub.s32 %s16, 1
      %s22 = ssub.s32 %s16, 2
      %s32 = sadd.s32 1, %s25
      %p33 = scmp.ge.s32.totalorder %s32, 2
      %s34 = scalar_select %p33, 0, %s32
      %s35 = sadd.s32 1, %s24
      %s36 = scalar_select %p33, %s35, %s24
      %p37 = scmp.ge.s32.totalorder %s36, 1
      %s38 = scalar_select %p37, 0, %s36
      %s39 = sadd.s32 1, %s23
      %s40 = scalar_select %p37, %s39, %s23
      %p41 = scmp.ge.s32.totalorder %s40, 1
      %s42 = scalar_select %p41, 0, %s40
      %s43 = ssub.s32 %s23, %s42
      %s44 = ssub.s32 %s25, %s34
      %s45 = sor.u32 %s43, %s44
      %p46 = scmp.eq.s32.totalorder %s45, 0
      %s48 = sadd.s32 %s47, 1
      %s49 = scalar_select %p46, %s47, %s48
      %p52 = pneg %p46
      %p53 = scmp.eq.s32.totalorder %s16, 1
      %p54 = por %p52, %p53
      %p55 = scmp.ne.s32.totalorder %s47, %s50
      %p56 = scmp.eq.s32.totalorder %s16, 0
      %p57 = por %p55, %p56
      %p58 = scmp.ne.s32.totalorder %s47, %s50
      %p59 = scmp.eq.s32.totalorder %s21, 1
      %p60 = por %p58, %p59
      %p61 = scmp.ne.s32.totalorder %s50, %s51
      %p62 = scmp.eq.s32.totalorder %s21, 0
      %p63 = por %p61, %p62
      %p64 = scmp.ne.s32.totalorder %s50, %s51
      %p65 = scmp.eq.s32.totalorder %s22, 1
      %p66 = por %p64, %p65
      %p68 = scmp.ne.s32.totalorder %s51, %s67
      %p69 = scmp.eq.s32.totalorder %s22, 0
      %p70 = por %p68, %p69
      %s71 = ssub.s32 %s25, %s34
      %s72 = ssub.s32 %s24, %s38
      %s73 = sor.u32 %s71, %s72
      %p74 = scmp.eq.s32.totalorder %s73, 0
      %s76 = sadd.s32 %s75, 1
      %s77 = scalar_select %p74, %s75, %s76
      %p80 = pneg %p74
      %p81 = scmp.eq.s32.totalorder %s16, 1
      %p82 = por %p80, %p81
      %p83 = scmp.ne.s32.totalorder %s75, %s78
      %p84 = scmp.eq.s32.totalorder %s16, 0
      %p85 = por %p83, %p84
      %p86 = scmp.ne.s32.totalorder %s75, %s78
      %p87 = scmp.eq.s32.totalorder %s21, 1
      %p88 = por %p86, %p87
      %p89 = scmp.ne.s32.totalorder %s78, %s79
      %p90 = scmp.eq.s32.totalorder %s21, 0
      %p91 = por %p89, %p90
      %p92 = scmp.ne.s32.totalorder %s78, %s79
      %p93 = scmp.eq.s32.totalorder %s22, 1
      %p94 = por %p92, %p93
      %p96 = scmp.ne.s32.totalorder %s79, %s95
      %p97 = scmp.eq.s32.totalorder %s22, 0
      %p98 = por %p96, %p97
      %s99 = ssub.s32 %s24, %s38
      %p100 = scmp.eq.s32.totalorder %s99, 0
      %s102 = sadd.s32 %s101, 1
      %s103 = scalar_select %p100, %s101, %s102
      %p106 = pneg %p100
      %p107 = scmp.eq.s32.totalorder %s16, 1
      %p108 = por %p106, %p107
      %p109 = scmp.ne.s32.totalorder %s101, %s104
      %p110 = scmp.eq.s32.totalorder %s16, 0
      %p111 = por %p109, %p110
      %p112 = scmp.ne.s32.totalorder %s101, %s104
      %p113 = scmp.eq.s32.totalorder %s21, 1
      %p114 = por %p112, %p113
      %p115 = scmp.ne.s32.totalorder %s104, %s105
      %p116 = scmp.eq.s32.totalorder %s21, 0
      %p117 = por %p115, %p116
      %p118 = scmp.ne.s32.totalorder %s104, %s105
      %p119 = scmp.eq.s32.totalorder %s22, 1
      %p120 = por %p118, %p119
      %p122 = scmp.ne.s32.totalorder %s105, %s121
      %p123 = scmp.eq.s32.totalorder %s22, 0
      %p124 = por %p122, %p123
      %s125 = ssub.s32 %s23, %s42
      %s126 = ssub.s32 %s24, %s38
      %s127 = sor.u32 %s125, %s126
      %p128 = scmp.eq.s32.totalorder %s127, 0
      %s130 = sadd.s32 %s129, 1
      %s131 = scalar_select %p128, %s129, %s130
      %p134 = pneg %p128
      %p135 = scmp.eq.s32.totalorder %s16, 1
      %p136 = por %p134, %p135
      %p137 = scmp.ne.s32.totalorder %s129, %s132
      %p138 = scmp.eq.s32.totalorder %s16, 0
      %p139 = por %p137, %p138
      %p140 = scmp.ne.s32.totalorder %s129, %s132
      %p141 = scmp.eq.s32.totalorder %s21, 1
      %p142 = por %p140, %p141
      %p143 = scmp.ne.s32.totalorder %s132, %s133
      %p144 = scmp.eq.s32.totalorder %s21, 0
      %p145 = por %p143, %p144
      %p146 = scmp.ne.s32.totalorder %s132, %s133
      %p147 = scmp.eq.s32.totalorder %s22, 1
      %p148 = por %p146, %p147
      %p150 = scmp.ne.s32.totalorder %s133, %s149
      %p151 = scmp.eq.s32.totalorder %s22, 0
      %p152 = por %p150, %p151
      %p153 = scmp.le.s32.totalorder 1, %s16
      %p154 = scmp.lt.s32.totalorder %s16, 3
      %p155 = pnand %p153, %p154
      %p156 = pneg %p155
      // Predicated region
      $region9: #{discriminator_forward.6} parent=5 // pred_check
        _
      $region10: #{discriminator_forward.6} parent=5 // pred_check_branch
        %158 = sbr.rel (%p155) target = $region12
      $region11: #{discriminator_forward.6} parent=5 // pred_region
        %s159 = ssub.s32 %s16, 1
        // Predicated region
        $region13: #{discriminator_forward.6} parent=11 // pred_check
          %p160 = pneg %p117
        $region14: #{discriminator_forward.6} parent=11 // pred_check_branch
          %162 = sbr.rel (%p160) target = $region16
        $region15: #{discriminator_forward.6} parent=11 // pred_region
          %s164 = ssub.s32 16, 16
          %165 = vsyncadd [#allocation7], %s164
          %s166 = smul.addr %s27, 16
          %s167 = scalar_lea.hbm %s2, %s166
          %s169 = sshll.u32 [#allocation8], 4
          %s170 = int_to_ptr.vmem [resolvable:$true] %s169
          %172 = dma.hbm_to_vmem [thread:$0]  %s167, 16, %s170, [#allocation7]
        $region16: #{discriminator_forward.6} parent=11 // pred_fallthru
          _
      $region12: #{discriminator_forward.6} parent=5 // pred_fallthru
        _
      %p173 = scmp.lt.s32.totalorder %s16, 2
      // Predicated region
      $region17: #{discriminator_forward.6} parent=5 // pred_check
        %p174 = pneg %p173
      $region18: #{discriminator_forward.6} parent=5 // pred_check_branch
        %176 = sbr.rel (%p174) target = $region20
      $region19: #{discriminator_forward.6} parent=5 // pred_region
        // Predicated region
        $region21: #{discriminator_forward.6} parent=19 // pred_check
          %p177 = pneg %p57
        $region22: #{discriminator_forward.6} parent=19 // pred_check_branch
          %179 = sbr.rel (%p177) target = $region24
        $region23: #{discriminator_forward.6} parent=19 // pred_region
          %s180 = sand.u32 %s47, 1
          %s181 = scalar_lea.sflag [#allocation4], %s180
          %s182 = sand.u32 %s47, 1
          %s183 = smul.addr %s182, 256
          %s184 = scalar_lea.vmem [#allocation3], %s183
          %s185 = smul.u32 16, %s23
          %s186 = smul.u32 4, %s25
          %s188 = ssub.s32 4096, 4096
          %189 = vsyncadd %s181, %s188
          %s190 = smul.addr %s185, 8
          %s191 = sadd.s32 %s186, %s190
          %s192 = smul.addr %s191, 64
          %s193 = scalar_lea.hbm %s0, %s192
          %s194 = sshll.u32 %s184, 4
          %s195 = int_to_ptr.vmem [resolvable:$true] %s194
          %200 = dma.hbm_to_vmem [thread:$0]  %s193, 4096, %s195, %s181, 512, 256, 16
        $region24: #{discriminator_forward.6} parent=19 // pred_fallthru
          _
        // Predicated region
        $region25: #{discriminator_forward.6} parent=19 // pred_check
          %p201 = pneg %p85
        $region26: #{discriminator_forward.6} parent=19 // pred_check_branch
          %203 = sbr.rel (%p201) target = $region28
        $region27: #{discriminator_forward.6} parent=19 // pred_region
          %s204 = sand.u32 %s16, 1
          %s205 = scalar_lea.sflag [#allocation7], %s204
          %s206 = sand.u32 %s75, 1
          %s207 = smul.addr %s206, 256
          %s208 = scalar_lea.vmem [#allocation6], %s207
          %s209 = smul.u32 64, %s25
          %s211 = ssub.s32 4096, 4096
          %212 = vsyncadd %s205, %s211
          %s213 = sadd.s32 %s24, %s209
          %s214 = smul.addr %s213, 64
          %s215 = scalar_lea.hbm %s1, %s214
          %s216 = sshll.u32 %s208, 4
          %s217 = int_to_ptr.vmem [resolvable:$true] %s216
          %222 = dma.hbm_to_vmem [thread:$0]  %s215, 4096, %s217, %s205, 64, 64, 4
        $region28: #{discriminator_forward.6} parent=19 // pred_fallthru
          _
      $region20: #{discriminator_forward.6} parent=5 // pred_fallthru
        _
      %p223 = scmp.le.s32.totalorder 1, %s16
      %p224 = scmp.lt.s32.totalorder %s16, 3
      %p225 = pnand %p223, %p224
      %p226 = pneg %p225
      // Predicated region
      $region29: #{discriminator_forward.6} parent=5 // pred_check
        _
      $region30: #{discriminator_forward.6} parent=5 // pred_check_branch
        %228 = sbr.rel (%p225) target = $region32
      $region31: #{discriminator_forward.6} parent=5 // pred_region
        %s229 = ssub.s32 %s16, 1
        %s230 = sand.u32 %s50, 1
        %s231 = scalar_lea.sflag [#allocation4], %s230
        %s232 = sand.u32 %s50, 1
        %s233 = smul.addr %s232, 256
        %s234 = scalar_lea.vmem [#allocation3], %s233
        // Predicated region
        $region33: #{discriminator_forward.6} parent=31 // pred_check
          %p235 = pneg %p63
        $region34: #{discriminator_forward.6} parent=31 // pred_check_branch
          %237 = sbr.rel (%p235) target = $region36
        $region35: #{discriminator_forward.6} parent=31 // pred_region
          %238 = dma.done %s231, 4096
        $region36: #{discriminator_forward.6} parent=31 // pred_fallthru
          _
        %s239 = sand.u32 %s21, 1
        %s240 = scalar_lea.sflag [#allocation7], %s239
        %s241 = sand.u32 %s78, 1
        %s242 = smul.addr %s241, 256
        %s243 = scalar_lea.vmem [#allocation6], %s242
        // Predicated region
        $region37: #{discriminator_forward.6} parent=31 // pred_check
          %p244 = pneg %p91
        $region38: #{discriminator_forward.6} parent=31 // pred_check_branch
          %246 = sbr.rel (%p244) target = $region40
        $region39: #{discriminator_forward.6} parent=31 // pred_region
          %247 = dma.done %s240, 4096
        $region40: #{discriminator_forward.6} parent=31 // pred_fallthru
          _
        // Predicated region
        $region41: #{discriminator_forward.6} parent=31 // pred_check
          %p248 = pneg %p117
        $region42: #{discriminator_forward.6} parent=31 // pred_check_branch
          %250 = sbr.rel (%p248) target = $region44
        $region43: #{discriminator_forward.6} parent=31 // pred_region
          %251 = dma.done [#allocation7], 16
        $region44: #{discriminator_forward.6} parent=31 // pred_fallthru
          _
        %s252 = sand.u32 %s50, 1
        %s253 = scalar_lea.sflag [#allocation4], %s252
        %s254 = sand.u32 %s50, 1
        %s255 = smul.addr %s254, 256
        %s256 = scalar_lea.vmem [#allocation3], %s255
        %p257 = pneg %p63
        %p258 = pneg %p60
        %s259 = sand.u32 %s21, 1
        %s260 = scalar_lea.sflag [#allocation7], %s259
        %s261 = sand.u32 %s78, 1
        %s262 = smul.addr %s261, 256
        %s263 = scalar_lea.vmem [#allocation6], %s262
        %p264 = pneg %p91
        %p265 = pneg %p88
        %p266 = pneg %p117
        %p267 = pneg %p114
        %p268 = pneg %p145
        %p269 = pneg %p142
        %s270 = smul.u32 16, %s26
        %s271 = smul.u32 4, %s28
        %s272 = smul.u32 64, %s28
        %s273 = smul.u32 16, %s26
        %p275 = scmp.eq.s32.totalorder %s28, 0
        // Predicated region
        $region45: #{discriminator_forward.6} parent=31 // pred_check
          %p276 = pneg %p275
        $region46: #{discriminator_forward.6} parent=31 // pred_check_branch
          %278 = sbr.rel (%p276) target = $region48
        $region47: #{discriminator_forward.6} parent=31 // pred_region
          %279 = vst [vmem:[#allocation2] sm:$0xff] 0.0
          %280 = vst [vmem:[#allocation2 + $0x8] sm:$0xff] 0.0
          %281 = vst [vmem:[#allocation2 + $0x10] sm:$0xff] 0.0
          %282 = vst [vmem:[#allocation2 + $0x18] sm:$0xff] 0.0
          %283 = vst [vmem:[#allocation2 + $0x20] sm:$0xff] 0.0
          %284 = vst [vmem:[#allocation2 + $0x28] sm:$0xff] 0.0
          %285 = vst [vmem:[#allocation2 + $0x30] sm:$0xff] 0.0
          %286 = vst [vmem:[#allocation2 + $0x38] sm:$0xff] 0.0
          %287 = vst [vmem:[#allocation2 + $0x40] sm:$0xff] 0.0
          %288 = vst [vmem:[#allocation2 + $0x48] sm:$0xff] 0.0
          %289 = vst [vmem:[#allocation2 + $0x50] sm:$0xff] 0.0
          %290 = vst [vmem:[#allocation2 + $0x58] sm:$0xff] 0.0
          %291 = vst [vmem:[#allocation2 + $0x60] sm:$0xff] 0.0
          %292 = vst [vmem:[#allocation2 + $0x68] sm:$0xff] 0.0
          %293 = vst [vmem:[#allocation2 + $0x70] sm:$0xff] 0.0
          %294 = vst [vmem:[#allocation2 + $0x78] sm:$0xff] 0.0
        $region48: #{discriminator_forward.6} parent=31 // pred_fallthru
          _
        %v295 = vld [vmem:[#allocation2] sm:$0xff]
        %v296 = vld [vmem:[#allocation2 + $0x8] sm:$0xff]
        %v297 = vld [vmem:[#allocation2 + $0x10] sm:$0xff]
        %v298 = vld [vmem:[#allocation2 + $0x18] sm:$0xff]
        %v299 = vld [vmem:[#allocation2 + $0x20] sm:$0xff]
        %v300 = vld [vmem:[#allocation2 + $0x28] sm:$0xff]
        %v301 = vld [vmem:[#allocation2 + $0x30] sm:$0xff]
        %v302 = vld [vmem:[#allocation2 + $0x38] sm:$0xff]
        %v303 = vld [vmem:[#allocation2 + $0x40] sm:$0xff]
        %v304 = vld [vmem:[#allocation2 + $0x48] sm:$0xff]
        %v305 = vld [vmem:[#allocation2 + $0x50] sm:$0xff]
        %v306 = vld [vmem:[#allocation2 + $0x58] sm:$0xff]
        %v307 = vld [vmem:[#allocation2 + $0x60] sm:$0xff]
        %v308 = vld [vmem:[#allocation2 + $0x68] sm:$0xff]
        %v309 = vld [vmem:[#allocation2 + $0x70] sm:$0xff]
        %v310 = vld [vmem:[#allocation2 + $0x78] sm:$0xff]
        %v311 = vld [vmem:[%s234] sm:$0xff]
        %v312 = vld [vmem:[%s234 + $0x8] sm:$0xff]
        %v313 = vld [vmem:[%s234 + $0x10] sm:$0xff]
        %v314 = vld [vmem:[%s234 + $0x18] sm:$0xff]
        %v315 = vld [vmem:[%s234 + $0x20] sm:$0xff]
        %v316 = vld [vmem:[%s234 + $0x28] sm:$0xff]
        %v317 = vld [vmem:[%s234 + $0x30] sm:$0xff]
        %v318 = vld [vmem:[%s234 + $0x38] sm:$0xff]
        %v319 = vld [vmem:[%s234 + $0x40] sm:$0xff]
        %v320 = vld [vmem:[%s234 + $0x48] sm:$0xff]
        %v321 = vld [vmem:[%s234 + $0x50] sm:$0xff]
        %v322 = vld [vmem:[%s234 + $0x58] sm:$0xff]
        %v323 = vld [vmem:[%s234 + $0x60] sm:$0xff]
        %v324 = vld [vmem:[%s234 + $0x68] sm:$0xff]
        %v325 = vld [vmem:[%s234 + $0x70] sm:$0xff]
        %v326 = vld [vmem:[%s234 + $0x78] sm:$0xff]
        %v327 = vld [vmem:[%s234 + $0x80] sm:$0xff]
        %v328 = vld [vmem:[%s234 + $0x88] sm:$0xff]
        %v329 = vld [vmem:[%s234 + $0x90] sm:$0xff]
        %v330 = vld [vmem:[%s234 + $0x98] sm:$0xff]
        %v331 = vld [vmem:[%s234 + $0xa0] sm:$0xff]
        %v332 = vld [vmem:[%s234 + $0xa8] sm:$0xff]
        %v333 = vld [vmem:[%s234 + $0xb0] sm:$0xff]
        %v334 = vld [vmem:[%s234 + $0xb8] sm:$0xff]
        %v335 = vld [vmem:[%s234 + $0xc0] sm:$0xff]
        %v336 = vld [vmem:[%s234 + $0xc8] sm:$0xff]
        %v337 = vld [vmem:[%s234 + $0xd0] sm:$0xff]
        %v338 = vld [vmem:[%s234 + $0xd8] sm:$0xff]
        %v339 = vld [vmem:[%s234 + $0xe0] sm:$0xff]
        %v340 = vld [vmem:[%s234 + $0xe8] sm:$0xff]
        %v341 = vld [vmem:[%s234 + $0xf0] sm:$0xff]
        %v342 = vld [vmem:[%s234 + $0xf8] sm:$0xff]
        %v343 = vld [vmem:[%s243] sm:$0xf]
        %v344 = vld [vmem:[%s243 + $0x4] sm:$0xf]
        %v345 = vld [vmem:[%s243 + $0x8] sm:$0xf]
        %v346 = vld [vmem:[%s243 + $0xc] sm:$0xf]
        %v347 = vld [vmem:[%s243 + $0x10] sm:$0xf]
        %v348 = vld [vmem:[%s243 + $0x14] sm:$0xf]
        %v349 = vld [vmem:[%s243 + $0x18] sm:$0xf]
        %v350 = vld [vmem:[%s243 + $0x1c] sm:$0xf]
        %v351 = vld [vmem:[%s243 + $0x20] sm:$0xf]
        %v352 = vld [vmem:[%s243 + $0x24] sm:$0xf]
        %v353 = vld [vmem:[%s243 + $0x28] sm:$0xf]
        %v354 = vld [vmem:[%s243 + $0x2c] sm:$0xf]
        %v355 = vld [vmem:[%s243 + $0x30] sm:$0xf]
        %v356 = vld [vmem:[%s243 + $0x34] sm:$0xf]
        %v357 = vld [vmem:[%s243 + $0x38] sm:$0xf]
        %v358 = vld [vmem:[%s243 + $0x3c] sm:$0xf]
        %v359 = vld [vmem:[%s243 + $0x40] sm:$0xf]
        %v360 = vld [vmem:[%s243 + $0x44] sm:$0xf]
        %v361 = vld [vmem:[%s243 + $0x48] sm:$0xf]
        %v362 = vld [vmem:[%s243 + $0x4c] sm:$0xf]
        %v363 = vld [vmem:[%s243 + $0x50] sm:$0xf]
        %v364 = vld [vmem:[%s243 + $0x54] sm:$0xf]
        %v365 = vld [vmem:[%s243 + $0x58] sm:$0xf]
        %v366 = vld [vmem:[%s243 + $0x5c] sm:$0xf]
        %v367 = vld [vmem:[%s243 + $0x60] sm:$0xf]
        %v368 = vld [vmem:[%s243 + $0x64] sm:$0xf]
        %v369 = vld [vmem:[%s243 + $0x68] sm:$0xf]
        %v370 = vld [vmem:[%s243 + $0x6c] sm:$0xf]
        %v371 = vld [vmem:[%s243 + $0x70] sm:$0xf]
        %v372 = vld [vmem:[%s243 + $0x74] sm:$0xf]
        %v373 = vld [vmem:[%s243 + $0x78] sm:$0xf]
        %v374 = vld [vmem:[%s243 + $0x7c] sm:$0xf]
        %v375 = vld [vmem:[%s243 + $0x80] sm:$0xf]
        %v376 = vld [vmem:[%s243 + $0x84] sm:$0xf]
        %v377 = vld [vmem:[%s243 + $0x88] sm:$0xf]
        %v378 = vld [vmem:[%s243 + $0x8c] sm:$0xf]
        %v379 = vld [vmem:[%s243 + $0x90] sm:$0xf]
        %v380 = vld [vmem:[%s243 + $0x94] sm:$0xf]
        %v381 = vld [vmem:[%s243 + $0x98] sm:$0xf]
        %v382 = vld [vmem:[%s243 + $0x9c] sm:$0xf]
        %v383 = vld [vmem:[%s243 + $0xa0] sm:$0xf]
        %v384 = vld [vmem:[%s243 + $0xa4] sm:$0xf]
        %v385 = vld [vmem:[%s243 + $0xa8] sm:$0xf]
        %v386 = vld [vmem:[%s243 + $0xac] sm:$0xf]
        %v387 = vld [vmem:[%s243 + $0xb0] sm:$0xf]
        %v388 = vld [vmem:[%s243 + $0xb4] sm:$0xf]
        %v389 = vld [vmem:[%s243 + $0xb8] sm:$0xf]
        %v390 = vld [vmem:[%s243 + $0xbc] sm:$0xf]
        %v391 = vld [vmem:[%s243 + $0xc0] sm:$0xf]
        %v392 = vld [vmem:[%s243 + $0xc4] sm:$0xf]
        %v393 = vld [vmem:[%s243 + $0xc8] sm:$0xf]
        %v394 = vld [vmem:[%s243 + $0xcc] sm:$0xf]
        %v395 = vld [vmem:[%s243 + $0xd0] sm:$0xf]
        %v396 = vld [vmem:[%s243 + $0xd4] sm:$0xf]
        %v397 = vld [vmem:[%s243 + $0xd8] sm:$0xf]
        %v398 = vld [vmem:[%s243 + $0xdc] sm:$0xf]
        %v399 = vld [vmem:[%s243 + $0xe0] sm:$0xf]
        %v400 = vld [vmem:[%s243 + $0xe4] sm:$0xf]
        %v401 = vld [vmem:[%s243 + $0xe8] sm:$0xf]
        %v402 = vld [vmem:[%s243 + $0xec] sm:$0xf]
        %v403 = vld [vmem:[%s243 + $0xf0] sm:$0xf]
        %v404 = vld [vmem:[%s243 + $0xf4] sm:$0xf]
        %v405 = vld [vmem:[%s243 + $0xf8] sm:$0xf]
        %v406 = vld [vmem:[%s243 + $0xfc] sm:$0xf]
        %v439 = vunpack.c.l.b16 %v311
        %v440 = vunpack.c.h.b16 %v311
        %v441 = vunpack.c.l.b16 %v312
        %v442 = vunpack.c.h.b16 %v312
        %v443 = vunpack.c.l.b16 %v313
        %v444 = vunpack.c.h.b16 %v313
        %v445 = vunpack.c.l.b16 %v314
        %v446 = vunpack.c.h.b16 %v314
        %v447 = vunpack.c.l.b16 %v315
        %v448 = vunpack.c.h.b16 %v315
        %v449 = vunpack.c.l.b16 %v316
        %v450 = vunpack.c.h.b16 %v316
        %v451 = vunpack.c.l.b16 %v317
        %v452 = vunpack.c.h.b16 %v317
        %v453 = vunpack.c.l.b16 %v318
        %v454 = vunpack.c.h.b16 %v318
        %v455 = vunpack.c.l.b16 %v319
        %v456 = vunpack.c.h.b16 %v319
        %v457 = vunpack.c.l.b16 %v320
        %v458 = vunpack.c.h.b16 %v320
        %v459 = vunpack.c.l.b16 %v321
        %v460 = vunpack.c.h.b16 %v321
        %v461 = vunpack.c.l.b16 %v322
        %v462 = vunpack.c.h.b16 %v322
        %v463 = vunpack.c.l.b16 %v323
        %v464 = vunpack.c.h.b16 %v323
        %v465 = vunpack.c.l.b16 %v324
        %v466 = vunpack.c.h.b16 %v324
        %v467 = vunpack.c.l.b16 %v325
        %v468 = vunpack.c.h.b16 %v325
        %v469 = vunpack.c.l.b16 %v326
        %v470 = vunpack.c.h.b16 %v326
        %v471 = vunpack.c.l.b16 %v327
        %v472 = vunpack.c.h.b16 %v327
        %v473 = vunpack.c.l.b16 %v328
        %v474 = vunpack.c.h.b16 %v328
        %v475 = vunpack.c.l.b16 %v329
        %v476 = vunpack.c.h.b16 %v329
        %v477 = vunpack.c.l.b16 %v330
        %v478 = vunpack.c.h.b16 %v330
        %v479 = vunpack.c.l.b16 %v331
        %v480 = vunpack.c.h.b16 %v331
        %v481 = vunpack.c.l.b16 %v332
        %v482 = vunpack.c.h.b16 %v332
        %v483 = vunpack.c.l.b16 %v333
        %v484 = vunpack.c.h.b16 %v333
        %v485 = vunpack.c.l.b16 %v334
        %v486 = vunpack.c.h.b16 %v334
        %v487 = vunpack.c.l.b16 %v335
        %v488 = vunpack.c.h.b16 %v335
        %v489 = vunpack.c.l.b16 %v336
        %v490 = vunpack.c.h.b16 %v336
        %v491 = vunpack.c.l.b16 %v337
        %v492 = vunpack.c.h.b16 %v337
        %v493 = vunpack.c.l.b16 %v338
        %v494 = vunpack.c.h.b16 %v338
        %v495 = vunpack.c.l.b16 %v339
        %v496 = vunpack.c.h.b16 %v339
        %v497 = vunpack.c.l.b16 %v340
        %v498 = vunpack.c.h.b16 %v340
        %v499 = vunpack.c.l.b16 %v341
        %v500 = vunpack.c.h.b16 %v341
        %v501 = vunpack.c.l.b16 %v342
        %v502 = vunpack.c.h.b16 %v342
        %v503 = vpack.c.b16 %v443, %v439
        %v504 = vpack.c.b16 %v444, %v440
        %v505 = vpack.c.b16 %v445, %v441
        %v506 = vpack.c.b16 %v446, %v442
        %v507 = vpack.c.b16 %v451, %v447
        %v508 = vpack.c.b16 %v452, %v448
        %v509 = vpack.c.b16 %v453, %v449
        %v510 = vpack.c.b16 %v454, %v450
        %v511 = vpack.c.b16 %v459, %v455
        %v512 = vpack.c.b16 %v460, %v456
        %v513 = vpack.c.b16 %v461, %v457
        %v514 = vpack.c.b16 %v462, %v458
        %v515 = vpack.c.b16 %v467, %v463
        %v516 = vpack.c.b16 %v468, %v464
        %v517 = vpack.c.b16 %v469, %v465
        %v518 = vpack.c.b16 %v470, %v466
        %v519 = vpack.c.b16 %v475, %v471
        %v520 = vpack.c.b16 %v476, %v472
        %v521 = vpack.c.b16 %v477, %v473
        %v522 = vpack.c.b16 %v478, %v474
        %v523 = vpack.c.b16 %v483, %v479
        %v524 = vpack.c.b16 %v484, %v480
        %v525 = vpack.c.b16 %v485, %v481
        %v526 = vpack.c.b16 %v486, %v482
        %v527 = vpack.c.b16 %v491, %v487
        %v528 = vpack.c.b16 %v492, %v488
        %v529 = vpack.c.b16 %v493, %v489
        %v530 = vpack.c.b16 %v494, %v490
        %v531 = vpack.c.b16 %v499, %v495
        %v532 = vpack.c.b16 %v500, %v496
        %v533 = vpack.c.b16 %v501, %v497
        %v534 = vpack.c.b16 %v502, %v498
        %v631 = vunpack.c.l.b16 %v343
        %v632 = vunpack.c.l.b16 %v344
        %v633 = vunpack.c.l.b16 %v345
        %v634 = vunpack.c.l.b16 %v346
        %v635 = vunpack.c.l.b16 %v347
        %v636 = vunpack.c.l.b16 %v348
        %v637 = vunpack.c.l.b16 %v349
        %v638 = vunpack.c.l.b16 %v350
        %v639 = vunpack.c.l.b16 %v351
        %v640 = vunpack.c.l.b16 %v352
        %v641 = vunpack.c.l.b16 %v353
        %v642 = vunpack.c.l.b16 %v354
        %v643 = vunpack.c.l.b16 %v355
        %v644 = vunpack.c.l.b16 %v356
        %v645 = vunpack.c.l.b16 %v357
        %v646 = vunpack.c.l.b16 %v358
        %v647 = vunpack.c.l.b16 %v359
        %v648 = vunpack.c.l.b16 %v360
        %v649 = vunpack.c.l.b16 %v361
        %v650 = vunpack.c.l.b16 %v362
        %v651 = vunpack.c.l.b16 %v363
        %v652 = vunpack.c.l.b16 %v364
        %v653 = vunpack.c.l.b16 %v365
        %v654 = vunpack.c.l.b16 %v366
        %v655 = vunpack.c.l.b16 %v367
        %v656 = vunpack.c.l.b16 %v368
        %v657 = vunpack.c.l.b16 %v369
        %v658 = vunpack.c.l.b16 %v370
        %v659 = vunpack.c.l.b16 %v371
        %v660 = vunpack.c.l.b16 %v372
        %v661 = vunpack.c.l.b16 %v373
        %v662 = vunpack.c.l.b16 %v374
        %v663 = vunpack.c.l.b16 %v375
        %v664 = vunpack.c.l.b16 %v376
        %v665 = vunpack.c.l.b16 %v377
        %v666 = vunpack.c.l.b16 %v378
        %v667 = vunpack.c.l.b16 %v379
        %v668 = vunpack.c.l.b16 %v380
        %v669 = vunpack.c.l.b16 %v381
        %v670 = vunpack.c.l.b16 %v382
        %v671 = vunpack.c.l.b16 %v383
        %v672 = vunpack.c.l.b16 %v384
        %v673 = vunpack.c.l.b16 %v385
        %v674 = vunpack.c.l.b16 %v386
        %v675 = vunpack.c.l.b16 %v387
        %v676 = vunpack.c.l.b16 %v388
        %v677 = vunpack.c.l.b16 %v389
        %v678 = vunpack.c.l.b16 %v390
        %v679 = vunpack.c.l.b16 %v391
        %v680 = vunpack.c.l.b16 %v392
        %v681 = vunpack.c.l.b16 %v393
        %v682 = vunpack.c.l.b16 %v394
        %v683 = vunpack.c.l.b16 %v395
        %v684 = vunpack.c.l.b16 %v396
        %v685 = vunpack.c.l.b16 %v397
        %v686 = vunpack.c.l.b16 %v398
        %v687 = vunpack.c.l.b16 %v399
        %v688 = vunpack.c.l.b16 %v400
        %v689 = vunpack.c.l.b16 %v401
        %v690 = vunpack.c.l.b16 %v402
        %v691 = vunpack.c.l.b16 %v403
        %v692 = vunpack.c.l.b16 %v404
        %v693 = vunpack.c.l.b16 %v405
        %v694 = vunpack.c.l.b16 %v406
        %v695 = vpack.c.b16 %v632, %v631
        %v696 = vpack.c.b16 %v634, %v633
        %v697 = vpack.c.b16 %v636, %v635
        %v698 = vpack.c.b16 %v638, %v637
        %v699 = vpack.c.b16 %v640, %v639
        %v700 = vpack.c.b16 %v642, %v641
        %v701 = vpack.c.b16 %v644, %v643
        %v702 = vpack.c.b16 %v646, %v645
        %v703 = vpack.c.b16 %v648, %v647
        %v704 = vpack.c.b16 %v650, %v649
        %v705 = vpack.c.b16 %v652, %v651
        %v706 = vpack.c.b16 %v654, %v653
        %v707 = vpack.c.b16 %v656, %v655
        %v708 = vpack.c.b16 %v658, %v657
        %v709 = vpack.c.b16 %v660, %v659
        %v710 = vpack.c.b16 %v662, %v661
        %v711 = vpack.c.b16 %v664, %v663
        %v712 = vpack.c.b16 %v666, %v665
        %v713 = vpack.c.b16 %v668, %v667
        %v714 = vpack.c.b16 %v670, %v669
        %v715 = vpack.c.b16 %v672, %v671
        %v716 = vpack.c.b16 %v674, %v673
        %v717 = vpack.c.b16 %v676, %v675
        %v718 = vpack.c.b16 %v678, %v677
        %v719 = vpack.c.b16 %v680, %v679
        %v720 = vpack.c.b16 %v682, %v681
        %v721 = vpack.c.b16 %v684, %v683
        %v722 = vpack.c.b16 %v686, %v685
        %v723 = vpack.c.b16 %v688, %v687
        %v724 = vpack.c.b16 %v690, %v689
        %v725 = vpack.c.b16 %v692, %v691
        %v726 = vpack.c.b16 %v694, %v693
        %759 = vmatprep.subr.bf16.mxu0 0
        %760 = vmatpush1.bf16.msra.mxu0 %v695
        %761 = vmatprep.subr.bf16.mxu0 0
        %762 = vmatpush1.bf16.msra.mxu0 %v696
        %763 = vmatprep.subr.bf16.mxu0 0
        %764 = vmatpush1.bf16.msra.mxu0 %v697
        %765 = vmatprep.subr.bf16.mxu0 0
        %766 = vmatpush1.bf16.msra.mxu0 %v698
        %767 = vmatprep.subr.bf16.mxu0 0
        %768 = vmatpush1.bf16.msra.mxu0 %v699
        %769 = vmatprep.subr.bf16.mxu0 0
        %770 = vmatpush1.bf16.msra.mxu0 %v700
        %771 = vmatprep.subr.bf16.mxu0 0
        %772 = vmatpush1.bf16.msra.mxu0 %v701
        %773 = vmatprep.subr.bf16.mxu0 0
        %774 = vmatpush1.bf16.msra.mxu0 %v702
        %775 = vmatprep.subr.bf16.mxu0 0
        %776 = vmatpush1.bf16.msra.mxu0 %v703
        %777 = vmatprep.subr.bf16.mxu0 0
        %778 = vmatpush1.bf16.msra.mxu0 %v704
        %779 = vmatprep.subr.bf16.mxu0 0
        %780 = vmatpush1.bf16.msra.mxu0 %v705
        %781 = vmatprep.subr.bf16.mxu0 0
        %782 = vmatpush1.bf16.msra.mxu0 %v706
        %783 = vmatprep.subr.bf16.mxu0 0
        %784 = vmatpush1.bf16.msra.mxu0 %v707
        %785 = vmatprep.subr.bf16.mxu0 0
        %786 = vmatpush1.bf16.msra.mxu0 %v708
        %787 = vmatprep.subr.bf16.mxu0 0
        %788 = vmatpush1.bf16.msra.mxu0 %v709
        %789 = vmatprep.subr.bf16.mxu0 0
        %790 = vmatpush1.bf16.msra.mxu0 %v710
        %791 = vmatprep.mubr.bf16.mxu0 %v504
        %792 = vmatmul.mubr.bf16.gmra.mrb[0].mxu0 %v503
        %v793 = vpop.f32.mrb[0].mxu0
        %v794 = vadd.f32 0.0, %v793
        %v795 = vpop.f32.mrb[0].mxu0
        %v796 = vpop.f32.mrb[0].mxu0
        %v797 = vadd.f32 0.0, %v796
        %v798 = vpop.f32.mrb[0].mxu0
        %799 = vmatprep.mubr.bf16.mxu0 %v508
        %800 = vmatmul.mubr.bf16.gmra.mrb[0].mxu0 %v507
        %v801 = vpop.f32.mrb[0].mxu0
        %v802 = vadd.f32 0.0, %v801
        %v803 = vpop.f32.mrb[0].mxu0
        %v804 = vpop.f32.mrb[0].mxu0
        %v805 = vadd.f32 0.0, %v804
        %v806 = vpop.f32.mrb[0].mxu0
        %807 = vmatprep.mubr.bf16.mxu0 %v512
        %808 = vmatmul.mubr.bf16.gmra.mrb[0].mxu0 %v511
        %v809 = vpop.f32.mrb[0].mxu0
        %v810 = vadd.f32 0.0, %v809
        %v811 = vpop.f32.mrb[0].mxu0
        %v812 = vpop.f32.mrb[0].mxu0
        %v813 = vadd.f32 0.0, %v812
        %v814 = vpop.f32.mrb[0].mxu0
        %815 = vmatprep.mubr.bf16.mxu0 %v516
        %816 = vmatmul.mubr.bf16.gmra.mrb[0].mxu0 %v515
        %v817 = vpop.f32.mrb[0].mxu0
        %v818 = vadd.f32 0.0, %v817
        %v819 = vpop.f32.mrb[0].mxu0
        %v820 = vpop.f32.mrb[0].mxu0
        %v821 = vadd.f32 0.0, %v820
        %v822 = vpop.f32.mrb[0].mxu0
        %823 = vmatprep.mubr.bf16.mxu0 %v520
        %824 = vmatmul.mubr.bf16.gmra.mrb[0].mxu0 %v519
        %v825 = vpop.f32.mrb[0].mxu0
        %v826 = vadd.f32 0.0, %v825
        %v827 = vpop.f32.mrb[0].mxu0
        %v828 = vpop.f32.mrb[0].mxu0
        %v829 = vadd.f32 0.0, %v828
        %v830 = vpop.f32.mrb[0].mxu0
        %831 = vmatprep.mubr.bf16.mxu0 %v524
        %832 = vmatmul.mubr.bf16.gmra.mrb[0].mxu0 %v523
        %v833 = vpop.f32.mrb[0].mxu0
        %v834 = vadd.f32 0.0, %v833
        %v835 = vpop.f32.mrb[0].mxu0
        %v836 = vpop.f32.mrb[0].mxu0
        %v837 = vadd.f32 0.0, %v836
        %v838 = vpop.f32.mrb[0].mxu0
        %839 = vmatprep.mubr.bf16.mxu0 %v528
        %840 = vmatmul.mubr.bf16.gmra.mrb[0].mxu0 %v527
        %v841 = vpop.f32.mrb[0].mxu0
        %v842 = vadd.f32 0.0, %v841
        %v843 = vpop.f32.mrb[0].mxu0
        %v844 = vpop.f32.mrb[0].mxu0
        %v845 = vadd.f32 0.0, %v844
        %v846 = vpop.f32.mrb[0].mxu0
        %847 = vmatprep.mubr.bf16.mxu0 %v532
        %848 = vmatmul.mubr.bf16.gmra.mrb[0].mxu0 %v531
        %v849 = vpop.f32.mrb[0].mxu0
        %v850 = vadd.f32 0.0, %v849
        %v851 = vpop.f32.mrb[0].mxu0
        %v852 = vpop.f32.mrb[0].mxu0
        %v853 = vadd.f32 0.0, %v852
        %v854 = vpop.f32.mrb[0].mxu0
        %855 = vdwg.mxu0
        %856 = vmatprep.subr.bf16.mxu0 0
        %857 = vmatpush1.bf16.msra.mxu0 %v711
        %858 = vmatprep.subr.bf16.mxu0 0
        %859 = vmatpush1.bf16.msra.mxu0 %v712
        %860 = vmatprep.subr.bf16.mxu0 0
        %861 = vmatpush1.bf16.msra.mxu0 %v713
        %862 = vmatprep.subr.bf16.mxu0 0
        %863 = vmatpush1.bf16.msra.mxu0 %v714
        %864 = vmatprep.subr.bf16.mxu0 0
        %865 = vmatpush1.bf16.msra.mxu0 %v715
        %866 = vmatprep.subr.bf16.mxu0 0
        %867 = vmatpush1.bf16.msra.mxu0 %v716
        %868 = vmatprep.subr.bf16.mxu0 0
        %869 = vmatpush1.bf16.msra.mxu0 %v717
        %870 = vmatprep.subr.bf16.mxu0 0
        %871 = vmatpush1.bf16.msra.mxu0 %v718
        %872 = vmatprep.subr.bf16.mxu0 0
        %873 = vmatpush1.bf16.msra.mxu0 %v719
        %874 = vmatprep.subr.bf16.mxu0 0
        %875 = vmatpush1.bf16.msra.mxu0 %v720
        %876 = vmatprep.subr.bf16.mxu0 0
        %877 = vmatpush1.bf16.msra.mxu0 %v721
        %878 = vmatprep.subr.bf16.mxu0 0
        %879 = vmatpush1.bf16.msra.mxu0 %v722
        %880 = vmatprep.subr.bf16.mxu0 0
        %881 = vmatpush1.bf16.msra.mxu0 %v723
        %882 = vmatprep.subr.bf16.mxu0 0
        %883 = vmatpush1.bf16.msra.mxu0 %v724
        %884 = vmatprep.subr.bf16.mxu0 0
        %885 = vmatpush1.bf16.msra.mxu0 %v725
        %886 = vmatprep.subr.bf16.mxu0 0
        %887 = vmatpush1.bf16.msra.mxu0 %v726
        %888 = vmatprep.mubr.bf16.mxu0 %v506
        %889 = vmatmul.mubr.bf16.gmra.mrb[0].mxu0 %v505
        %v890 = vpop.f32.mrb[0].mxu0
        %v891 = vadd.f32 %v794, %v890
        %v892 = vpop.f32.mrb[0].mxu0
        %v893 = vpop.f32.mrb[0].mxu0
        %v894 = vadd.f32 %v797, %v893
        %v895 = vpop.f32.mrb[0].mxu0
        %896 = vmatprep.mubr.bf16.mxu0 %v510
        %897 = vmatmul.mubr.bf16.gmra.mrb[0].mxu0 %v509
        %v898 = vpop.f32.mrb[0].mxu0
        %v899 = vadd.f32 %v802, %v898
        %v900 = vpop.f32.mrb[0].mxu0
        %v901 = vpop.f32.mrb[0].mxu0
        %v902 = vadd.f32 %v805, %v901
        %v903 = vpop.f32.mrb[0].mxu0
        %904 = vmatprep.mubr.bf16.mxu0 %v514
        %905 = vmatmul.mubr.bf16.gmra.mrb[0].mxu0 %v513
        %v906 = vpop.f32.mrb[0].mxu0
        %v907 = vadd.f32 %v810, %v906
        %v908 = vpop.f32.mrb[0].mxu0
        %v909 = vpop.f32.mrb[0].mxu0
        %v910 = vadd.f32 %v813, %v909
        %v911 = vpop.f32.mrb[0].mxu0
        %912 = vmatprep.mubr.bf16.mxu0 %v518
        %913 = vmatmul.mubr.bf16.gmra.mrb[0].mxu0 %v517
        %v914 = vpop.f32.mrb[0].mxu0
        %v915 = vadd.f32 %v818, %v914
        %v916 = vpop.f32.mrb[0].mxu0
        %v917 = vpop.f32.mrb[0].mxu0
        %v918 = vadd.f32 %v821, %v917
        %v919 = vpop.f32.mrb[0].mxu0
        %920 = vmatprep.mubr.bf16.mxu0 %v522
        %921 = vmatmul.mubr.bf16.gmra.mrb[0].mxu0 %v521
        %v922 = vpop.f32.mrb[0].mxu0
        %v923 = vadd.f32 %v826, %v922
        %v924 = vpop.f32.mrb[0].mxu0
        %v925 = vpop.f32.mrb[0].mxu0
        %v926 = vadd.f32 %v829, %v925
        %v927 = vpop.f32.mrb[0].mxu0
        %928 = vmatprep.mubr.bf16.mxu0 %v526
        %929 = vmatmul.mubr.bf16.gmra.mrb[0].mxu0 %v525
        %v930 = vpop.f32.mrb[0].mxu0
        %v931 = vadd.f32 %v834, %v930
        %v932 = vpop.f32.mrb[0].mxu0
        %v933 = vpop.f32.mrb[0].mxu0
        %v934 = vadd.f32 %v837, %v933
        %v935 = vpop.f32.mrb[0].mxu0
        %936 = vmatprep.mubr.bf16.mxu0 %v530
        %937 = vmatmul.mubr.bf16.gmra.mrb[0].mxu0 %v529
        %v938 = vpop.f32.mrb[0].mxu0
        %v939 = vadd.f32 %v842, %v938
        %v940 = vpop.f32.mrb[0].mxu0
        %v941 = vpop.f32.mrb[0].mxu0
        %v942 = vadd.f32 %v845, %v941
        %v943 = vpop.f32.mrb[0].mxu0
        %944 = vmatprep.mubr.bf16.mxu0 %v534
        %945 = vmatmul.mubr.bf16.gmra.mrb[0].mxu0 %v533
        %v946 = vpop.f32.mrb[0].mxu0
        %v947 = vadd.f32 %v850, %v946
        %v948 = vpop.f32.mrb[0].mxu0
        %v949 = vpop.f32.mrb[0].mxu0
        %v950 = vadd.f32 %v853, %v949
        %v951 = vpop.f32.mrb[0].mxu0
        %952 = vdwg.mxu0
        %v953 = vadd.f32 %v295, %v891
        %v954 = vadd.f32 %v296, %v894
        %v955 = vadd.f32 %v297, %v899
        %v956 = vadd.f32 %v298, %v902
        %v957 = vadd.f32 %v299, %v907
        %v958 = vadd.f32 %v300, %v910
        %v959 = vadd.f32 %v301, %v915
        %v960 = vadd.f32 %v302, %v918
        %v961 = vadd.f32 %v303, %v923
        %v962 = vadd.f32 %v304, %v926
        %v963 = vadd.f32 %v305, %v931
        %v964 = vadd.f32 %v306, %v934
        %v965 = vadd.f32 %v307, %v939
        %v966 = vadd.f32 %v308, %v942
        %v967 = vadd.f32 %v309, %v947
        %v968 = vadd.f32 %v310, %v950
        %969 = vst [vmem:[#allocation2] sm:$0xff] %v953
        %970 = vst [vmem:[#allocation2 + $0x8] sm:$0xff] %v954
        %971 = vst [vmem:[#allocation2 + $0x10] sm:$0xff] %v955
        %972 = vst [vmem:[#allocation2 + $0x18] sm:$0xff] %v956
        %973 = vst [vmem:[#allocation2 + $0x20] sm:$0xff] %v957
        %974 = vst [vmem:[#allocation2 + $0x28] sm:$0xff] %v958
        %975 = vst [vmem:[#allocation2 + $0x30] sm:$0xff] %v959
        %976 = vst [vmem:[#allocation2 + $0x38] sm:$0xff] %v960
        %977 = vst [vmem:[#allocation2 + $0x40] sm:$0xff] %v961
        %978 = vst [vmem:[#allocation2 + $0x48] sm:$0xff] %v962
        %979 = vst [vmem:[#allocation2 + $0x50] sm:$0xff] %v963
        %980 = vst [vmem:[#allocation2 + $0x58] sm:$0xff] %v964
        %981 = vst [vmem:[#allocation2 + $0x60] sm:$0xff] %v965
        %982 = vst [vmem:[#allocation2 + $0x68] sm:$0xff] %v966
        %983 = vst [vmem:[#allocation2 + $0x70] sm:$0xff] %v967
        %984 = vst [vmem:[#allocation2 + $0x78] sm:$0xff] %v968
        %p985 = scmp.eq.s32.totalorder %s28, 1
        // Predicated region
        $region49: #{discriminator_forward.6} parent=31 // pred_check
          %p986 = pneg %p985
        $region50: #{discriminator_forward.6} parent=31 // pred_check_branch
          %988 = sbr.rel (%p986) target = $region52
        $region51: #{discriminator_forward.6} parent=31 // pred_region
          %v989 = vld [vmem:[#allocation2] sm:$0xff]
          %v990 = vld [vmem:[#allocation2 + $0x8] sm:$0xff]
          %v991 = vld [vmem:[#allocation2 + $0x10] sm:$0xff]
          %v992 = vld [vmem:[#allocation2 + $0x18] sm:$0xff]
          %v993 = vld [vmem:[#allocation2 + $0x20] sm:$0xff]
          %v994 = vld [vmem:[#allocation2 + $0x28] sm:$0xff]
          %v995 = vld [vmem:[#allocation2 + $0x30] sm:$0xff]
          %v996 = vld [vmem:[#allocation2 + $0x38] sm:$0xff]
          %v997 = vld [vmem:[#allocation2 + $0x40] sm:$0xff]
          %v998 = vld [vmem:[#allocation2 + $0x48] sm:$0xff]
          %v999 = vld [vmem:[#allocation2 + $0x50] sm:$0xff]
          %v1000 = vld [vmem:[#allocation2 + $0x58] sm:$0xff]
          %v1001 = vld [vmem:[#allocation2 + $0x60] sm:$0xff]
          %v1002 = vld [vmem:[#allocation2 + $0x68] sm:$0xff]
          %v1003 = vld [vmem:[#allocation2 + $0x70] sm:$0xff]
          %v1004 = vld [vmem:[#allocation2 + $0x78] sm:$0xff]
          %v1005 = vld [vmem:[#allocation8] sm:$0x1]
          %v1007 = vlaneseq
          %v1008 = vshrl.u32 %v1007, 7
          %v1009 = vsub.s32 0, %v1008
          %v1010 = vrot.slane %v1005, %v1009
          %v1012 = vadd.f32 %v989, %v1010
          %v1013 = vadd.f32 %v990, %v1010
          %v1014 = vadd.f32 %v991, %v1010
          %v1015 = vadd.f32 %v992, %v1010
          %v1016 = vadd.f32 %v993, %v1010
          %v1017 = vadd.f32 %v994, %v1010
          %v1018 = vadd.f32 %v995, %v1010
          %v1019 = vadd.f32 %v996, %v1010
          %v1020 = vadd.f32 %v997, %v1010
          %v1021 = vadd.f32 %v998, %v1010
          %v1022 = vadd.f32 %v999, %v1010
          %v1023 = vadd.f32 %v1000, %v1010
          %v1024 = vadd.f32 %v1001, %v1010
          %v1025 = vadd.f32 %v1002, %v1010
          %v1026 = vadd.f32 %v1003, %v1010
          %v1027 = vadd.f32 %v1004, %v1010
          %vm1028 = vcmp.ge.f32.partialorder %v1012, 0.0
          %vm1029 = vcmp.ge.f32.partialorder %v1013, 0.0
          %vm1030 = vcmp.ge.f32.partialorder %v1014, 0.0
          %vm1031 = vcmp.ge.f32.partialorder %v1015, 0.0
          %vm1032 = vcmp.ge.f32.partialorder %v1016, 0.0
          %vm1033 = vcmp.ge.f32.partialorder %v1017, 0.0
          %vm1034 = vcmp.ge.f32.partialorder %v1018, 0.0
          %vm1035 = vcmp.ge.f32.partialorder %v1019, 0.0
          %vm1036 = vcmp.ge.f32.partialorder %v1020, 0.0
          %vm1037 = vcmp.ge.f32.partialorder %v1021, 0.0
          %vm1038 = vcmp.ge.f32.partialorder %v1022, 0.0
          %vm1039 = vcmp.ge.f32.partialorder %v1023, 0.0
          %vm1040 = vcmp.ge.f32.partialorder %v1024, 0.0
          %vm1041 = vcmp.ge.f32.partialorder %v1025, 0.0
          %vm1042 = vcmp.ge.f32.partialorder %v1026, 0.0
          %vm1043 = vcmp.ge.f32.partialorder %v1027, 0.0
          %v1044 = vmul.f32 %v1012, 0.2
          %v1045 = vmul.f32 %v1013, 0.2
          %v1046 = vmul.f32 %v1014, 0.2
          %v1047 = vmul.f32 %v1015, 0.2
          %v1048 = vmul.f32 %v1016, 0.2
          %v1049 = vmul.f32 %v1017, 0.2
          %v1050 = vmul.f32 %v1018, 0.2
          %v1051 = vmul.f32 %v1019, 0.2
          %v1052 = vmul.f32 %v1020, 0.2
          %v1053 = vmul.f32 %v1021, 0.2
          %v1054 = vmul.f32 %v1022, 0.2
          %v1055 = vmul.f32 %v1023, 0.2
          %v1056 = vmul.f32 %v1024, 0.2
          %v1057 = vmul.f32 %v1025, 0.2
          %v1058 = vmul.f32 %v1026, 0.2
          %v1059 = vmul.f32 %v1027, 0.2
          %v1060 = vsel %vm1028, %v1012, %v1044
          %v1061 = vsel %vm1029, %v1013, %v1045
          %v1062 = vsel %vm1030, %v1014, %v1046
          %v1063 = vsel %vm1031, %v1015, %v1047
          %v1064 = vsel %vm1032, %v1016, %v1048
          %v1065 = vsel %vm1033, %v1017, %v1049
          %v1066 = vsel %vm1034, %v1018, %v1050
          %v1067 = vsel %vm1035, %v1019, %v1051
          %v1068 = vsel %vm1036, %v1020, %v1052
          %v1069 = vsel %vm1037, %v1021, %v1053
          %v1070 = vsel %vm1038, %v1022, %v1054
          %v1071 = vsel %vm1039, %v1023, %v1055
          %v1072 = vsel %vm1040, %v1024, %v1056
          %v1073 = vsel %vm1041, %v1025, %v1057
          %v1074 = vsel %vm1042, %v1026, %v1058
          %v1075 = vsel %vm1043, %v1027, %v1059
          %1076 = vst [vmem:[#allocation9] sm:$0xff] %v1060
          %1077 = vst [vmem:[#allocation9 + $0x8] sm:$0xff] %v1061
          %1078 = vst [vmem:[#allocation9 + $0x10] sm:$0xff] %v1062
          %1079 = vst [vmem:[#allocation9 + $0x18] sm:$0xff] %v1063
          %1080 = vst [vmem:[#allocation9 + $0x20] sm:$0xff] %v1064
          %1081 = vst [vmem:[#allocation9 + $0x28] sm:$0xff] %v1065
          %1082 = vst [vmem:[#allocation9 + $0x30] sm:$0xff] %v1066
          %1083 = vst [vmem:[#allocation9 + $0x38] sm:$0xff] %v1067
          %1084 = vst [vmem:[#allocation9 + $0x40] sm:$0xff] %v1068
          %1085 = vst [vmem:[#allocation9 + $0x48] sm:$0xff] %v1069
          %1086 = vst [vmem:[#allocation9 + $0x50] sm:$0xff] %v1070
          %1087 = vst [vmem:[#allocation9 + $0x58] sm:$0xff] %v1071
          %1088 = vst [vmem:[#allocation9 + $0x60] sm:$0xff] %v1072
          %1089 = vst [vmem:[#allocation9 + $0x68] sm:$0xff] %v1073
          %1090 = vst [vmem:[#allocation9 + $0x70] sm:$0xff] %v1074
          %1091 = vst [vmem:[#allocation9 + $0x78] sm:$0xff] %v1075
        $region52: #{discriminator_forward.6} parent=31 // pred_fallthru
          _
        // Predicated region
        $region53: #{discriminator_forward.6} parent=31 // pred_check
          %p1092 = pneg %p142
        $region54: #{discriminator_forward.6} parent=31 // pred_check_branch
          %1094 = sbr.rel (%p1092) target = $region56
        $region55: #{discriminator_forward.6} parent=31 // pred_region
          %s1095 = smul.u32 16, %s26
          %s1097 = ssub.s32 2048, 2048
          %1098 = vsyncadd [#allocation5], %s1097
          %s1099 = sadd.s32 %s27, %s1095
          %s1100 = smul.addr %s1099, 128
          %s1101 = scalar_lea.hbm %s3, %s1100
          %s1102 = sshll.u32 [#allocation9], 4
          %s1103 = int_to_ptr.vmem [resolvable:$true] %s1102
          %1108 = dma.vmem_to_hbm [thread:$0]  %s1103, 2048, %s1101, [#allocation5], 128, 128, 8
        $region56: #{discriminator_forward.6} parent=31 // pred_fallthru
          _
        // Predicated region
        $region57: #{discriminator_forward.6} parent=31 // pred_check
          %p1109 = pneg %p142
        $region58: #{discriminator_forward.6} parent=31 // pred_check_branch
          %1111 = sbr.rel (%p1109) target = $region60
        $region59: #{discriminator_forward.6} parent=31 // pred_region
          %1112 = dma.done [#allocation5], 2048
        $region60: #{discriminator_forward.6} parent=31 // pred_fallthru
          _
      $region32: #{discriminator_forward.6} parent=5 // pred_fallthru
        _
      %p1113 = scmp.le.s32.totalorder 2, %s16
      // Predicated region
      $region61: #{discriminator_forward.6} parent=5 // pred_check
        %p1114 = pneg %p1113
      $region62: #{discriminator_forward.6} parent=5 // pred_check_branch
        %1116 = sbr.rel (%p1114) target = $region64
      $region63: #{discriminator_forward.6} parent=5 // pred_region
        %s1117 = ssub.s32 %s16, 2
      $region64: #{discriminator_forward.6} parent=5 // pred_fallthru
        _
    $region6: #{discriminator_forward.6} parent=1 // loop_footer
      %s20 = sadd.s32 1, %s16
    $region7: #{discriminator_forward.6} parent=1 // loop_footer_branch
      %15 = sbr.rel target = $region3
    $region8: #{discriminator_forward.6} parent=1 // loop_exit
      _
    %1118 = vsyncpa [#allocation4], 1
    %s1119 = scalar_lea.sflag [#allocation4], 1
    %1120 = vsyncpa %s1119, 1
    %1121 = vsyncpa [#allocation7], 1
    %s1122 = scalar_lea.sflag [#allocation7], 1
    %1123 = vsyncpa %s1122, 1
    %1124 = vsyncpa [#allocation5], 1
    %s1125 = scalar_lea.sflag [#allocation5], 1
    %1126 = vsyncpa %s1125, 1

// kernel: discriminator_forward.7
$region0: #{discriminator_forward.7}
  #allocation0 [shape = 'u32[]', space=smem, size = 0x4, offset = 0x4, fixed_abs, tag = 'smem constant byte address 0x4 - core index']
  #allocation1 [shape = 'u32[144,128]{1,0:T(1,128)}', space=vmem, size = 0x12000, scoped, tag = 'internal scratch']
  #allocation2 [shape = 'f32[32,256]{1,0:T(8,128)}', space=vmem, size = 0x8000, scoped, tag = 'scratch operand']
  %s0 = inlined_call_operand.hbm [shape: bf16[32,2048], index: 0, kind: input, shape index: {}]
  %s1 = inlined_call_operand.hbm [shape: bf16[2048,256], index: 1, kind: input, shape index: {}]
  %s2 = inlined_call_operand.hbm [shape: f32[1,256], index: 2, kind: input, shape index: {}]
  %s3 = inlined_call_operand.hbm [shape: f32[32,256], index: 3, kind: output, shape index: {}]
  %s4 = sld [smem:[#allocation0]]
  $region65: #{discriminator_forward.7} parent=0
    _
  %s6 = ssub.s32 1, %s4
  %s7 = scalar_select 0, %s6, %s4
  $region1: #{discriminator_forward.7} parent=0
    #allocation3 [shape = 'u8[65536]{0}', space=vmem, size = 0x10000, scoped, tag = 'input window, operand 0']
    #allocation4 [shape = 's32[2]{0}', space=sflag, size = 0x8, scoped, tag = 'scoped memory for discriminator_forward.7']
    #allocation5 [shape = 's32[2]{0}', space=sflag, size = 0x8, scoped, tag = 'scoped memory for discriminator_forward.7']
    #allocation6 [shape = 'u8[524288]{0}', space=vmem, size = 0x80000, scoped, tag = 'input window, operand 1']
    #allocation7 [shape = 's32[2]{0}', space=sflag, size = 0x8, scoped, tag = 'scoped memory for discriminator_forward.7']
    #allocation8 [shape = 'u8[1024]{0}', space=vmem, size = 0x400, scoped, tag = 'input window, operand 2, single buffered']
    #allocation9 [shape = 'u8[32768]{0}', space=vmem, size = 0x8000, scoped, tag = 'output window, operand 0, single buffered']
    %8 = vsyncpa [#allocation4], 0
    %s9 = scalar_lea.sflag [#allocation4], 1
    %10 = vsyncpa %s9, 0
    %11 = vsyncpa [#allocation7], 0
    %s12 = scalar_lea.sflag [#allocation7], 1
    %13 = vsyncpa %s12, 0
    %14 = vsyncpa [#allocation5], 0
    loop: start=0, step=1, limit=6
    $region2: #{discriminator_forward.7} parent=1 // loop_pre_header
      _
    $region3: #{discriminator_forward.7} parent=1 // loop_header
      %s16 = sphi 0, %s20
      %p17 = scmp.ge.s32.totalorder %s16, 6
      %s23 = sphi 0, %s42
      %s24 = sphi 0, %s38
      %s25 = sphi 0, %s34
      %s26 = sphi 0, %s23
      %s27 = sphi 0, %s24
      %s28 = sphi 0, %s25
      %s29 = sphi 0, %s26
      %s30 = sphi 0, %s27
      %s31 = sphi 0, %s28
      %s47 = sphi 0, %s49
      %s50 = sphi 0, %s47
      %s51 = sphi 0, %s50
      %s67 = sphi 0, %s51
      %s75 = sphi 0, %s77
      %s78 = sphi 0, %s75
      %s79 = sphi 0, %s78
      %s95 = sphi 0, %s79
      %s101 = sphi 0, %s103
      %s104 = sphi 0, %s101
      %s105 = sphi 0, %s104
      %s121 = sphi 0, %s105
      %s129 = sphi 0, %s131
      %s132 = sphi 0, %s129
      %s133 = sphi 0, %s132
      %s149 = sphi 0, %s133
    $region4: #{discriminator_forward.7} parent=1 // loop_header_branch
      %19 = sbr.rel (%p17) target = $region8
    $region5: #{discriminator_forward.7} parent=1 // loop_body
      %s21 = ssub.s32 %s16, 1
      %s22 = ssub.s32 %s16, 2
      %s32 = sadd.s32 1, %s25
      %p33 = scmp.ge.s32.totalorder %s32, 4
      %s34 = scalar_select %p33, 0, %s32
      %s35 = sadd.s32 1, %s24
      %s36 = scalar_select %p33, %s35, %s24
      %p37 = scmp.ge.s32.totalorder %s36, 1
      %s38 = scalar_select %p37, 0, %s36
      %s39 = sadd.s32 1, %s23
      %s40 = scalar_select %p37, %s39, %s23
      %p41 = scmp.ge.s32.totalorder %s40, 1
      %s42 = scalar_select %p41, 0, %s40
      %s43 = ssub.s32 %s23, %s42
      %s44 = ssub.s32 %s25, %s34
      %s45 = sor.u32 %s43, %s44
      %p46 = scmp.eq.s32.totalorder %s45, 0
      %s48 = sadd.s32 %s47, 1
      %s49 = scalar_select %p46, %s47, %s48
      %p52 = pneg %p46
      %p53 = scmp.eq.s32.totalorder %s16, 3
      %p54 = por %p52, %p53
      %p55 = scmp.ne.s32.totalorder %s47, %s50
      %p56 = scmp.eq.s32.totalorder %s16, 0
      %p57 = por %p55, %p56
      %p58 = scmp.ne.s32.totalorder %s47, %s50
      %p59 = scmp.eq.s32.totalorder %s21, 3
      %p60 = por %p58, %p59
      %p61 = scmp.ne.s32.totalorder %s50, %s51
      %p62 = scmp.eq.s32.totalorder %s21, 0
      %p63 = por %p61, %p62
      %p64 = scmp.ne.s32.totalorder %s50, %s51
      %p65 = scmp.eq.s32.totalorder %s22, 3
      %p66 = por %p64, %p65
      %p68 = scmp.ne.s32.totalorder %s51, %s67
      %p69 = scmp.eq.s32.totalorder %s22, 0
      %p70 = por %p68, %p69
      %s71 = ssub.s32 %s25, %s34
      %s72 = ssub.s32 %s24, %s38
      %s73 = sor.u32 %s71, %s72
      %p74 = scmp.eq.s32.totalorder %s73, 0
      %s76 = sadd.s32 %s75, 1
      %s77 = scalar_select %p74, %s75, %s76
      %p80 = pneg %p74
      %p81 = scmp.eq.s32.totalorder %s16, 3
      %p82 = por %p80, %p81
      %p83 = scmp.ne.s32.totalorder %s75, %s78
      %p84 = scmp.eq.s32.totalorder %s16, 0
      %p85 = por %p83, %p84
      %p86 = scmp.ne.s32.totalorder %s75, %s78
      %p87 = scmp.eq.s32.totalorder %s21, 3
      %p88 = por %p86, %p87
      %p89 = scmp.ne.s32.totalorder %s78, %s79
      %p90 = scmp.eq.s32.totalorder %s21, 0
      %p91 = por %p89, %p90
      %p92 = scmp.ne.s32.totalorder %s78, %s79
      %p93 = scmp.eq.s32.totalorder %s22, 3
      %p94 = por %p92, %p93
      %p96 = scmp.ne.s32.totalorder %s79, %s95
      %p97 = scmp.eq.s32.totalorder %s22, 0
      %p98 = por %p96, %p97
      %s99 = ssub.s32 %s24, %s38
      %p100 = scmp.eq.s32.totalorder %s99, 0
      %s102 = sadd.s32 %s101, 1
      %s103 = scalar_select %p100, %s101, %s102
      %p106 = pneg %p100
      %p107 = scmp.eq.s32.totalorder %s16, 3
      %p108 = por %p106, %p107
      %p109 = scmp.ne.s32.totalorder %s101, %s104
      %p110 = scmp.eq.s32.totalorder %s16, 0
      %p111 = por %p109, %p110
      %p112 = scmp.ne.s32.totalorder %s101, %s104
      %p113 = scmp.eq.s32.totalorder %s21, 3
      %p114 = por %p112, %p113
      %p115 = scmp.ne.s32.totalorder %s104, %s105
      %p116 = scmp.eq.s32.totalorder %s21, 0
      %p117 = por %p115, %p116
      %p118 = scmp.ne.s32.totalorder %s104, %s105
      %p119 = scmp.eq.s32.totalorder %s22, 3
      %p120 = por %p118, %p119
      %p122 = scmp.ne.s32.totalorder %s105, %s121
      %p123 = scmp.eq.s32.totalorder %s22, 0
      %p124 = por %p122, %p123
      %s125 = ssub.s32 %s23, %s42
      %s126 = ssub.s32 %s24, %s38
      %s127 = sor.u32 %s125, %s126
      %p128 = scmp.eq.s32.totalorder %s127, 0
      %s130 = sadd.s32 %s129, 1
      %s131 = scalar_select %p128, %s129, %s130
      %p134 = pneg %p128
      %p135 = scmp.eq.s32.totalorder %s16, 3
      %p136 = por %p134, %p135
      %p137 = scmp.ne.s32.totalorder %s129, %s132
      %p138 = scmp.eq.s32.totalorder %s16, 0
      %p139 = por %p137, %p138
      %p140 = scmp.ne.s32.totalorder %s129, %s132
      %p141 = scmp.eq.s32.totalorder %s21, 3
      %p142 = por %p140, %p141
      %p143 = scmp.ne.s32.totalorder %s132, %s133
      %p144 = scmp.eq.s32.totalorder %s21, 0
      %p145 = por %p143, %p144
      %p146 = scmp.ne.s32.totalorder %s132, %s133
      %p147 = scmp.eq.s32.totalorder %s22, 3
      %p148 = por %p146, %p147
      %p150 = scmp.ne.s32.totalorder %s133, %s149
      %p151 = scmp.eq.s32.totalorder %s22, 0
      %p152 = por %p150, %p151
      %p153 = scmp.le.s32.totalorder 1, %s16
      %p154 = scmp.lt.s32.totalorder %s16, 5
      %p155 = pnand %p153, %p154
      %p156 = pneg %p155
      // Predicated region
      $region9: #{discriminator_forward.7} parent=5 // pred_check
        _
      $region10: #{discriminator_forward.7} parent=5 // pred_check_branch
        %158 = sbr.rel (%p155) target = $region12
      $region11: #{discriminator_forward.7} parent=5 // pred_region
        %s159 = ssub.s32 %s16, 1
        // Predicated region
        $region13: #{discriminator_forward.7} parent=11 // pred_check
          %p160 = pneg %p117
        $region14: #{discriminator_forward.7} parent=11 // pred_check_branch
          %162 = sbr.rel (%p160) target = $region16
        $region15: #{discriminator_forward.7} parent=11 // pred_region
          %s163 = smul.u32 2, %s27
          %s165 = ssub.s32 32, 32
          %166 = vsyncadd [#allocation7], %s165
          %s167 = smul.addr %s163, 16
          %s168 = scalar_lea.hbm %s2, %s167
          %s170 = sshll.u32 [#allocation8], 4
          %s171 = int_to_ptr.vmem [resolvable:$true] %s170
          %173 = dma.hbm_to_vmem [thread:$0]  %s168, 32, %s171, [#allocation7]
        $region16: #{discriminator_forward.7} parent=11 // pred_fallthru
          _
      $region12: #{discriminator_forward.7} parent=5 // pred_fallthru
        _
      %p174 = scmp.lt.s32.totalorder %s16, 4
      // Predicated region
      $region17: #{discriminator_forward.7} parent=5 // pred_check
        %p175 = pneg %p174
      $region18: #{discriminator_forward.7} parent=5 // pred_check_branch
        %177 = sbr.rel (%p175) target = $region20
      $region19: #{discriminator_forward.7} parent=5 // pred_region
        // Predicated region
        $region21: #{discriminator_forward.7} parent=19 // pred_check
          %p178 = pneg %p57
        $region22: #{discriminator_forward.7} parent=19 // pred_check_branch
          %180 = sbr.rel (%p178) target = $region24
        $region23: #{discriminator_forward.7} parent=19 // pred_region
          %s181 = sand.u32 %s47, 1
          %s182 = scalar_lea.sflag [#allocation4], %s181
          %s183 = sand.u32 %s47, 1
          %s184 = smul.addr %s183, 64
          %s185 = scalar_lea.vmem [#allocation3], %s184
          %s186 = smul.u32 4, %s23
          %s187 = smul.u32 4, %s25
          %s189 = ssub.s32 1024, 1024
          %190 = vsyncadd %s182, %s189
          %s191 = smul.addr %s186, 16
          %s192 = sadd.s32 %s187, %s191
          %s193 = smul.addr %s192, 64
          %s194 = scalar_lea.hbm %s0, %s193
          %s195 = sshll.u32 %s185, 4
          %s196 = int_to_ptr.vmem [resolvable:$true] %s195
          %201 = dma.hbm_to_vmem [thread:$0]  %s194, 1024, %s196, %s182, 1024, 256, 16
        $region24: #{discriminator_forward.7} parent=19 // pred_fallthru
          _
        // Predicated region
        $region25: #{discriminator_forward.7} parent=19 // pred_check
          %p202 = pneg %p85
        $region26: #{discriminator_forward.7} parent=19 // pred_check_branch
          %204 = sbr.rel (%p202) target = $region28
        $region27: #{discriminator_forward.7} parent=19 // pred_region
          %s205 = sand.u32 %s16, 1
          %s206 = scalar_lea.sflag [#allocation7], %s205
          %s207 = sand.u32 %s75, 1
          %s208 = smul.addr %s207, 512
          %s209 = scalar_lea.vmem [#allocation6], %s208
          %s210 = smul.u32 64, %s25
          %s211 = smul.u32 2, %s24
          %s213 = ssub.s32 8192, 8192
          %214 = vsyncadd %s206, %s213
          %s215 = smul.addr %s210, 2
          %s216 = sadd.s32 %s211, %s215
          %s217 = smul.addr %s216, 64
          %s218 = scalar_lea.hbm %s1, %s217
          %s219 = sshll.u32 %s209, 4
          %s220 = int_to_ptr.vmem [resolvable:$true] %s219
          %225 = dma.hbm_to_vmem [thread:$0]  %s218, 8192, %s220, %s206, 128, 128, 8
        $region28: #{discriminator_forward.7} parent=19 // pred_fallthru
          _
      $region20: #{discriminator_forward.7} parent=5 // pred_fallthru
        _
      %p226 = scmp.le.s32.totalorder 1, %s16
      %p227 = scmp.lt.s32.totalorder %s16, 5
      %p228 = pnand %p226, %p227
      %p229 = pneg %p228
      // Predicated region
      $region29: #{discriminator_forward.7} parent=5 // pred_check
        _
      $region30: #{discriminator_forward.7} parent=5 // pred_check_branch
        %231 = sbr.rel (%p228) target = $region32
      $region31: #{discriminator_forward.7} parent=5 // pred_region
        %s232 = ssub.s32 %s16, 1
        %s233 = sand.u32 %s50, 1
        %s234 = scalar_lea.sflag [#allocation4], %s233
        %s235 = sand.u32 %s50, 1
        %s236 = smul.addr %s235, 64
        %s237 = scalar_lea.vmem [#allocation3], %s236
        // Predicated region
        $region33: #{discriminator_forward.7} parent=31 // pred_check
          %p238 = pneg %p63
        $region34: #{discriminator_forward.7} parent=31 // pred_check_branch
          %240 = sbr.rel (%p238) target = $region36
        $region35: #{discriminator_forward.7} parent=31 // pred_region
          %241 = dma.done %s234, 1024
        $region36: #{discriminator_forward.7} parent=31 // pred_fallthru
          _
        %s242 = sand.u32 %s21, 1
        %s243 = scalar_lea.sflag [#allocation7], %s242
        %s244 = sand.u32 %s78, 1
        %s245 = smul.addr %s244, 512
        %s246 = scalar_lea.vmem [#allocation6], %s245
        // Predicated region
        $region37: #{discriminator_forward.7} parent=31 // pred_check
          %p247 = pneg %p91
        $region38: #{discriminator_forward.7} parent=31 // pred_check_branch
          %249 = sbr.rel (%p247) target = $region40
        $region39: #{discriminator_forward.7} parent=31 // pred_region
          %250 = dma.done %s243, 8192
        $region40: #{discriminator_forward.7} parent=31 // pred_fallthru
          _
        // Predicated region
        $region41: #{discriminator_forward.7} parent=31 // pred_check
          %p251 = pneg %p117
        $region42: #{discriminator_forward.7} parent=31 // pred_check_branch
          %253 = sbr.rel (%p251) target = $region44
        $region43: #{discriminator_forward.7} parent=31 // pred_region
          %254 = dma.done [#allocation7], 32
        $region44: #{discriminator_forward.7} parent=31 // pred_fallthru
          _
        %s255 = sand.u32 %s50, 1
        %s256 = scalar_lea.sflag [#allocation4], %s255
        %s257 = sand.u32 %s50, 1
        %s258 = smul.addr %s257, 64
        %s259 = scalar_lea.vmem [#allocation3], %s258
        %p260 = pneg %p63
        %p261 = pneg %p60
        %s262 = sand.u32 %s21, 1
        %s263 = scalar_lea.sflag [#allocation7], %s262
        %s264 = sand.u32 %s78, 1
        %s265 = smul.addr %s264, 512
        %s266 = scalar_lea.vmem [#allocation6], %s265
        %p267 = pneg %p91
        %p268 = pneg %p88
        %p269 = pneg %p117
        %p270 = pneg %p114
        %p271 = pneg %p145
        %p272 = pneg %p142
        %s273 = smul.u32 4, %s26
        %s274 = smul.u32 4, %s28
        %s275 = smul.u32 64, %s28
        %s276 = smul.u32 2, %s27
        %s277 = smul.u32 2, %s27
        %s278 = smul.u32 4, %s26
        %s279 = smul.u32 2, %s27
        %p280 = scmp.eq.s32.totalorder %s28, 0
        // Predicated region
        $region45: #{discriminator_forward.7} parent=31 // pred_check
          %p281 = pneg %p280
        $region46: #{discriminator_forward.7} parent=31 // pred_check_branch
          %283 = sbr.rel (%p281) target = $region48
        $region47: #{discriminator_forward.7} parent=31 // pred_region
          %284 = vst [vmem:[#allocation2] sm:$0xff] 0.0
          %285 = vst [vmem:[#allocation2 + $0x8] sm:$0xff] 0.0
          %286 = vst [vmem:[#allocation2 + $0x10] sm:$0xff] 0.0
          %287 = vst [vmem:[#allocation2 + $0x18] sm:$0xff] 0.0
          %288 = vst [vmem:[#allocation2 + $0x20] sm:$0xff] 0.0
          %289 = vst [vmem:[#allocation2 + $0x28] sm:$0xff] 0.0
          %290 = vst [vmem:[#allocation2 + $0x30] sm:$0xff] 0.0
          %291 = vst [vmem:[#allocation2 + $0x38] sm:$0xff] 0.0
        $region48: #{discriminator_forward.7} parent=31 // pred_fallthru
          _
        %v292 = vld [vmem:[#allocation2] sm:$0xff]
        %v293 = vld [vmem:[#allocation2 + $0x8] sm:$0xff]
        %v294 = vld [vmem:[#allocation2 + $0x10] sm:$0xff]
        %v295 = vld [vmem:[#allocation2 + $0x18] sm:$0xff]
        %v296 = vld [vmem:[#allocation2 + $0x20] sm:$0xff]
        %v297 = vld [vmem:[#allocation2 + $0x28] sm:$0xff]
        %v298 = vld [vmem:[#allocation2 + $0x30] sm:$0xff]
        %v299 = vld [vmem:[#allocation2 + $0x38] sm:$0xff]
        %v300 = vld [vmem:[%s237] sm:$0xff]
        %v301 = vld [vmem:[%s237 + $0x8] sm:$0xff]
        %v302 = vld [vmem:[%s237 + $0x10] sm:$0xff]
        %v303 = vld [vmem:[%s237 + $0x18] sm:$0xff]
        %v304 = vld [vmem:[%s237 + $0x20] sm:$0xff]
        %v305 = vld [vmem:[%s237 + $0x28] sm:$0xff]
        %v306 = vld [vmem:[%s237 + $0x30] sm:$0xff]
        %v307 = vld [vmem:[%s237 + $0x38] sm:$0xff]
        %v308 = vld [vmem:[%s246] sm:$0xff]
        %v309 = vld [vmem:[%s246 + $0x8] sm:$0xff]
        %v310 = vld [vmem:[%s246 + $0x10] sm:$0xff]
        %v311 = vld [vmem:[%s246 + $0x18] sm:$0xff]
        %v312 = vld [vmem:[%s246 + $0x20] sm:$0xff]
        %v313 = vld [vmem:[%s246 + $0x28] sm:$0xff]
        %v314 = vld [vmem:[%s246 + $0x30] sm:$0xff]
        %v315 = vld [vmem:[%s246 + $0x38] sm:$0xff]
        %v316 = vld [vmem:[%s246 + $0x40] sm:$0xff]
        %v317 = vld [vmem:[%s246 + $0x48] sm:$0xff]
        %v318 = vld [vmem:[%s246 + $0x50] sm:$0xff]
        %v319 = vld [vmem:[%s246 + $0x58] sm:$0xff]
        %v320 = vld [vmem:[%s246 + $0x60] sm:$0xff]
        %v321 = vld [vmem:[%s246 + $0x68] sm:$0xff]
        %v322 = vld [vmem:[%s246 + $0x70] sm:$0xff]
        %v323 = vld [vmem:[%s246 + $0x78] sm:$0xff]
        %v324 = vld [vmem:[%s246 + $0x80] sm:$0xff]
        %v325 = vld [vmem:[%s246 + $0x88] sm:$0xff]
        %v326 = vld [vmem:[%s246 + $0x90] sm:$0xff]
        %v327 = vld [vmem:[%s246 + $0x98] sm:$0xff]
        %v328 = vld [vmem:[%s246 + $0xa0] sm:$0xff]
        %v329 = vld [vmem:[%s246 + $0xa8] sm:$0xff]
        %v330 = vld [vmem:[%s246 + $0xb0] sm:$0xff]
        %v331 = vld [vmem:[%s246 + $0xb8] sm:$0xff]
        %v332 = vld [vmem:[%s246 + $0xc0] sm:$0xff]
        %v333 = vld [vmem:[%s246 + $0xc8] sm:$0xff]
        %v334 = vld [vmem:[%s246 + $0xd0] sm:$0xff]
        %v335 = vld [vmem:[%s246 + $0xd8] sm:$0xff]
        %v336 = vld [vmem:[%s246 + $0xe0] sm:$0xff]
        %v337 = vld [vmem:[%s246 + $0xe8] sm:$0xff]
        %v338 = vld [vmem:[%s246 + $0xf0] sm:$0xff]
        %v339 = vld [vmem:[%s246 + $0xf8] sm:$0xff]
        %v340 = vld [vmem:[%s246 + $0x100] sm:$0xff]
        %v341 = vld [vmem:[%s246 + $0x108] sm:$0xff]
        %v342 = vld [vmem:[%s246 + $0x110] sm:$0xff]
        %v343 = vld [vmem:[%s246 + $0x118] sm:$0xff]
        %v344 = vld [vmem:[%s246 + $0x120] sm:$0xff]
        %v345 = vld [vmem:[%s246 + $0x128] sm:$0xff]
        %v346 = vld [vmem:[%s246 + $0x130] sm:$0xff]
        %v347 = vld [vmem:[%s246 + $0x138] sm:$0xff]
        %v348 = vld [vmem:[%s246 + $0x140] sm:$0xff]
        %v349 = vld [vmem:[%s246 + $0x148] sm:$0xff]
        %v350 = vld [vmem:[%s246 + $0x150] sm:$0xff]
        %v351 = vld [vmem:[%s246 + $0x158] sm:$0xff]
        %v352 = vld [vmem:[%s246 + $0x160] sm:$0xff]
        %v353 = vld [vmem:[%s246 + $0x168] sm:$0xff]
        %v354 = vld [vmem:[%s246 + $0x170] sm:$0xff]
        %v355 = vld [vmem:[%s246 + $0x178] sm:$0xff]
        %v356 = vld [vmem:[%s246 + $0x180] sm:$0xff]
        %v357 = vld [vmem:[%s246 + $0x188] sm:$0xff]
        %v358 = vld [vmem:[%s246 + $0x190] sm:$0xff]
        %v359 = vld [vmem:[%s246 + $0x198] sm:$0xff]
        %v360 = vld [vmem:[%s246 + $0x1a0] sm:$0xff]
        %v361 = vld [vmem:[%s246 + $0x1a8] sm:$0xff]
        %v362 = vld [vmem:[%s246 + $0x1b0] sm:$0xff]
        %v363 = vld [vmem:[%s246 + $0x1b8] sm:$0xff]
        %v364 = vld [vmem:[%s246 + $0x1c0] sm:$0xff]
        %v365 = vld [vmem:[%s246 + $0x1c8] sm:$0xff]
        %v366 = vld [vmem:[%s246 + $0x1d0] sm:$0xff]
        %v367 = vld [vmem:[%s246 + $0x1d8] sm:$0xff]
        %v368 = vld [vmem:[%s246 + $0x1e0] sm:$0xff]
        %v369 = vld [vmem:[%s246 + $0x1e8] sm:$0xff]
        %v370 = vld [vmem:[%s246 + $0x1f0] sm:$0xff]
        %v371 = vld [vmem:[%s246 + $0x1f8] sm:$0xff]
        %v380 = vunpack.c.l.b16 %v300
        %v381 = vunpack.c.h.b16 %v300
        %v382 = vunpack.c.l.b16 %v301
        %v383 = vunpack.c.h.b16 %v301
        %v384 = vunpack.c.l.b16 %v302
        %v385 = vunpack.c.h.b16 %v302
        %v386 = vunpack.c.l.b16 %v303
        %v387 = vunpack.c.h.b16 %v303
        %v388 = vunpack.c.l.b16 %v304
        %v389 = vunpack.c.h.b16 %v304
        %v390 = vunpack.c.l.b16 %v305
        %v391 = vunpack.c.h.b16 %v305
        %v392 = vunpack.c.l.b16 %v306
        %v393 = vunpack.c.h.b16 %v306
        %v394 = vunpack.c.l.b16 %v307
        %v395 = vunpack.c.h.b16 %v307
        %v396 = vpack.c.b16 %v384, %v380
        %v397 = vpack.c.b16 %v385, %v381
        %v398 = vpack.c.b16 %v386, %v382
        %v399 = vpack.c.b16 %v387, %v383
        %v400 = vpack.c.b16 %v392, %v388
        %v401 = vpack.c.b16 %v393, %v389
        %v402 = vpack.c.b16 %v394, %v390
        %v403 = vpack.c.b16 %v395, %v391
        %v476 = vunpack.c.l.b16 %v308
        %v477 = vunpack.c.h.b16 %v308
        %v478 = vunpack.c.l.b16 %v309
        %v479 = vunpack.c.h.b16 %v309
        %v480 = vunpack.c.l.b16 %v310
        %v481 = vunpack.c.h.b16 %v310
        %v482 = vunpack.c.l.b16 %v311
        %v483 = vunpack.c.h.b16 %v311
        %v484 = vunpack.c.l.b16 %v312
        %v485 = vunpack.c.h.b16 %v312
        %v486 = vunpack.c.l.b16 %v313
        %v487 = vunpack.c.h.b16 %v313
        %v488 = vunpack.c.l.b16 %v314
        %v489 = vunpack.c.h.b16 %v314
        %v490 = vunpack.c.l.b16 %v315
        %v491 = vunpack.c.h.b16 %v315
        %v492 = vunpack.c.l.b16 %v316
        %v493 = vunpack.c.h.b16 %v316
        %v494 = vunpack.c.l.b16 %v317
        %v495 = vunpack.c.h.b16 %v317
        %v496 = vunpack.c.l.b16 %v318
        %v497 = vunpack.c.h.b16 %v318
        %v498 = vunpack.c.l.b16 %v319
        %v499 = vunpack.c.h.b16 %v319
        %v500 = vunpack.c.l.b16 %v320
        %v501 = vunpack.c.h.b16 %v320
        %v502 = vunpack.c.l.b16 %v321
        %v503 = vunpack.c.h.b16 %v321
        %v504 = vunpack.c.l.b16 %v322
        %v505 = vunpack.c.h.b16 %v322
        %v506 = vunpack.c.l.b16 %v323
        %v507 = vunpack.c.h.b16 %v323
        %v508 = vunpack.c.l.b16 %v324
        %v509 = vunpack.c.h.b16 %v324
        %v510 = vunpack.c.l.b16 %v325
        %v511 = vunpack.c.h.b16 %v325
        %v512 = vunpack.c.l.b16 %v326
        %v513 = vunpack.c.h.b16 %v326
        %v514 = vunpack.c.l.b16 %v327
        %v515 = vunpack.c.h.b16 %v327
        %v516 = vunpack.c.l.b16 %v328
        %v517 = vunpack.c.h.b16 %v328
        %v518 = vunpack.c.l.b16 %v329
        %v519 = vunpack.c.h.b16 %v329
        %v520 = vunpack.c.l.b16 %v330
        %v521 = vunpack.c.h.b16 %v330
        %v522 = vunpack.c.l.b16 %v331
        %v523 = vunpack.c.h.b16 %v331
        %v524 = vunpack.c.l.b16 %v332
        %v525 = vunpack.c.h.b16 %v332
        %v526 = vunpack.c.l.b16 %v333
        %v527 = vunpack.c.h.b16 %v333
        %v528 = vunpack.c.l.b16 %v334
        %v529 = vunpack.c.h.b16 %v334
        %v530 = vunpack.c.l.b16 %v335
        %v531 = vunpack.c.h.b16 %v335
        %v532 = vunpack.c.l.b16 %v336
        %v533 = vunpack.c.h.b16 %v336
        %v534 = vunpack.c.l.b16 %v337
        %v535 = vunpack.c.h.b16 %v337
        %v536 = vunpack.c.l.b16 %v338
        %v537 = vunpack.c.h.b16 %v338
        %v538 = vunpack.c.l.b16 %v339
        %v539 = vunpack.c.h.b16 %v339
        %v540 = vunpack.c.l.b16 %v340
        %v541 = vunpack.c.h.b16 %v340
        %v542 = vunpack.c.l.b16 %v341
        %v543 = vunpack.c.h.b16 %v341
        %v544 = vunpack.c.l.b16 %v342
        %v545 = vunpack.c.h.b16 %v342
        %v546 = vunpack.c.l.b16 %v343
        %v547 = vunpack.c.h.b16 %v343
        %v548 = vunpack.c.l.b16 %v344
        %v549 = vunpack.c.h.b16 %v344
        %v550 = vunpack.c.l.b16 %v345
        %v551 = vunpack.c.h.b16 %v345
        %v552 = vunpack.c.l.b16 %v346
        %v553 = vunpack.c.h.b16 %v346
        %v554 = vunpack.c.l.b16 %v347
        %v555 = vunpack.c.h.b16 %v347
        %v556 = vunpack.c.l.b16 %v348
        %v557 = vunpack.c.h.b16 %v348
        %v558 = vunpack.c.l.b16 %v349
        %v559 = vunpack.c.h.b16 %v349
        %v560 = vunpack.c.l.b16 %v350
        %v561 = vunpack.c.h.b16 %v350
        %v562 = vunpack.c.l.b16 %v351
        %v563 = vunpack.c.h.b16 %v351
        %v564 = vunpack.c.l.b16 %v352
        %v565 = vunpack.c.h.b16 %v352
        %v566 = vunpack.c.l.b16 %v353
        %v567 = vunpack.c.h.b16 %v353
        %v568 = vunpack.c.l.b16 %v354
        %v569 = vunpack.c.h.b16 %v354
        %v570 = vunpack.c.l.b16 %v355
        %v571 = vunpack.c.h.b16 %v355
        %v572 = vunpack.c.l.b16 %v356
        %v573 = vunpack.c.h.b16 %v356
        %v574 = vunpack.c.l.b16 %v357
        %v575 = vunpack.c.h.b16 %v357
        %v576 = vunpack.c.l.b16 %v358
        %v577 = vunpack.c.h.b16 %v358
        %v578 = vunpack.c.l.b16 %v359
        %v579 = vunpack.c.h.b16 %v359
        %v580 = vunpack.c.l.b16 %v360
        %v581 = vunpack.c.h.b16 %v360
        %v582 = vunpack.c.l.b16 %v361
        %v583 = vunpack.c.h.b16 %v361
        %v584 = vunpack.c.l.b16 %v362
        %v585 = vunpack.c.h.b16 %v362
        %v586 = vunpack.c.l.b16 %v363
        %v587 = vunpack.c.h.b16 %v363
        %v588 = vunpack.c.l.b16 %v364
        %v589 = vunpack.c.h.b16 %v364
        %v590 = vunpack.c.l.b16 %v365
        %v591 = vunpack.c.h.b16 %v365
        %v592 = vunpack.c.l.b16 %v366
        %v593 = vunpack.c.h.b16 %v366
        %v594 = vunpack.c.l.b16 %v367
        %v595 = vunpack.c.h.b16 %v367
        %v596 = vunpack.c.l.b16 %v368
        %v597 = vunpack.c.h.b16 %v368
        %v598 = vunpack.c.l.b16 %v369
        %v599 = vunpack.c.h.b16 %v369
        %v600 = vunpack.c.l.b16 %v370
        %v601 = vunpack.c.h.b16 %v370
        %v602 = vunpack.c.l.b16 %v371
        %v603 = vunpack.c.h.b16 %v371
        %v604 = vpack.c.b16 %v478, %v476
        %v605 = vpack.c.b16 %v479, %v477
        %v606 = vpack.c.b16 %v482, %v480
        %v607 = vpack.c.b16 %v483, %v481
        %v608 = vpack.c.b16 %v486, %v484
        %v609 = vpack.c.b16 %v487, %v485
        %v610 = vpack.c.b16 %v490, %v488
        %v611 = vpack.c.b16 %v491, %v489
        %v612 = vpack.c.b16 %v494, %v492
        %v613 = vpack.c.b16 %v495, %v493
        %v614 = vpack.c.b16 %v498, %v496
        %v615 = vpack.c.b16 %v499, %v497
        %v616 = vpack.c.b16 %v502, %v500
        %v617 = vpack.c.b16 %v503, %v501
        %v618 = vpack.c.b16 %v506, %v504
        %v619 = vpack.c.b16 %v507, %v505
        %v620 = vpack.c.b16 %v510, %v508
        %v621 = vpack.c.b16 %v511, %v509
        %v622 = vpack.c.b16 %v514, %v512
        %v623 = vpack.c.b16 %v515, %v513
        %v624 = vpack.c.b16 %v518, %v516
        %v625 = vpack.c.b16 %v519, %v517
        %v626 = vpack.c.b16 %v522, %v520
        %v627 = vpack.c.b16 %v523, %v521
        %v628 = vpack.c.b16 %v526, %v524
        %v629 = vpack.c.b16 %v527, %v525
        %v630 = vpack.c.b16 %v530, %v528
        %v631 = vpack.c.b16 %v531, %v529
        %v632 = vpack.c.b16 %v534, %v532
        %v633 = vpack.c.b16 %v535, %v533
        %v634 = vpack.c.b16 %v538, %v536
        %v635 = vpack.c.b16 %v539, %v537
        %v636 = vpack.c.b16 %v542, %v540
        %v637 = vpack.c.b16 %v543, %v541
        %v638 = vpack.c.b16 %v546, %v544
        %v639 = vpack.c.b16 %v547, %v545
        %v640 = vpack.c.b16 %v550, %v548
        %v641 = vpack.c.b16 %v551, %v549
        %v642 = vpack.c.b16 %v554, %v552
        %v643 = vpack.c.b16 %v555, %v553
        %v644 = vpack.c.b16 %v558, %v556
        %v645 = vpack.c.b16 %v559, %v557
        %v646 = vpack.c.b16 %v562, %v560
        %v647 = vpack.c.b16 %v563, %v561
        %v648 = vpack.c.b16 %v566, %v564
        %v649 = vpack.c.b16 %v567, %v565
        %v650 = vpack.c.b16 %v570, %v568
        %v651 = vpack.c.b16 %v571, %v569
        %v652 = vpack.c.b16 %v574, %v572
        %v653 = vpack.c.b16 %v575, %v573
        %v654 = vpack.c.b16 %v578, %v576
        %v655 = vpack.c.b16 %v579, %v577
        %v656 = vpack.c.b16 %v582, %v580
        %v657 = vpack.c.b16 %v583, %v581
        %v658 = vpack.c.b16 %v586, %v584
        %v659 = vpack.c.b16 %v587, %v585
        %v660 = vpack.c.b16 %v590, %v588
        %v661 = vpack.c.b16 %v591, %v589
        %v662 = vpack.c.b16 %v594, %v592
        %v663 = vpack.c.b16 %v595, %v593
        %v664 = vpack.c.b16 %v598, %v596
        %v665 = vpack.c.b16 %v599, %v597
        %v666 = vpack.c.b16 %v602, %v600
        %v667 = vpack.c.b16 %v603, %v601
        %732 = vmatprep.subr.bf16.mxu0 %v605
        %733 = vmatpush1.bf16.msra.mxu0 %v604
        %734 = vmatprep.subr.bf16.mxu0 %v607
        %735 = vmatpush1.bf16.msra.mxu0 %v606
        %736 = vmatprep.subr.bf16.mxu0 %v609
        %737 = vmatpush1.bf16.msra.mxu0 %v608
        %738 = vmatprep.subr.bf16.mxu0 %v611
        %739 = vmatpush1.bf16.msra.mxu0 %v610
        %740 = vmatprep.subr.bf16.mxu0 %v613
        %741 = vmatpush1.bf16.msra.mxu0 %v612
        %742 = vmatprep.subr.bf16.mxu0 %v615
        %743 = vmatpush1.bf16.msra.mxu0 %v614
        %744 = vmatprep.subr.bf16.mxu0 %v617
        %745 = vmatpush1.bf16.msra.mxu0 %v616
        %746 = vmatprep.subr.bf16.mxu0 %v619
        %747 = vmatpush1.bf16.msra.mxu0 %v618
        %748 = vmatprep.subr.bf16.mxu0 %v621
        %749 = vmatpush1.bf16.msra.mxu0 %v620
        %750 = vmatprep.subr.bf16.mxu0 %v623
        %751 = vmatpush1.bf16.msra.mxu0 %v622
        %752 = vmatprep.subr.bf16.mxu0 %v625
        %753 = vmatpush1.bf16.msra.mxu0 %v624
        %754 = vmatprep.subr.bf16.mxu0 %v627
        %755 = vmatpush1.bf16.msra.mxu0 %v626
        %756 = vmatprep.subr.bf16.mxu0 %v629
        %757 = vmatpush1.bf16.msra.mxu0 %v628
        %758 = vmatprep.subr.bf16.mxu0 %v631
        %759 = vmatpush1.bf16.msra.mxu0 %v630
        %760 = vmatprep.subr.bf16.mxu0 %v633
        %761 = vmatpush1.bf16.msra.mxu0 %v632
        %762 = vmatprep.subr.bf16.mxu0 %v635
        %763 = vmatpush1.bf16.msra.mxu0 %v634
        %764 = vmatprep.mubr.bf16.mxu0 %v397
        %765 = vmatmul.mubr.bf16.gmra.mrb[0].mxu0 %v396
        %v766 = vpop.f32.mrb[0].mxu0
        %v767 = vadd.f32 0.0, %v766
        %v768 = vpop.f32.mrb[0].mxu0
        %v769 = vadd.f32 0.0, %v768
        %v770 = vpop.f32.mrb[0].mxu0
        %v771 = vadd.f32 0.0, %v770
        %v772 = vpop.f32.mrb[0].mxu0
        %v773 = vadd.f32 0.0, %v772
        %774 = vmatprep.mubr.bf16.mxu0 %v401
        %775 = vmatmul.mubr.bf16.gmra.mrb[0].mxu0 %v400
        %v776 = vpop.f32.mrb[0].mxu0
        %v777 = vadd.f32 0.0, %v776
        %v778 = vpop.f32.mrb[0].mxu0
        %v779 = vadd.f32 0.0, %v778
        %v780 = vpop.f32.mrb[0].mxu0
        %v781 = vadd.f32 0.0, %v780
        %v782 = vpop.f32.mrb[0].mxu0
        %v783 = vadd.f32 0.0, %v782
        %784 = vdwg.mxu0
        %785 = vmatprep.subr.bf16.mxu0 %v637
        %786 = vmatpush1.bf16.msra.mxu0 %v636
        %787 = vmatprep.subr.bf16.mxu0 %v639
        %788 = vmatpush1.bf16.msra.mxu0 %v638
        %789 = vmatprep.subr.bf16.mxu0 %v641
        %790 = vmatpush1.bf16.msra.mxu0 %v640
        %791 = vmatprep.subr.bf16.mxu0 %v643
        %792 = vmatpush1.bf16.msra.mxu0 %v642
        %793 = vmatprep.subr.bf16.mxu0 %v645
        %794 = vmatpush1.bf16.msra.mxu0 %v644
        %795 = vmatprep.subr.bf16.mxu0 %v647
        %796 = vmatpush1.bf16.msra.mxu0 %v646
        %797 = vmatprep.subr.bf16.mxu0 %v649
        %798 = vmatpush1.bf16.msra.mxu0 %v648
        %799 = vmatprep.subr.bf16.mxu0 %v651
        %800 = vmatpush1.bf16.msra.mxu0 %v650
        %801 = vmatprep.subr.bf16.mxu0 %v653
        %802 = vmatpush1.bf16.msra.mxu0 %v652
        %803 = vmatprep.subr.bf16.mxu0 %v655
        %804 = vmatpush1.bf16.msra.mxu0 %v654
        %805 = vmatprep.subr.bf16.mxu0 %v657
        %806 = vmatpush1.bf16.msra.mxu0 %v656
        %807 = vmatprep.subr.bf16.mxu0 %v659
        %808 = vmatpush1.bf16.msra.mxu0 %v658
        %809 = vmatprep.subr.bf16.mxu0 %v661
        %810 = vmatpush1.bf16.msra.mxu0 %v660
        %811 = vmatprep.subr.bf16.mxu0 %v663
        %812 = vmatpush1.bf16.msra.mxu0 %v662
        %813 = vmatprep.subr.bf16.mxu0 %v665
        %814 = vmatpush1.bf16.msra.mxu0 %v664
        %815 = vmatprep.subr.bf16.mxu0 %v667
        %816 = vmatpush1.bf16.msra.mxu0 %v666
        %817 = vmatprep.mubr.bf16.mxu0 %v399
        %818 = vmatmul.mubr.bf16.gmra.mrb[0].mxu0 %v398
        %v819 = vpop.f32.mrb[0].mxu0
        %v820 = vadd.f32 %v767, %v819
        %v821 = vpop.f32.mrb[0].mxu0
        %v822 = vadd.f32 %v769, %v821
        %v823 = vpop.f32.mrb[0].mxu0
        %v824 = vadd.f32 %v771, %v823
        %v825 = vpop.f32.mrb[0].mxu0
        %v826 = vadd.f32 %v773, %v825
        %827 = vmatprep.mubr.bf16.mxu0 %v403
        %828 = vmatmul.mubr.bf16.gmra.mrb[0].mxu0 %v402
        %v829 = vpop.f32.mrb[0].mxu0
        %v830 = vadd.f32 %v777, %v829
        %v831 = vpop.f32.mrb[0].mxu0
        %v832 = vadd.f32 %v779, %v831
        %v833 = vpop.f32.mrb[0].mxu0
        %v834 = vadd.f32 %v781, %v833
        %v835 = vpop.f32.mrb[0].mxu0
        %v836 = vadd.f32 %v783, %v835
        %837 = vdwg.mxu0
        %v838 = vadd.f32 %v292, %v820
        %v839 = vadd.f32 %v293, %v822
        %v840 = vadd.f32 %v294, %v824
        %v841 = vadd.f32 %v295, %v826
        %v842 = vadd.f32 %v296, %v830
        %v843 = vadd.f32 %v297, %v832
        %v844 = vadd.f32 %v298, %v834
        %v845 = vadd.f32 %v299, %v836
        %846 = vst [vmem:[#allocation2] sm:$0xff] %v838
        %847 = vst [vmem:[#allocation2 + $0x8] sm:$0xff] %v839
        %848 = vst [vmem:[#allocation2 + $0x10] sm:$0xff] %v840
        %849 = vst [vmem:[#allocation2 + $0x18] sm:$0xff] %v841
        %850 = vst [vmem:[#allocation2 + $0x20] sm:$0xff] %v842
        %851 = vst [vmem:[#allocation2 + $0x28] sm:$0xff] %v843
        %852 = vst [vmem:[#allocation2 + $0x30] sm:$0xff] %v844
        %853 = vst [vmem:[#allocation2 + $0x38] sm:$0xff] %v845
        %p854 = scmp.eq.s32.totalorder %s28, 3
        // Predicated region
        $region49: #{discriminator_forward.7} parent=31 // pred_check
          %p855 = pneg %p854
        $region50: #{discriminator_forward.7} parent=31 // pred_check_branch
          %857 = sbr.rel (%p855) target = $region52
        $region51: #{discriminator_forward.7} parent=31 // pred_region
          %v858 = vld [vmem:[#allocation2] sm:$0xff]
          %v859 = vld [vmem:[#allocation2 + $0x8] sm:$0xff]
          %v860 = vld [vmem:[#allocation2 + $0x10] sm:$0xff]
          %v861 = vld [vmem:[#allocation2 + $0x18] sm:$0xff]
          %v862 = vld [vmem:[#allocation2 + $0x20] sm:$0xff]
          %v863 = vld [vmem:[#allocation2 + $0x28] sm:$0xff]
          %v864 = vld [vmem:[#allocation2 + $0x30] sm:$0xff]
          %v865 = vld [vmem:[#allocation2 + $0x38] sm:$0xff]
          %v866 = vld [vmem:[#allocation8] sm:$0x3]
          %v868 = vlaneseq
          %v869 = vshrl.u32 %v868, 7
          %v870 = vsub.s32 0, %v869
          %v871 = vrot.slane %v866, %v870
          %v872 = vlaneseq
          %v873 = vshrl.u32 %v872, 7
          %v874 = vsub.s32 1, %v873
          %v875 = vrot.slane %v866, %v874
          %v878 = vadd.f32 %v858, %v871
          %v879 = vadd.f32 %v859, %v875
          %v880 = vadd.f32 %v860, %v871
          %v881 = vadd.f32 %v861, %v875
          %v882 = vadd.f32 %v862, %v871
          %v883 = vadd.f32 %v863, %v875
          %v884 = vadd.f32 %v864, %v871
          %v885 = vadd.f32 %v865, %v875
          %vm886 = vcmp.ge.f32.partialorder %v878, 0.0
          %vm887 = vcmp.ge.f32.partialorder %v879, 0.0
          %vm888 = vcmp.ge.f32.partialorder %v880, 0.0
          %vm889 = vcmp.ge.f32.partialorder %v881, 0.0
          %vm890 = vcmp.ge.f32.partialorder %v882, 0.0
          %vm891 = vcmp.ge.f32.partialorder %v883, 0.0
          %vm892 = vcmp.ge.f32.partialorder %v884, 0.0
          %vm893 = vcmp.ge.f32.partialorder %v885, 0.0
          %v894 = vmul.f32 %v878, 0.2
          %v895 = vmul.f32 %v879, 0.2
          %v896 = vmul.f32 %v880, 0.2
          %v897 = vmul.f32 %v881, 0.2
          %v898 = vmul.f32 %v882, 0.2
          %v899 = vmul.f32 %v883, 0.2
          %v900 = vmul.f32 %v884, 0.2
          %v901 = vmul.f32 %v885, 0.2
          %v902 = vsel %vm886, %v878, %v894
          %v903 = vsel %vm887, %v879, %v895
          %v904 = vsel %vm888, %v880, %v896
          %v905 = vsel %vm889, %v881, %v897
          %v906 = vsel %vm890, %v882, %v898
          %v907 = vsel %vm891, %v883, %v899
          %v908 = vsel %vm892, %v884, %v900
          %v909 = vsel %vm893, %v885, %v901
          %910 = vst [vmem:[#allocation9] sm:$0xff] %v902
          %911 = vst [vmem:[#allocation9 + $0x8] sm:$0xff] %v903
          %912 = vst [vmem:[#allocation9 + $0x10] sm:$0xff] %v904
          %913 = vst [vmem:[#allocation9 + $0x18] sm:$0xff] %v905
          %914 = vst [vmem:[#allocation9 + $0x20] sm:$0xff] %v906
          %915 = vst [vmem:[#allocation9 + $0x28] sm:$0xff] %v907
          %916 = vst [vmem:[#allocation9 + $0x30] sm:$0xff] %v908
          %917 = vst [vmem:[#allocation9 + $0x38] sm:$0xff] %v909
        $region52: #{discriminator_forward.7} parent=31 // pred_fallthru
          _
        // Predicated region
        $region53: #{discriminator_forward.7} parent=31 // pred_check
          %p918 = pneg %p142
        $region54: #{discriminator_forward.7} parent=31 // pred_check_branch
          %920 = sbr.rel (%p918) target = $region56
        $region55: #{discriminator_forward.7} parent=31 // pred_region
          %s921 = smul.u32 4, %s26
          %s922 = smul.u32 2, %s27
          %s924 = ssub.s32 1024, 1024
          %925 = vsyncadd [#allocation5], %s924
          %s926 = smul.addr %s921, 2
          %s927 = sadd.s32 %s922, %s926
          %s928 = smul.addr %s927, 128
          %s929 = scalar_lea.hbm %s3, %s928
          %s930 = sshll.u32 [#allocation9], 4
          %s931 = int_to_ptr.vmem [resolvable:$true] %s930
          %936 = dma.vmem_to_hbm [thread:$0]  %s931, 1024, %s929, [#allocation5], 256, 256, 16
        $region56: #{discriminator_forward.7} parent=31 // pred_fallthru
          _
        // Predicated region
        $region57: #{discriminator_forward.7} parent=31 // pred_check
          %p937 = pneg %p142
        $region58: #{discriminator_forward.7} parent=31 // pred_check_branch
          %939 = sbr.rel (%p937) target = $region60
        $region59: #{discriminator_forward.7} parent=31 // pred_region
          %940 = dma.done [#allocation5], 1024
        $region60: #{discriminator_forward.7} parent=31 // pred_fallthru
          _
      $region32: #{discriminator_forward.7} parent=5 // pred_fallthru
        _
      %p941 = scmp.le.s32.totalorder 2, %s16
      // Predicated region
      $region61: #{discriminator_forward.7} parent=5 // pred_check
        %p942 = pneg %p941
      $region62: #{discriminator_forward.7} parent=5 // pred_check_branch
        %944 = sbr.rel (%p942) target = $region64
      $region63: #{discriminator_forward.7} parent=5 // pred_region
        %s945 = ssub.s32 %s16, 2
      $region64: #{discriminator_forward.7} parent=5 // pred_fallthru
        _
    $region6: #{discriminator_forward.7} parent=1 // loop_footer
      %s20 = sadd.s32 1, %s16
    $region7: #{discriminator_forward.7} parent=1 // loop_footer_branch
      %15 = sbr.rel target = $region3
    $region8: #{discriminator_forward.7} parent=1 // loop_exit
      _
    %946 = vsyncpa [#allocation4], 1
    %s947 = scalar_lea.sflag [#allocation4], 1
    %948 = vsyncpa %s947, 1
    %949 = vsyncpa [#allocation7], 1
    %s950 = scalar_lea.sflag [#allocation7], 1
    %951 = vsyncpa %s950, 1
    %952 = vsyncpa [#allocation5], 1
    %s953 = scalar_lea.sflag [#allocation5], 1
    %954 = vsyncpa %s953, 1

// kernel: discriminator_forward.8
$region0: #{discriminator_forward.8}
  #allocation0 [shape = 'u32[]', space=smem, size = 0x4, offset = 0x4, fixed_abs, tag = 'smem constant byte address 0x4 - core index']
  #allocation1 [shape = 'u32[144,128]{1,0:T(1,128)}', space=vmem, size = 0x12000, scoped, tag = 'internal scratch']
  #allocation2 [shape = 'f32[24,256]{1,0:T(8,128)}', space=vmem, size = 0x6000, scoped, tag = 'scratch operand']
  %s0 = inlined_call_operand.hbm [shape: bf16[24,4096], index: 0, kind: input, shape index: {}]
  %s1 = inlined_call_operand.hbm [shape: bf16[4096,512], index: 1, kind: input, shape index: {}]
  %s2 = inlined_call_operand.hbm [shape: f32[1,512], index: 2, kind: input, shape index: {}]
  %s3 = inlined_call_operand.hbm [shape: f32[24,512], index: 3, kind: output, shape index: {}]
  %s4 = sld [smem:[#allocation0]]
  $region65: #{discriminator_forward.8} parent=0
    _
  %s6 = ssub.s32 1, %s4
  %s7 = scalar_select 0, %s6, %s4
  $region1: #{discriminator_forward.8} parent=0
    #allocation3 [shape = 'u8[49152]{0}', space=vmem, size = 0xc000, scoped, tag = 'input window, operand 0']
    #allocation4 [shape = 's32[2]{0}', space=sflag, size = 0x8, scoped, tag = 'scoped memory for discriminator_forward.8']
    #allocation5 [shape = 's32[2]{0}', space=sflag, size = 0x8, scoped, tag = 'scoped memory for discriminator_forward.8']
    #allocation6 [shape = 'u8[524288]{0}', space=vmem, size = 0x80000, scoped, tag = 'input window, operand 1']
    #allocation7 [shape = 's32[2]{0}', space=sflag, size = 0x8, scoped, tag = 'scoped memory for discriminator_forward.8']
    #allocation8 [shape = 'u8[2048]{0}', space=vmem, size = 0x800, scoped, tag = 'input window, operand 2']
    #allocation9 [shape = 'u8[49152]{0}', space=vmem, size = 0xc000, scoped, tag = 'output window, operand 0']
    %8 = vsyncpa [#allocation4], 0
    %s9 = scalar_lea.sflag [#allocation4], 1
    %10 = vsyncpa %s9, 0
    %11 = vsyncpa [#allocation7], 0
    %s12 = scalar_lea.sflag [#allocation7], 1
    %13 = vsyncpa %s12, 0
    %14 = vsyncpa [#allocation5], 0
    %s15 = scalar_lea.sflag [#allocation5], 1
    %16 = vsyncpa %s15, 0
    loop: start=0, step=1, limit=18
    $region2: #{discriminator_forward.8} parent=1 // loop_pre_header
      _
    $region3: #{discriminator_forward.8} parent=1 // loop_header
      %s18 = sphi 0, %s22
      %p19 = scmp.ge.s32.totalorder %s18, 18
      %s25 = sphi 0, %s44
      %s26 = sphi 0, %s40
      %s27 = sphi 0, %s36
      %s28 = sphi 0, %s25
      %s29 = sphi 0, %s26
      %s30 = sphi 0, %s27
      %s31 = sphi 0, %s28
      %s32 = sphi 0, %s29
      %s33 = sphi 0, %s30
      %s49 = sphi 0, %s51
      %s52 = sphi 0, %s49
      %s53 = sphi 0, %s52
      %s69 = sphi 0, %s53
      %s77 = sphi 0, %s79
      %s80 = sphi 0, %s77
      %s81 = sphi 0, %s80
      %s97 = sphi 0, %s81
      %s103 = sphi 0, %s105
      %s106 = sphi 0, %s103
      %s107 = sphi 0, %s106
      %s123 = sphi 0, %s107
      %s131 = sphi 0, %s133
      %s134 = sphi 0, %s131
      %s135 = sphi 0, %s134
      %s151 = sphi 0, %s135
    $region4: #{discriminator_forward.8} parent=1 // loop_header_branch
      %21 = sbr.rel (%p19) target = $region8
    $region5: #{discriminator_forward.8} parent=1 // loop_body
      %s23 = ssub.s32 %s18, 1
      %s24 = ssub.s32 %s18, 2
      %s34 = sadd.s32 1, %s27
      %p35 = scmp.ge.s32.totalorder %s34, 8
      %s36 = scalar_select %p35, 0, %s34
      %s37 = sadd.s32 1, %s26
      %s38 = scalar_select %p35, %s37, %s26
      %p39 = scmp.ge.s32.totalorder %s38, 2
      %s40 = scalar_select %p39, 0, %s38
      %s41 = sadd.s32 1, %s25
      %s42 = scalar_select %p39, %s41, %s25
      %p43 = scmp.ge.s32.totalorder %s42, 1
      %s44 = scalar_select %p43, 0, %s42
      %s45 = ssub.s32 %s25, %s44
      %s46 = ssub.s32 %s27, %s36
      %s47 = sor.u32 %s45, %s46
      %p48 = scmp.eq.s32.totalorder %s47, 0
      %s50 = sadd.s32 %s49, 1
      %s51 = scalar_select %p48, %s49, %s50
      %p54 = pneg %p48
      %p55 = scmp.eq.s32.totalorder %s18, 15
      %p56 = por %p54, %p55
      %p57 = scmp.ne.s32.totalorder %s49, %s52
      %p58 = scmp.eq.s32.totalorder %s18, 0
      %p59 = por %p57, %p58
      %p60 = scmp.ne.s32.totalorder %s49, %s52
      %p61 = scmp.eq.s32.totalorder %s23, 15
      %p62 = por %p60, %p61
      %p63 = scmp.ne.s32.totalorder %s52, %s53
      %p64 = scmp.eq.s32.totalorder %s23, 0
      %p65 = por %p63, %p64
      %p66 = scmp.ne.s32.totalorder %s52, %s53
      %p67 = scmp.eq.s32.totalorder %s24, 15
      %p68 = por %p66, %p67
      %p70 = scmp.ne.s32.totalorder %s53, %s69
      %p71 = scmp.eq.s32.totalorder %s24, 0
      %p72 = por %p70, %p71
      %s73 = ssub.s32 %s27, %s36
      %s74 = ssub.s32 %s26, %s40
      %s75 = sor.u32 %s73, %s74
      %p76 = scmp.eq.s32.totalorder %s75, 0
      %s78 = sadd.s32 %s77, 1
      %s79 = scalar_select %p76, %s77, %s78
      %p82 = pneg %p76
      %p83 = scmp.eq.s32.totalorder %s18, 15
      %p84 = por %p82, %p83
      %p85 = scmp.ne.s32.totalorder %s77, %s80
      %p86 = scmp.eq.s32.totalorder %s18, 0
      %p87 = por %p85, %p86
      %p88 = scmp.ne.s32.totalorder %s77, %s80
      %p89 = scmp.eq.s32.totalorder %s23, 15
      %p90 = por %p88, %p89
      %p91 = scmp.ne.s32.totalorder %s80, %s81
      %p92 = scmp.eq.s32.totalorder %s23, 0
      %p93 = por %p91, %p92
      %p94 = scmp.ne.s32.totalorder %s80, %s81
      %p95 = scmp.eq.s32.totalorder %s24, 15
      %p96 = por %p94, %p95
      %p98 = scmp.ne.s32.totalorder %s81, %s97
      %p99 = scmp.eq.s32.totalorder %s24, 0
      %p100 = por %p98, %p99
      %s101 = ssub.s32 %s26, %s40
      %p102 = scmp.eq.s32.totalorder %s101, 0
      %s104 = sadd.s32 %s103, 1
      %s105 = scalar_select %p102, %s103, %s104
      %p108 = pneg %p102
      %p109 = scmp.eq.s32.totalorder %s18, 15
      %p110 = por %p108, %p109
      %p111 = scmp.ne.s32.totalorder %s103, %s106
      %p112 = scmp.eq.s32.totalorder %s18, 0
      %p113 = por %p111, %p112
      %p114 = scmp.ne.s32.totalorder %s103, %s106
      %p115 = scmp.eq.s32.totalorder %s23, 15
      %p116 = por %p114, %p115
      %p117 = scmp.ne.s32.totalorder %s106, %s107
      %p118 = scmp.eq.s32.totalorder %s23, 0
      %p119 = por %p117, %p118
      %p120 = scmp.ne.s32.totalorder %s106, %s107
      %p121 = scmp.eq.s32.totalorder %s24, 15
      %p122 = por %p120, %p121
      %p124 = scmp.ne.s32.totalorder %s107, %s123
      %p125 = scmp.eq.s32.totalorder %s24, 0
      %p126 = por %p124, %p125
      %s127 = ssub.s32 %s25, %s44
      %s128 = ssub.s32 %s26, %s40
      %s129 = sor.u32 %s127, %s128
      %p130 = scmp.eq.s32.totalorder %s129, 0
      %s132 = sadd.s32 %s131, 1
      %s133 = scalar_select %p130, %s131, %s132
      %p136 = pneg %p130
      %p137 = scmp.eq.s32.totalorder %s18, 15
      %p138 = por %p136, %p137
      %p139 = scmp.ne.s32.totalorder %s131, %s134
      %p140 = scmp.eq.s32.totalorder %s18, 0
      %p141 = por %p139, %p140
      %p142 = scmp.ne.s32.totalorder %s131, %s134
      %p143 = scmp.eq.s32.totalorder %s23, 15
      %p144 = por %p142, %p143
      %p145 = scmp.ne.s32.totalorder %s134, %s135
      %p146 = scmp.eq.s32.totalorder %s23, 0
      %p147 = por %p145, %p146
      %p148 = scmp.ne.s32.totalorder %s134, %s135
      %p149 = scmp.eq.s32.totalorder %s24, 15
      %p150 = por %p148, %p149
      %p152 = scmp.ne.s32.totalorder %s135, %s151
      %p153 = scmp.eq.s32.totalorder %s24, 0
      %p154 = por %p152, %p153
      %p155 = scmp.le.s32.totalorder 1, %s18
      %p156 = scmp.lt.s32.totalorder %s18, 17
      %p157 = pnand %p155, %p156
      %p158 = pneg %p157
      // Predicated region
      $region9: #{discriminator_forward.8} parent=5 // pred_check
        _
      $region10: #{discriminator_forward.8} parent=5 // pred_check_branch
        %160 = sbr.rel (%p157) target = $region12
      $region11: #{discriminator_forward.8} parent=5 // pred_region
        %s161 = ssub.s32 %s18, 1
      $region12: #{discriminator_forward.8} parent=5 // pred_fallthru
        _
      %p162 = scmp.lt.s32.totalorder %s18, 16
      // Predicated region
      $region13: #{discriminator_forward.8} parent=5 // pred_check
        %p163 = pneg %p162
      $region14: #{discriminator_forward.8} parent=5 // pred_check_branch
        %165 = sbr.rel (%p163) target = $region16
      $region15: #{discriminator_forward.8} parent=5 // pred_region
        // Predicated region
        $region17: #{discriminator_forward.8} parent=15 // pred_check
          %p166 = pneg %p59
        $region18: #{discriminator_forward.8} parent=15 // pred_check_branch
          %168 = sbr.rel (%p166) target = $region20
        $region19: #{discriminator_forward.8} parent=15 // pred_region
          %s169 = sand.u32 %s49, 1
          %s170 = scalar_lea.sflag [#allocation4], %s169
          %s171 = sand.u32 %s49, 1
          %s172 = smul.addr %s171, 48
          %s173 = scalar_lea.vmem [#allocation3], %s172
          %s174 = smul.u32 3, %s25
          %s175 = smul.u32 4, %s27
          %s177 = ssub.s32 768, 768
          %178 = vsyncadd %s170, %s177
          %s179 = smul.addr %s174, 32
          %s180 = sadd.s32 %s175, %s179
          %s181 = smul.addr %s180, 64
          %s182 = scalar_lea.hbm %s0, %s181
          %s183 = sshll.u32 %s173, 4
          %s184 = int_to_ptr.vmem [resolvable:$true] %s183
          %189 = dma.hbm_to_vmem [thread:$0]  %s182, 768, %s184, %s170, 2048, 256, 16
        $region20: #{discriminator_forward.8} parent=15 // pred_fallthru
          _
        // Predicated region
        $region21: #{discriminator_forward.8} parent=15 // pred_check
          %p190 = pneg %p87
        $region22: #{discriminator_forward.8} parent=15 // pred_check_branch
          %192 = sbr.rel (%p190) target = $region24
        $region23: #{discriminator_forward.8} parent=15 // pred_region
          %s193 = sand.u32 %s18, 1
          %s194 = scalar_lea.sflag [#allocation7], %s193
          %s195 = sand.u32 %s77, 1
          %s196 = smul.addr %s195, 512
          %s197 = scalar_lea.vmem [#allocation6], %s196
          %s198 = smul.u32 64, %s27
          %s199 = smul.u32 2, %s26
          %s201 = ssub.s32 8192, 8192
          %202 = vsyncadd %s194, %s201
          %s203 = smul.addr %s198, 4
          %s204 = sadd.s32 %s199, %s203
          %s205 = smul.addr %s204, 64
          %s206 = scalar_lea.hbm %s1, %s205
          %s207 = sshll.u32 %s197, 4
          %s208 = int_to_ptr.vmem [resolvable:$true] %s207
          %213 = dma.hbm_to_vmem [thread:$0]  %s206, 8192, %s208, %s194, 256, 128, 8
        $region24: #{discriminator_forward.8} parent=15 // pred_fallthru
          _
        // Predicated region
        $region25: #{discriminator_forward.8} parent=15 // pred_check
          %p214 = pneg %p113
        $region26: #{discriminator_forward.8} parent=15 // pred_check_branch
          %216 = sbr.rel (%p214) target = $region28
        $region27: #{discriminator_forward.8} parent=15 // pred_region
          %s217 = sand.u32 %s18, 1
          %s218 = scalar_lea.sflag [#allocation7], %s217
          %s219 = sand.u32 %s103, 1
          %s220 = smul.addr %s219, 2
          %s221 = scalar_lea.vmem [#allocation8], %s220
          %s222 = smul.u32 2, %s26
          %s224 = ssub.s32 32, 32
          %225 = vsyncadd %s218, %s224
          %s226 = smul.addr %s222, 16
          %s227 = scalar_lea.hbm %s2, %s226
          %s229 = sshll.u32 %s221, 4
          %s230 = int_to_ptr.vmem [resolvable:$true] %s229
          %232 = dma.hbm_to_vmem [thread:$0]  %s227, 32, %s230, %s218
        $region28: #{discriminator_forward.8} parent=15 // pred_fallthru
          _
      $region16: #{discriminator_forward.8} parent=5 // pred_fallthru
        _
      %p233 = scmp.le.s32.totalorder 1, %s18
      %p234 = scmp.lt.s32.totalorder %s18, 17
      %p235 = pnand %p233, %p234
      %p236 = pneg %p235
      // Predicated region
      $region29: #{discriminator_forward.8} parent=5 // pred_check
        _
      $region30: #{discriminator_forward.8} parent=5 // pred_check_branch
        %238 = sbr.rel (%p235) target = $region32
      $region31: #{discriminator_forward.8} parent=5 // pred_region
        %s239 = ssub.s32 %s18, 1
        %s240 = sand.u32 %s52, 1
        %s241 = scalar_lea.sflag [#allocation4], %s240
        %s242 = sand.u32 %s52, 1
        %s243 = smul.addr %s242, 48
        %s244 = scalar_lea.vmem [#allocation3], %s243
        // Predicated region
        $region33: #{discriminator_forward.8} parent=31 // pred_check
          %p245 = pneg %p65
        $region34: #{discriminator_forward.8} parent=31 // pred_check_branch
          %247 = sbr.rel (%p245) target = $region36
        $region35: #{discriminator_forward.8} parent=31 // pred_region
          %248 = dma.done %s241, 768
        $region36: #{discriminator_forward.8} parent=31 // pred_fallthru
          _
        %s249 = sand.u32 %s23, 1
        %s250 = scalar_lea.sflag [#allocation7], %s249
        %s251 = sand.u32 %s80, 1
        %s252 = smul.addr %s251, 512
        %s253 = scalar_lea.vmem [#allocation6], %s252
        // Predicated region
        $region37: #{discriminator_forward.8} parent=31 // pred_check
          %p254 = pneg %p93
        $region38: #{discriminator_forward.8} parent=31 // pred_check_branch
          %256 = sbr.rel (%p254) target = $region40
        $region39: #{discriminator_forward.8} parent=31 // pred_region
          %257 = dma.done %s250, 8192
        $region40: #{discriminator_forward.8} parent=31 // pred_fallthru
          _
        %s258 = sand.u32 %s23, 1
        %s259 = scalar_lea.sflag [#allocation7], %s258
        %s260 = sand.u32 %s106, 1
        %s261 = smul.addr %s260, 2
        %s262 = scalar_lea.vmem [#allocation8], %s261
        // Predicated region
        $region41: #{discriminator_forward.8} parent=31 // pred_check
          %p263 = pneg %p119
        $region42: #{discriminator_forward.8} parent=31 // pred_check_branch
          %265 = sbr.rel (%p263) target = $region44
        $region43: #{discriminator_forward.8} parent=31 // pred_region
          %266 = dma.done %s259, 32
        $region44: #{discriminator_forward.8} parent=31 // pred_fallthru
          _
        %s267 = sand.u32 %s52, 1
        %s268 = scalar_lea.sflag [#allocation4], %s267
        %s269 = sand.u32 %s52, 1
        %s270 = smul.addr %s269, 48
        %s271 = scalar_lea.vmem [#allocation3], %s270
        %p272 = pneg %p65
        %p273 = pneg %p62
        %s274 = sand.u32 %s23, 1
        %s275 = scalar_lea.sflag [#allocation7], %s274
        %s276 = sand.u32 %s80, 1
        %s277 = smul.addr %s276, 512
        %s278 = scalar_lea.vmem [#allocation6], %s277
        %p279 = pneg %p93
        %p280 = pneg %p90
        %s281 = sand.u32 %s23, 1
        %s282 = scalar_lea.sflag [#allocation7], %s281
        %s283 = sand.u32 %s106, 1
        %s284 = smul.addr %s283, 2
        %s285 = scalar_lea.vmem [#allocation8], %s284
        %p286 = pneg %p119
        %p287 = pneg %p116
        %p288 = pneg %p147
        %p289 = pneg %p144
        %s290 = sand.u32 %s134, 1
        %s291 = scalar_lea.sflag [#allocation5], %s290
        %s292 = sand.u32 %s134, 1
        %s293 = smul.addr %s292, 48
        %s294 = scalar_lea.vmem [#allocation9], %s293
        %s295 = smul.u32 3, %s28
        %s296 = smul.u32 4, %s30
        %s297 = smul.u32 64, %s30
        %s298 = smul.u32 2, %s29
        %s299 = smul.u32 2, %s29
        %s300 = smul.u32 3, %s28
        %s301 = smul.u32 2, %s29
        %p302 = scmp.eq.s32.totalorder %s30, 0
        // Predicated region
        $region45: #{discriminator_forward.8} parent=31 // pred_check
          %p303 = pneg %p302
        $region46: #{discriminator_forward.8} parent=31 // pred_check_branch
          %305 = sbr.rel (%p303) target = $region48
        $region47: #{discriminator_forward.8} parent=31 // pred_region
          %306 = vst [vmem:[#allocation2] sm:$0xff] 0.0
          %307 = vst [vmem:[#allocation2 + $0x8] sm:$0xff] 0.0
          %308 = vst [vmem:[#allocation2 + $0x10] sm:$0xff] 0.0
          %309 = vst [vmem:[#allocation2 + $0x18] sm:$0xff] 0.0
          %310 = vst [vmem:[#allocation2 + $0x20] sm:$0xff] 0.0
          %311 = vst [vmem:[#allocation2 + $0x28] sm:$0xff] 0.0
        $region48: #{discriminator_forward.8} parent=31 // pred_fallthru
          _
        %v312 = vld [vmem:[#allocation2] sm:$0xff]
        %v313 = vld [vmem:[#allocation2 + $0x8] sm:$0xff]
        %v314 = vld [vmem:[#allocation2 + $0x10] sm:$0xff]
        %v315 = vld [vmem:[#allocation2 + $0x18] sm:$0xff]
        %v316 = vld [vmem:[#allocation2 + $0x20] sm:$0xff]
        %v317 = vld [vmem:[#allocation2 + $0x28] sm:$0xff]
        %v318 = vld [vmem:[%s244] sm:$0xff]
        %v319 = vld [vmem:[%s244 + $0x8] sm:$0xff]
        %v320 = vld [vmem:[%s244 + $0x10] sm:$0xff]
        %v321 = vld [vmem:[%s244 + $0x18] sm:$0xff]
        %v322 = vld [vmem:[%s244 + $0x20] sm:$0xff]
        %v323 = vld [vmem:[%s244 + $0x28] sm:$0xff]
        %v324 = vld [vmem:[%s253] sm:$0xff]
        %v325 = vld [vmem:[%s253 + $0x8] sm:$0xff]
        %v326 = vld [vmem:[%s253 + $0x10] sm:$0xff]
        %v327 = vld [vmem:[%s253 + $0x18] sm:$0xff]
        %v328 = vld [vmem:[%s253 + $0x20] sm:$0xff]
        %v329 = vld [vmem:[%s253 + $0x28] sm:$0xff]
        %v330 = vld [vmem:[%s253 + $0x30] sm:$0xff]
        %v331 = vld [vmem:[%s253 + $0x38] sm:$0xff]
        %v332 = vld [vmem:[%s253 + $0x40] sm:$0xff]
        %v333 = vld [vmem:[%s253 + $0x48] sm:$0xff]
        %v334 = vld [vmem:[%s253 + $0x50] sm:$0xff]
        %v335 = vld [vmem:[%s253 + $0x58] sm:$0xff]
        %v336 = vld [vmem:[%s253 + $0x60] sm:$0xff]
        %v337 = vld [vmem:[%s253 + $0x68] sm:$0xff]
        %v338 = vld [vmem:[%s253 + $0x70] sm:$0xff]
        %v339 = vld [vmem:[%s253 + $0x78] sm:$0xff]
        %v340 = vld [vmem:[%s253 + $0x80] sm:$0xff]
        %v341 = vld [vmem:[%s253 + $0x88] sm:$0xff]
        %v342 = vld [vmem:[%s253 + $0x90] sm:$0xff]
        %v343 = vld [vmem:[%s253 + $0x98] sm:$0xff]
        %v344 = vld [vmem:[%s253 + $0xa0] sm:$0xff]
        %v345 = vld [vmem:[%s253 + $0xa8] sm:$0xff]
        %v346 = vld [vmem:[%s253 + $0xb0] sm:$0xff]
        %v347 = vld [vmem:[%s253 + $0xb8] sm:$0xff]
        %v348 = vld [vmem:[%s253 + $0xc0] sm:$0xff]
        %v349 = vld [vmem:[%s253 + $0xc8] sm:$0xff]
        %v350 = vld [vmem:[%s253 + $0xd0] sm:$0xff]
        %v351 = vld [vmem:[%s253 + $0xd8] sm:$0xff]
        %v352 = vld [vmem:[%s253 + $0xe0] sm:$0xff]
        %v353 = vld [vmem:[%s253 + $0xe8] sm:$0xff]
        %v354 = vld [vmem:[%s253 + $0xf0] sm:$0xff]
        %v355 = vld [vmem:[%s253 + $0xf8] sm:$0xff]
        %v356 = vld [vmem:[%s253 + $0x100] sm:$0xff]
        %v357 = vld [vmem:[%s253 + $0x108] sm:$0xff]
        %v358 = vld [vmem:[%s253 + $0x110] sm:$0xff]
        %v359 = vld [vmem:[%s253 + $0x118] sm:$0xff]
        %v360 = vld [vmem:[%s253 + $0x120] sm:$0xff]
        %v361 = vld [vmem:[%s253 + $0x128] sm:$0xff]
        %v362 = vld [vmem:[%s253 + $0x130] sm:$0xff]
        %v363 = vld [vmem:[%s253 + $0x138] sm:$0xff]
        %v364 = vld [vmem:[%s253 + $0x140] sm:$0xff]
        %v365 = vld [vmem:[%s253 + $0x148] sm:$0xff]
        %v366 = vld [vmem:[%s253 + $0x150] sm:$0xff]
        %v367 = vld [vmem:[%s253 + $0x158] sm:$0xff]
        %v368 = vld [vmem:[%s253 + $0x160] sm:$0xff]
        %v369 = vld [vmem:[%s253 + $0x168] sm:$0xff]
        %v370 = vld [vmem:[%s253 + $0x170] sm:$0xff]
        %v371 = vld [vmem:[%s253 + $0x178] sm:$0xff]
        %v372 = vld [vmem:[%s253 + $0x180] sm:$0xff]
        %v373 = vld [vmem:[%s253 + $0x188] sm:$0xff]
        %v374 = vld [vmem:[%s253 + $0x190] sm:$0xff]
        %v375 = vld [vmem:[%s253 + $0x198] sm:$0xff]
        %v376 = vld [vmem:[%s253 + $0x1a0] sm:$0xff]
        %v377 = vld [vmem:[%s253 + $0x1a8] sm:$0xff]
        %v378 = vld [vmem:[%s253 + $0x1b0] sm:$0xff]
        %v379 = vld [vmem:[%s253 + $0x1b8] sm:$0xff]
        %v380 = vld [vmem:[%s253 + $0x1c0] sm:$0xff]
        %v381 = vld [vmem:[%s253 + $0x1c8] sm:$0xff]
        %v382 = vld [vmem:[%s253 + $0x1d0] sm:$0xff]
        %v383 = vld [vmem:[%s253 + $0x1d8] sm:$0xff]
        %v384 = vld [vmem:[%s253 + $0x1e0] sm:$0xff]
        %v385 = vld [vmem:[%s253 + $0x1e8] sm:$0xff]
        %v386 = vld [vmem:[%s253 + $0x1f0] sm:$0xff]
        %v387 = vld [vmem:[%s253 + $0x1f8] sm:$0xff]
        %v394 = vunpack.c.l.b16 %v318
        %v395 = vunpack.c.h.b16 %v318
        %v396 = vunpack.c.l.b16 %v319
        %v397 = vunpack.c.h.b16 %v319
        %v398 = vunpack.c.l.b16 %v320
        %v399 = vunpack.c.h.b16 %v320
        %v400 = vunpack.c.l.b16 %v321
        %v401 = vunpack.c.h.b16 %v321
        %v402 = vunpack.c.l.b16 %v322
        %v403 = vunpack.c.h.b16 %v322
        %v404 = vunpack.c.l.b16 %v323
        %v405 = vunpack.c.h.b16 %v323
        %v406 = vpack.c.b16 %v398, %v394
        %v407 = vpack.c.b16 %v399, %v395
        %v408 = vpack.c.b16 %v400, %v396
        %v409 = vpack.c.b16 %v401, %v397
        %v410 = vpack.c.b16 %v402, %v402
        %v411 = vpack.c.b16 %v403, %v403
        %v412 = vpack.c.b16 %v404, %v404
        %v413 = vpack.c.b16 %v405, %v405
        %v486 = vunpack.c.l.b16 %v324
        %v487 = vunpack.c.h.b16 %v324
        %v488 = vunpack.c.l.b16 %v325
        %v489 = vunpack.c.h.b16 %v325
        %v490 = vunpack.c.l.b16 %v326
        %v491 = vunpack.c.h.b16 %v326
        %v492 = vunpack.c.l.b16 %v327
        %v493 = vunpack.c.h.b16 %v327
        %v494 = vunpack.c.l.b16 %v328
        %v495 = vunpack.c.h.b16 %v328
        %v496 = vunpack.c.l.b16 %v329
        %v497 = vunpack.c.h.b16 %v329
        %v498 = vunpack.c.l.b16 %v330
        %v499 = vunpack.c.h.b16 %v330
        %v500 = vunpack.c.l.b16 %v331
        %v501 = vunpack.c.h.b16 %v331
        %v502 = vunpack.c.l.b16 %v332
        %v503 = vunpack.c.h.b16 %v332
        %v504 = vunpack.c.l.b16 %v333
        %v505 = vunpack.c.h.b16 %v333
        %v506 = vunpack.c.l.b16 %v334
        %v507 = vunpack.c.h.b16 %v334
        %v508 = vunpack.c.l.b16 %v335
        %v509 = vunpack.c.h.b16 %v335
        %v510 = vunpack.c.l.b16 %v336
        %v511 = vunpack.c.h.b16 %v336
        %v512 = vunpack.c.l.b16 %v337
        %v513 = vunpack.c.h.b16 %v337
        %v514 = vunpack.c.l.b16 %v338
        %v515 = vunpack.c.h.b16 %v338
        %v516 = vunpack.c.l.b16 %v339
        %v517 = vunpack.c.h.b16 %v339
        %v518 = vunpack.c.l.b16 %v340
        %v519 = vunpack.c.h.b16 %v340
        %v520 = vunpack.c.l.b16 %v341
        %v521 = vunpack.c.h.b16 %v341
        %v522 = vunpack.c.l.b16 %v342
        %v523 = vunpack.c.h.b16 %v342
        %v524 = vunpack.c.l.b16 %v343
        %v525 = vunpack.c.h.b16 %v343
        %v526 = vunpack.c.l.b16 %v344
        %v527 = vunpack.c.h.b16 %v344
        %v528 = vunpack.c.l.b16 %v345
        %v529 = vunpack.c.h.b16 %v345
        %v530 = vunpack.c.l.b16 %v346
        %v531 = vunpack.c.h.b16 %v346
        %v532 = vunpack.c.l.b16 %v347
        %v533 = vunpack.c.h.b16 %v347
        %v534 = vunpack.c.l.b16 %v348
        %v535 = vunpack.c.h.b16 %v348
        %v536 = vunpack.c.l.b16 %v349
        %v537 = vunpack.c.h.b16 %v349
        %v538 = vunpack.c.l.b16 %v350
        %v539 = vunpack.c.h.b16 %v350
        %v540 = vunpack.c.l.b16 %v351
        %v541 = vunpack.c.h.b16 %v351
        %v542 = vunpack.c.l.b16 %v352
        %v543 = vunpack.c.h.b16 %v352
        %v544 = vunpack.c.l.b16 %v353
        %v545 = vunpack.c.h.b16 %v353
        %v546 = vunpack.c.l.b16 %v354
        %v547 = vunpack.c.h.b16 %v354
        %v548 = vunpack.c.l.b16 %v355
        %v549 = vunpack.c.h.b16 %v355
        %v550 = vunpack.c.l.b16 %v356
        %v551 = vunpack.c.h.b16 %v356
        %v552 = vunpack.c.l.b16 %v357
        %v553 = vunpack.c.h.b16 %v357
        %v554 = vunpack.c.l.b16 %v358
        %v555 = vunpack.c.h.b16 %v358
        %v556 = vunpack.c.l.b16 %v359
        %v557 = vunpack.c.h.b16 %v359
        %v558 = vunpack.c.l.b16 %v360
        %v559 = vunpack.c.h.b16 %v360
        %v560 = vunpack.c.l.b16 %v361
        %v561 = vunpack.c.h.b16 %v361
        %v562 = vunpack.c.l.b16 %v362
        %v563 = vunpack.c.h.b16 %v362
        %v564 = vunpack.c.l.b16 %v363
        %v565 = vunpack.c.h.b16 %v363
        %v566 = vunpack.c.l.b16 %v364
        %v567 = vunpack.c.h.b16 %v364
        %v568 = vunpack.c.l.b16 %v365
        %v569 = vunpack.c.h.b16 %v365
        %v570 = vunpack.c.l.b16 %v366
        %v571 = vunpack.c.h.b16 %v366
        %v572 = vunpack.c.l.b16 %v367
        %v573 = vunpack.c.h.b16 %v367
        %v574 = vunpack.c.l.b16 %v368
        %v575 = vunpack.c.h.b16 %v368
        %v576 = vunpack.c.l.b16 %v369
        %v577 = vunpack.c.h.b16 %v369
        %v578 = vunpack.c.l.b16 %v370
        %v579 = vunpack.c.h.b16 %v370
        %v580 = vunpack.c.l.b16 %v371
        %v581 = vunpack.c.h.b16 %v371
        %v582 = vunpack.c.l.b16 %v372
        %v583 = vunpack.c.h.b16 %v372
        %v584 = vunpack.c.l.b16 %v373
        %v585 = vunpack.c.h.b16 %v373
        %v586 = vunpack.c.l.b16 %v374
        %v587 = vunpack.c.h.b16 %v374
        %v588 = vunpack.c.l.b16 %v375
        %v589 = vunpack.c.h.b16 %v375
        %v590 = vunpack.c.l.b16 %v376
        %v591 = vunpack.c.h.b16 %v376
        %v592 = vunpack.c.l.b16 %v377
        %v593 = vunpack.c.h.b16 %v377
        %v594 = vunpack.c.l.b16 %v378
        %v595 = vunpack.c.h.b16 %v378
        %v596 = vunpack.c.l.b16 %v379
        %v597 = vunpack.c.h.b16 %v379
        %v598 = vunpack.c.l.b16 %v380
        %v599 = vunpack.c.h.b16 %v380
        %v600 = vunpack.c.l.b16 %v381
        %v601 = vunpack.c.h.b16 %v381
        %v602 = vunpack.c.l.b16 %v382
        %v603 = vunpack.c.h.b16 %v382
        %v604 = vunpack.c.l.b16 %v383
        %v605 = vunpack.c.h.b16 %v383
        %v606 = vunpack.c.l.b16 %v384
        %v607 = vunpack.c.h.b16 %v384
        %v608 = vunpack.c.l.b16 %v385
        %v609 = vunpack.c.h.b16 %v385
        %v610 = vunpack.c.l.b16 %v386
        %v611 = vunpack.c.h.b16 %v386
        %v612 = vunpack.c.l.b16 %v387
        %v613 = vunpack.c.h.b16 %v387
        %v614 = vpack.c.b16 %v488, %v486
        %v615 = vpack.c.b16 %v489, %v487
        %v616 = vpack.c.b16 %v492, %v490
        %v617 = vpack.c.b16 %v493, %v491
        %v618 = vpack.c.b16 %v496, %v494
        %v619 = vpack.c.b16 %v497, %v495
        %v620 = vpack.c.b16 %v500, %v498
        %v621 = vpack.c.b16 %v501, %v499
        %v622 = vpack.c.b16 %v504, %v502
        %v623 = vpack.c.b16 %v505, %v503
        %v624 = vpack.c.b16 %v508, %v506
        %v625 = vpack.c.b16 %v509, %v507
        %v626 = vpack.c.b16 %v512, %v510
        %v627 = vpack.c.b16 %v513, %v511
        %v628 = vpack.c.b16 %v516, %v514
        %v629 = vpack.c.b16 %v517, %v515
        %v630 = vpack.c.b16 %v520, %v518
        %v631 = vpack.c.b16 %v521, %v519
        %v632 = vpack.c.b16 %v524, %v522
        %v633 = vpack.c.b16 %v525, %v523
        %v634 = vpack.c.b16 %v528, %v526
        %v635 = vpack.c.b16 %v529, %v527
        %v636 = vpack.c.b16 %v532, %v530
        %v637 = vpack.c.b16 %v533, %v531
        %v638 = vpack.c.b16 %v536, %v534
        %v639 = vpack.c.b16 %v537, %v535
        %v640 = vpack.c.b16 %v540, %v538
        %v641 = vpack.c.b16 %v541, %v539
        %v642 = vpack.c.b16 %v544, %v542
        %v643 = vpack.c.b16 %v545, %v543
        %v644 = vpack.c.b16 %v548, %v546
        %v645 = vpack.c.b16 %v549, %v547
        %v646 = vpack.c.b16 %v552, %v550
        %v647 = vpack.c.b16 %v553, %v551
        %v648 = vpack.c.b16 %v556, %v554
        %v649 = vpack.c.b16 %v557, %v555
        %v650 = vpack.c.b16 %v560, %v558
        %v651 = vpack.c.b16 %v561, %v559
        %v652 = vpack.c.b16 %v564, %v562
        %v653 = vpack.c.b16 %v565, %v563
        %v654 = vpack.c.b16 %v568, %v566
        %v655 = vpack.c.b16 %v569, %v567
        %v656 = vpack.c.b16 %v572, %v570
        %v657 = vpack.c.b16 %v573, %v571
        %v658 = vpack.c.b16 %v576, %v574
        %v659 = vpack.c.b16 %v577, %v575
        %v660 = vpack.c.b16 %v580, %v578
        %v661 = vpack.c.b16 %v581, %v579
        %v662 = vpack.c.b16 %v584, %v582
        %v663 = vpack.c.b16 %v585, %v583
        %v664 = vpack.c.b16 %v588, %v586
        %v665 = vpack.c.b16 %v589, %v587
        %v666 = vpack.c.b16 %v592, %v590
        %v667 = vpack.c.b16 %v593, %v591
        %v668 = vpack.c.b16 %v596, %v594
        %v669 = vpack.c.b16 %v597, %v595
        %v670 = vpack.c.b16 %v600, %v598
        %v671 = vpack.c.b16 %v601, %v599
        %v672 = vpack.c.b16 %v604, %v602
        %v673 = vpack.c.b16 %v605, %v603
        %v674 = vpack.c.b16 %v608, %v606
        %v675 = vpack.c.b16 %v609, %v607
        %v676 = vpack.c.b16 %v612, %v610
        %v677 = vpack.c.b16 %v613, %v611
        %742 = vmatprep.subr.bf16.mxu0 %v615
        %743 = vmatpush1.bf16.msra.mxu0 %v614
        %744 = vmatprep.subr.bf16.mxu0 %v617
        %745 = vmatpush1.bf16.msra.mxu0 %v616
        %746 = vmatprep.subr.bf16.mxu0 %v619
        %747 = vmatpush1.bf16.msra.mxu0 %v618
        %748 = vmatprep.subr.bf16.mxu0 %v621
        %749 = vmatpush1.bf16.msra.mxu0 %v620
        %750 = vmatprep.subr.bf16.mxu0 %v623
        %751 = vmatpush1.bf16.msra.mxu0 %v622
        %752 = vmatprep.subr.bf16.mxu0 %v625
        %753 = vmatpush1.bf16.msra.mxu0 %v624
        %754 = vmatprep.subr.bf16.mxu0 %v627
        %755 = vmatpush1.bf16.msra.mxu0 %v626
        %756 = vmatprep.subr.bf16.mxu0 %v629
        %757 = vmatpush1.bf16.msra.mxu0 %v628
        %758 = vmatprep.subr.bf16.mxu0 %v631
        %759 = vmatpush1.bf16.msra.mxu0 %v630
        %760 = vmatprep.subr.bf16.mxu0 %v633
        %761 = vmatpush1.bf16.msra.mxu0 %v632
        %762 = vmatprep.subr.bf16.mxu0 %v635
        %763 = vmatpush1.bf16.msra.mxu0 %v634
        %764 = vmatprep.subr.bf16.mxu0 %v637
        %765 = vmatpush1.bf16.msra.mxu0 %v636
        %766 = vmatprep.subr.bf16.mxu0 %v639
        %767 = vmatpush1.bf16.msra.mxu0 %v638
        %768 = vmatprep.subr.bf16.mxu0 %v641
        %769 = vmatpush1.bf16.msra.mxu0 %v640
        %770 = vmatprep.subr.bf16.mxu0 %v643
        %771 = vmatpush1.bf16.msra.mxu0 %v642
        %772 = vmatprep.subr.bf16.mxu0 %v645
        %773 = vmatpush1.bf16.msra.mxu0 %v644
        %774 = vmatprep.mubr.bf16.mxu0 %v407
        %775 = vmatmul.mubr.bf16.gmra.mrb[0].mxu0 %v406
        %v776 = vpop.f32.mrb[0].mxu0
        %v777 = vadd.f32 0.0, %v776
        %v778 = vpop.f32.mrb[0].mxu0
        %v779 = vadd.f32 0.0, %v778
        %v780 = vpop.f32.mrb[0].mxu0
        %v781 = vadd.f32 0.0, %v780
        %v782 = vpop.f32.mrb[0].mxu0
        %v783 = vadd.f32 0.0, %v782
        %784 = vmatprep.mubr.bf16.mxu0 %v411
        %785 = vmatmul.mubr.bf16.gmra.mrb[0].mxu0 %v410
        %v786 = vpop.f32.mrb[0].mxu0
        %v787 = vadd.f32 0.0, %v786
        %v788 = vpop.f32.mrb[0].mxu0
        %v789 = vadd.f32 0.0, %v788
        %v790 = vpop.f32.mrb[0].mxu0
        %v791 = vpop.f32.mrb[0].mxu0
        %792 = vdwg.mxu0
        %793 = vmatprep.subr.bf16.mxu0 %v647
        %794 = vmatpush1.bf16.msra.mxu0 %v646
        %795 = vmatprep.subr.bf16.mxu0 %v649
        %796 = vmatpush1.bf16.msra.mxu0 %v648
        %797 = vmatprep.subr.bf16.mxu0 %v651
        %798 = vmatpush1.bf16.msra.mxu0 %v650
        %799 = vmatprep.subr.bf16.mxu0 %v653
        %800 = vmatpush1.bf16.msra.mxu0 %v652
        %801 = vmatprep.subr.bf16.mxu0 %v655
        %802 = vmatpush1.bf16.msra.mxu0 %v654
        %803 = vmatprep.subr.bf16.mxu0 %v657
        %804 = vmatpush1.bf16.msra.mxu0 %v656
        %805 = vmatprep.subr.bf16.mxu0 %v659
        %806 = vmatpush1.bf16.msra.mxu0 %v658
        %807 = vmatprep.subr.bf16.mxu0 %v661
        %808 = vmatpush1.bf16.msra.mxu0 %v660
        %809 = vmatprep.subr.bf16.mxu0 %v663
        %810 = vmatpush1.bf16.msra.mxu0 %v662
        %811 = vmatprep.subr.bf16.mxu0 %v665
        %812 = vmatpush1.bf16.msra.mxu0 %v664
        %813 = vmatprep.subr.bf16.mxu0 %v667
        %814 = vmatpush1.bf16.msra.mxu0 %v666
        %815 = vmatprep.subr.bf16.mxu0 %v669
        %816 = vmatpush1.bf16.msra.mxu0 %v668
        %817 = vmatprep.subr.bf16.mxu0 %v671
        %818 = vmatpush1.bf16.msra.mxu0 %v670
        %819 = vmatprep.subr.bf16.mxu0 %v673
        %820 = vmatpush1.bf16.msra.mxu0 %v672
        %821 = vmatprep.subr.bf16.mxu0 %v675
        %822 = vmatpush1.bf16.msra.mxu0 %v674
        %823 = vmatprep.subr.bf16.mxu0 %v677
        %824 = vmatpush1.bf16.msra.mxu0 %v676
        %825 = vmatprep.mubr.bf16.mxu0 %v409
        %826 = vmatmul.mubr.bf16.gmra.mrb[0].mxu0 %v408
        %v827 = vpop.f32.mrb[0].mxu0
        %v828 = vadd.f32 %v777, %v827
        %v829 = vpop.f32.mrb[0].mxu0
        %v830 = vadd.f32 %v779, %v829
        %v831 = vpop.f32.mrb[0].mxu0
        %v832 = vadd.f32 %v781, %v831
        %v833 = vpop.f32.mrb[0].mxu0
        %v834 = vadd.f32 %v783, %v833
        %835 = vmatprep.mubr.bf16.mxu0 %v413
        %836 = vmatmul.mubr.bf16.gmra.mrb[0].mxu0 %v412
        %v837 = vpop.f32.mrb[0].mxu0
        %v838 = vadd.f32 %v787, %v837
        %v839 = vpop.f32.mrb[0].mxu0
        %v840 = vadd.f32 %v789, %v839
        %v841 = vpop.f32.mrb[0].mxu0
        %v842 = vpop.f32.mrb[0].mxu0
        %843 = vdwg.mxu0
        %v844 = vadd.f32 %v312, %v828
        %v845 = vadd.f32 %v313, %v830
        %v846 = vadd.f32 %v314, %v832
        %v847 = vadd.f32 %v315, %v834
        %v848 = vadd.f32 %v316, %v838
        %v849 = vadd.f32 %v317, %v840
        %850 = vst [vmem:[#allocation2] sm:$0xff] %v844
        %851 = vst [vmem:[#allocation2 + $0x8] sm:$0xff] %v845
        %852 = vst [vmem:[#allocation2 + $0x10] sm:$0xff] %v846
        %853 = vst [vmem:[#allocation2 + $0x18] sm:$0xff] %v847
        %854 = vst [vmem:[#allocation2 + $0x20] sm:$0xff] %v848
        %855 = vst [vmem:[#allocation2 + $0x28] sm:$0xff] %v849
        %p856 = scmp.eq.s32.totalorder %s30, 7
        // Predicated region
        $region49: #{discriminator_forward.8} parent=31 // pred_check
          %p857 = pneg %p856
        $region50: #{discriminator_forward.8} parent=31 // pred_check_branch
          %859 = sbr.rel (%p857) target = $region52
        $region51: #{discriminator_forward.8} parent=31 // pred_region
          %v860 = vld [vmem:[#allocation2] sm:$0xff]
          %v861 = vld [vmem:[#allocation2 + $0x8] sm:$0xff]
          %v862 = vld [vmem:[#allocation2 + $0x10] sm:$0xff]
          %v863 = vld [vmem:[#allocation2 + $0x18] sm:$0xff]
          %v864 = vld [vmem:[#allocation2 + $0x20] sm:$0xff]
          %v865 = vld [vmem:[#allocation2 + $0x28] sm:$0xff]
          %v866 = vld [vmem:[%s262] sm:$0x3]
          %v868 = vlaneseq
          %v869 = vshrl.u32 %v868, 7
          %v870 = vsub.s32 0, %v869
          %v871 = vrot.slane %v866, %v870
          %v872 = vlaneseq
          %v873 = vshrl.u32 %v872, 7
          %v874 = vsub.s32 1, %v873
          %v875 = vrot.slane %v866, %v874
          %v878 = vadd.f32 %v860, %v871
          %v879 = vadd.f32 %v861, %v875
          %v880 = vadd.f32 %v862, %v871
          %v881 = vadd.f32 %v863, %v875
          %v882 = vadd.f32 %v864, %v871
          %v883 = vadd.f32 %v865, %v875
          %vm884 = vcmp.ge.f32.partialorder %v878, 0.0
          %vm885 = vcmp.ge.f32.partialorder %v879, 0.0
          %vm886 = vcmp.ge.f32.partialorder %v880, 0.0
          %vm887 = vcmp.ge.f32.partialorder %v881, 0.0
          %vm888 = vcmp.ge.f32.partialorder %v882, 0.0
          %vm889 = vcmp.ge.f32.partialorder %v883, 0.0
          %v890 = vmul.f32 %v878, 0.2
          %v891 = vmul.f32 %v879, 0.2
          %v892 = vmul.f32 %v880, 0.2
          %v893 = vmul.f32 %v881, 0.2
          %v894 = vmul.f32 %v882, 0.2
          %v895 = vmul.f32 %v883, 0.2
          %v896 = vsel %vm884, %v878, %v890
          %v897 = vsel %vm885, %v879, %v891
          %v898 = vsel %vm886, %v880, %v892
          %v899 = vsel %vm887, %v881, %v893
          %v900 = vsel %vm888, %v882, %v894
          %v901 = vsel %vm889, %v883, %v895
          %902 = vst [vmem:[%s294] sm:$0xff] %v896
          %903 = vst [vmem:[%s294 + $0x8] sm:$0xff] %v897
          %904 = vst [vmem:[%s294 + $0x10] sm:$0xff] %v898
          %905 = vst [vmem:[%s294 + $0x18] sm:$0xff] %v899
          %906 = vst [vmem:[%s294 + $0x20] sm:$0xff] %v900
          %907 = vst [vmem:[%s294 + $0x28] sm:$0xff] %v901
        $region52: #{discriminator_forward.8} parent=31 // pred_fallthru
          _
        %s908 = sand.u32 %s134, 1
        %s909 = scalar_lea.sflag [#allocation5], %s908
        %s910 = sand.u32 %s134, 1
        %s911 = smul.addr %s910, 48
        %s912 = scalar_lea.vmem [#allocation9], %s911
        // Predicated region
        $region53: #{discriminator_forward.8} parent=31 // pred_check
          %p913 = pneg %p144
        $region54: #{discriminator_forward.8} parent=31 // pred_check_branch
          %915 = sbr.rel (%p913) target = $region56
        $region55: #{discriminator_forward.8} parent=31 // pred_region
          %s916 = smul.u32 3, %s28
          %s917 = smul.u32 2, %s29
          %s919 = ssub.s32 768, 768
          %920 = vsyncadd %s909, %s919
          %s921 = smul.addr %s916, 4
          %s922 = sadd.s32 %s917, %s921
          %s923 = smul.addr %s922, 128
          %s924 = scalar_lea.hbm %s3, %s923
          %s925 = sshll.u32 %s912, 4
          %s926 = int_to_ptr.vmem [resolvable:$true] %s925
          %931 = dma.vmem_to_hbm [thread:$0]  %s926, 768, %s924, %s909, 256, 512, 16
        $region56: #{discriminator_forward.8} parent=31 // pred_fallthru
          _
      $region32: #{discriminator_forward.8} parent=5 // pred_fallthru
        _
      %p932 = scmp.le.s32.totalorder 2, %s18
      // Predicated region
      $region57: #{discriminator_forward.8} parent=5 // pred_check
        %p933 = pneg %p932
      $region58: #{discriminator_forward.8} parent=5 // pred_check_branch
        %935 = sbr.rel (%p933) target = $region60
      $region59: #{discriminator_forward.8} parent=5 // pred_region
        %s936 = ssub.s32 %s18, 2
        // Predicated region
        $region61: #{discriminator_forward.8} parent=59 // pred_check
          %p937 = pneg %p150
        $region62: #{discriminator_forward.8} parent=59 // pred_check_branch
          %939 = sbr.rel (%p937) target = $region64
        $region63: #{discriminator_forward.8} parent=59 // pred_region
          %s940 = sand.u32 %s135, 1
          %s941 = scalar_lea.sflag [#allocation5], %s940
          %s942 = sand.u32 %s135, 1
          %s943 = smul.addr %s942, 48
          %s944 = scalar_lea.vmem [#allocation9], %s943
          %945 = dma.done %s941, 768
        $region64: #{discriminator_forward.8} parent=59 // pred_fallthru
          _
      $region60: #{discriminator_forward.8} parent=5 // pred_fallthru
        _
    $region6: #{discriminator_forward.8} parent=1 // loop_footer
      %s22 = sadd.s32 1, %s18
    $region7: #{discriminator_forward.8} parent=1 // loop_footer_branch
      %17 = sbr.rel target = $region3
    $region8: #{discriminator_forward.8} parent=1 // loop_exit
      _
    %946 = vsyncpa [#allocation4], 1
    %s947 = scalar_lea.sflag [#allocation4], 1
    %948 = vsyncpa %s947, 1
    %949 = vsyncpa [#allocation7], 1
    %s950 = scalar_lea.sflag [#allocation7], 1
    %951 = vsyncpa %s950, 1
    %952 = vsyncpa [#allocation5], 1
    %s953 = scalar_lea.sflag [#allocation5], 1
    %954 = vsyncpa %s953, 1

// kernel: discriminator_forward.9
$region0: #{discriminator_forward.9}
  #allocation0 [shape = 'u32[]', space=smem, size = 0x4, offset = 0x4, fixed_abs, tag = 'smem constant byte address 0x4 - core index']
  #allocation1 [shape = 'u32[144,128]{1,0:T(1,128)}', space=vmem, size = 0x12000, scoped, tag = 'internal scratch']
  #allocation2 [shape = 'f32[8,128]{1,0:T(8,128)}', space=vmem, size = 0x1000, scoped, tag = 'scratch operand']
  %s0 = inlined_call_operand.hbm [shape: bf16[8,8192], index: 0, kind: input, shape index: {}]
  %s1 = inlined_call_operand.hbm [shape: bf16[8192,128], index: 1, kind: input, shape index: {}]
  %s2 = inlined_call_operand.hbm [shape: f32[1,128], index: 2, kind: input, shape index: {}]
  %s3 = inlined_call_operand.hbm [shape: f32[8,128], index: 3, kind: output, shape index: {}]
  %s4 = sld [smem:[#allocation0]]
  $region65: #{discriminator_forward.9} parent=0
    _
  %s6 = ssub.s32 1, %s4
  %s7 = scalar_select 0, %s6, %s4
  $region1: #{discriminator_forward.9} parent=0
    #allocation3 [shape = 'u8[16384]{0}', space=vmem, size = 0x4000, scoped, tag = 'input window, operand 0']
    #allocation4 [shape = 's32[2]{0}', space=sflag, size = 0x8, scoped, tag = 'scoped memory for discriminator_forward.9']
    #allocation5 [shape = 's32[2]{0}', space=sflag, size = 0x8, scoped, tag = 'scoped memory for discriminator_forward.9']
    #allocation6 [shape = 'u8[262144]{0}', space=vmem, size = 0x40000, scoped, tag = 'input window, operand 1']
    #allocation7 [shape = 's32[2]{0}', space=sflag, size = 0x8, scoped, tag = 'scoped memory for discriminator_forward.9']
    #allocation8 [shape = 'u8[512]{0}', space=vmem, size = 0x400, scoped, tag = 'input window, operand 2, single buffered']
    #allocation9 [shape = 'u8[4096]{0}', space=vmem, size = 0x1000, scoped, tag = 'output window, operand 0, single buffered']
    %8 = vsyncpa [#allocation4], 0
    %s9 = scalar_lea.sflag [#allocation4], 1
    %10 = vsyncpa %s9, 0
    %11 = vsyncpa [#allocation7], 0
    %s12 = scalar_lea.sflag [#allocation7], 1
    %13 = vsyncpa %s12, 0
    %14 = vsyncpa [#allocation5], 0
    loop: start=0, step=1, limit=18
    $region2: #{discriminator_forward.9} parent=1 // loop_pre_header
      _
    $region3: #{discriminator_forward.9} parent=1 // loop_header
      %s16 = sphi 0, %s20
      %p17 = scmp.ge.s32.totalorder %s16, 18
      %s23 = sphi 0, %s42
      %s24 = sphi 0, %s38
      %s25 = sphi 0, %s34
      %s26 = sphi 0, %s23
      %s27 = sphi 0, %s24
      %s28 = sphi 0, %s25
      %s29 = sphi 0, %s26
      %s30 = sphi 0, %s27
      %s31 = sphi 0, %s28
      %s47 = sphi 0, %s49
      %s50 = sphi 0, %s47
      %s51 = sphi 0, %s50
      %s67 = sphi 0, %s51
      %s75 = sphi 0, %s77
      %s78 = sphi 0, %s75
      %s79 = sphi 0, %s78
      %s95 = sphi 0, %s79
      %s101 = sphi 0, %s103
      %s104 = sphi 0, %s101
      %s105 = sphi 0, %s104
      %s121 = sphi 0, %s105
      %s129 = sphi 0, %s131
      %s132 = sphi 0, %s129
      %s133 = sphi 0, %s132
      %s149 = sphi 0, %s133
    $region4: #{discriminator_forward.9} parent=1 // loop_header_branch
      %19 = sbr.rel (%p17) target = $region8
    $region5: #{discriminator_forward.9} parent=1 // loop_body
      %s21 = ssub.s32 %s16, 1
      %s22 = ssub.s32 %s16, 2
      %s32 = sadd.s32 1, %s25
      %p33 = scmp.ge.s32.totalorder %s32, 16
      %s34 = scalar_select %p33, 0, %s32
      %s35 = sadd.s32 1, %s24
      %s36 = scalar_select %p33, %s35, %s24
      %p37 = scmp.ge.s32.totalorder %s36, 1
      %s38 = scalar_select %p37, 0, %s36
      %s39 = sadd.s32 1, %s23
      %s40 = scalar_select %p37, %s39, %s23
      %p41 = scmp.ge.s32.totalorder %s40, 1
      %s42 = scalar_select %p41, 0, %s40
      %s43 = ssub.s32 %s23, %s42
      %s44 = ssub.s32 %s25, %s34
      %s45 = sor.u32 %s43, %s44
      %p46 = scmp.eq.s32.totalorder %s45, 0
      %s48 = sadd.s32 %s47, 1
      %s49 = scalar_select %p46, %s47, %s48
      %p52 = pneg %p46
      %p53 = scmp.eq.s32.totalorder %s16, 15
      %p54 = por %p52, %p53
      %p55 = scmp.ne.s32.totalorder %s47, %s50
      %p56 = scmp.eq.s32.totalorder %s16, 0
      %p57 = por %p55, %p56
      %p58 = scmp.ne.s32.totalorder %s47, %s50
      %p59 = scmp.eq.s32.totalorder %s21, 15
      %p60 = por %p58, %p59
      %p61 = scmp.ne.s32.totalorder %s50, %s51
      %p62 = scmp.eq.s32.totalorder %s21, 0
      %p63 = por %p61, %p62
      %p64 = scmp.ne.s32.totalorder %s50, %s51
      %p65 = scmp.eq.s32.totalorder %s22, 15
      %p66 = por %p64, %p65
      %p68 = scmp.ne.s32.totalorder %s51, %s67
      %p69 = scmp.eq.s32.totalorder %s22, 0
      %p70 = por %p68, %p69
      %s71 = ssub.s32 %s25, %s34
      %s72 = ssub.s32 %s24, %s38
      %s73 = sor.u32 %s71, %s72
      %p74 = scmp.eq.s32.totalorder %s73, 0
      %s76 = sadd.s32 %s75, 1
      %s77 = scalar_select %p74, %s75, %s76
      %p80 = pneg %p74
      %p81 = scmp.eq.s32.totalorder %s16, 15
      %p82 = por %p80, %p81
      %p83 = scmp.ne.s32.totalorder %s75, %s78
      %p84 = scmp.eq.s32.totalorder %s16, 0
      %p85 = por %p83, %p84
      %p86 = scmp.ne.s32.totalorder %s75, %s78
      %p87 = scmp.eq.s32.totalorder %s21, 15
      %p88 = por %p86, %p87
      %p89 = scmp.ne.s32.totalorder %s78, %s79
      %p90 = scmp.eq.s32.totalorder %s21, 0
      %p91 = por %p89, %p90
      %p92 = scmp.ne.s32.totalorder %s78, %s79
      %p93 = scmp.eq.s32.totalorder %s22, 15
      %p94 = por %p92, %p93
      %p96 = scmp.ne.s32.totalorder %s79, %s95
      %p97 = scmp.eq.s32.totalorder %s22, 0
      %p98 = por %p96, %p97
      %s99 = ssub.s32 %s24, %s38
      %p100 = scmp.eq.s32.totalorder %s99, 0
      %s102 = sadd.s32 %s101, 1
      %s103 = scalar_select %p100, %s101, %s102
      %p106 = pneg %p100
      %p107 = scmp.eq.s32.totalorder %s16, 15
      %p108 = por %p106, %p107
      %p109 = scmp.ne.s32.totalorder %s101, %s104
      %p110 = scmp.eq.s32.totalorder %s16, 0
      %p111 = por %p109, %p110
      %p112 = scmp.ne.s32.totalorder %s101, %s104
      %p113 = scmp.eq.s32.totalorder %s21, 15
      %p114 = por %p112, %p113
      %p115 = scmp.ne.s32.totalorder %s104, %s105
      %p116 = scmp.eq.s32.totalorder %s21, 0
      %p117 = por %p115, %p116
      %p118 = scmp.ne.s32.totalorder %s104, %s105
      %p119 = scmp.eq.s32.totalorder %s22, 15
      %p120 = por %p118, %p119
      %p122 = scmp.ne.s32.totalorder %s105, %s121
      %p123 = scmp.eq.s32.totalorder %s22, 0
      %p124 = por %p122, %p123
      %s125 = ssub.s32 %s23, %s42
      %s126 = ssub.s32 %s24, %s38
      %s127 = sor.u32 %s125, %s126
      %p128 = scmp.eq.s32.totalorder %s127, 0
      %s130 = sadd.s32 %s129, 1
      %s131 = scalar_select %p128, %s129, %s130
      %p134 = pneg %p128
      %p135 = scmp.eq.s32.totalorder %s16, 15
      %p136 = por %p134, %p135
      %p137 = scmp.ne.s32.totalorder %s129, %s132
      %p138 = scmp.eq.s32.totalorder %s16, 0
      %p139 = por %p137, %p138
      %p140 = scmp.ne.s32.totalorder %s129, %s132
      %p141 = scmp.eq.s32.totalorder %s21, 15
      %p142 = por %p140, %p141
      %p143 = scmp.ne.s32.totalorder %s132, %s133
      %p144 = scmp.eq.s32.totalorder %s21, 0
      %p145 = por %p143, %p144
      %p146 = scmp.ne.s32.totalorder %s132, %s133
      %p147 = scmp.eq.s32.totalorder %s22, 15
      %p148 = por %p146, %p147
      %p150 = scmp.ne.s32.totalorder %s133, %s149
      %p151 = scmp.eq.s32.totalorder %s22, 0
      %p152 = por %p150, %p151
      %p153 = scmp.le.s32.totalorder 1, %s16
      %p154 = scmp.lt.s32.totalorder %s16, 17
      %p155 = pnand %p153, %p154
      %p156 = pneg %p155
      // Predicated region
      $region9: #{discriminator_forward.9} parent=5 // pred_check
        _
      $region10: #{discriminator_forward.9} parent=5 // pred_check_branch
        %158 = sbr.rel (%p155) target = $region12
      $region11: #{discriminator_forward.9} parent=5 // pred_region
        %s159 = ssub.s32 %s16, 1
        // Predicated region
        $region13: #{discriminator_forward.9} parent=11 // pred_check
          %p160 = pneg %p117
        $region14: #{discriminator_forward.9} parent=11 // pred_check_branch
          %162 = sbr.rel (%p160) target = $region16
        $region15: #{discriminator_forward.9} parent=11 // pred_region
          %s164 = ssub.s32 16, 16
          %165 = vsyncadd [#allocation7], %s164
          %s166 = smul.addr %s27, 16
          %s167 = scalar_lea.hbm %s2, %s166
          %s169 = sshll.u32 [#allocation8], 4
          %s170 = int_to_ptr.vmem [resolvable:$true] %s169
          %172 = dma.hbm_to_vmem [thread:$0]  %s167, 16, %s170, [#allocation7]
        $region16: #{discriminator_forward.9} parent=11 // pred_fallthru
          _
      $region12: #{discriminator_forward.9} parent=5 // pred_fallthru
        _
      %p173 = scmp.lt.s32.totalorder %s16, 16
      // Predicated region
      $region17: #{discriminator_forward.9} parent=5 // pred_check
        %p174 = pneg %p173
      $region18: #{discriminator_forward.9} parent=5 // pred_check_branch
        %176 = sbr.rel (%p174) target = $region20
      $region19: #{discriminator_forward.9} parent=5 // pred_region
        // Predicated region
        $region21: #{discriminator_forward.9} parent=19 // pred_check
          %p177 = pneg %p57
        $region22: #{discriminator_forward.9} parent=19 // pred_check_branch
          %179 = sbr.rel (%p177) target = $region24
        $region23: #{discriminator_forward.9} parent=19 // pred_region
          %s180 = sand.u32 %s47, 1
          %s181 = scalar_lea.sflag [#allocation4], %s180
          %s182 = sand.u32 %s47, 1
          %s183 = smul.addr %s182, 16
          %s184 = scalar_lea.vmem [#allocation3], %s183
          %s185 = smul.u32 4, %s25
          %s187 = ssub.s32 256, 256
          %188 = vsyncadd %s181, %s187
          %s189 = smul.addr %s23, 64
          %s190 = sadd.s32 %s185, %s189
          %s191 = smul.addr %s190, 64
          %s192 = scalar_lea.hbm %s0, %s191
          %s194 = sshll.u32 %s184, 4
          %s195 = int_to_ptr.vmem [resolvable:$true] %s194
          %197 = dma.hbm_to_vmem [thread:$0]  %s192, 256, %s195, %s181
        $region24: #{discriminator_forward.9} parent=19 // pred_fallthru
          _
        // Predicated region
        $region25: #{discriminator_forward.9} parent=19 // pred_check
          %p198 = pneg %p85
        $region26: #{discriminator_forward.9} parent=19 // pred_check_branch
          %200 = sbr.rel (%p198) target = $region28
        $region27: #{discriminator_forward.9} parent=19 // pred_region
          %s201 = sand.u32 %s16, 1
          %s202 = scalar_lea.sflag [#allocation7], %s201
          %s203 = sand.u32 %s75, 1
          %s204 = smul.addr %s203, 256
          %s205 = scalar_lea.vmem [#allocation6], %s204
          %s206 = smul.u32 64, %s25
          %s208 = ssub.s32 4096, 4096
          %209 = vsyncadd %s202, %s208
          %s210 = sadd.s32 %s24, %s206
          %s211 = smul.addr %s210, 64
          %s212 = scalar_lea.hbm %s1, %s211
          %s213 = sshll.u32 %s205, 4
          %s214 = int_to_ptr.vmem [resolvable:$true] %s213
          %219 = dma.hbm_to_vmem [thread:$0]  %s212, 4096, %s214, %s202, 64, 64, 4
        $region28: #{discriminator_forward.9} parent=19 // pred_fallthru
          _
      $region20: #{discriminator_forward.9} parent=5 // pred_fallthru
        _
      %p220 = scmp.le.s32.totalorder 1, %s16
      %p221 = scmp.lt.s32.totalorder %s16, 17
      %p222 = pnand %p220, %p221
      %p223 = pneg %p222
      // Predicated region
      $region29: #{discriminator_forward.9} parent=5 // pred_check
        _
      $region30: #{discriminator_forward.9} parent=5 // pred_check_branch
        %225 = sbr.rel (%p222) target = $region32
      $region31: #{discriminator_forward.9} parent=5 // pred_region
        %s226 = ssub.s32 %s16, 1
        %s227 = sand.u32 %s50, 1
        %s228 = scalar_lea.sflag [#allocation4], %s227
        %s229 = sand.u32 %s50, 1
        %s230 = smul.addr %s229, 16
        %s231 = scalar_lea.vmem [#allocation3], %s230
        // Predicated region
        $region33: #{discriminator_forward.9} parent=31 // pred_check
          %p232 = pneg %p63
        $region34: #{discriminator_forward.9} parent=31 // pred_check_branch
          %234 = sbr.rel (%p232) target = $region36
        $region35: #{discriminator_forward.9} parent=31 // pred_region
          %235 = dma.done %s228, 256
        $region36: #{discriminator_forward.9} parent=31 // pred_fallthru
          _
        %s236 = sand.u32 %s21, 1
        %s237 = scalar_lea.sflag [#allocation7], %s236
        %s238 = sand.u32 %s78, 1
        %s239 = smul.addr %s238, 256
        %s240 = scalar_lea.vmem [#allocation6], %s239
        // Predicated region
        $region37: #{discriminator_forward.9} parent=31 // pred_check
          %p241 = pneg %p91
        $region38: #{discriminator_forward.9} parent=31 // pred_check_branch
          %243 = sbr.rel (%p241) target = $region40
        $region39: #{discriminator_forward.9} parent=31 // pred_region
          %244 = dma.done %s237, 4096
        $region40: #{discriminator_forward.9} parent=31 // pred_fallthru
          _
        // Predicated region
        $region41: #{discriminator_forward.9} parent=31 // pred_check
          %p245 = pneg %p117
        $region42: #{discriminator_forward.9} parent=31 // pred_check_branch
          %247 = sbr.rel (%p245) target = $region44
        $region43: #{discriminator_forward.9} parent=31 // pred_region
          %248 = dma.done [#allocation7], 16
        $region44: #{discriminator_forward.9} parent=31 // pred_fallthru
          _
        %s249 = sand.u32 %s50, 1
        %s250 = scalar_lea.sflag [#allocation4], %s249
        %s251 = sand.u32 %s50, 1
        %s252 = smul.addr %s251, 16
        %s253 = scalar_lea.vmem [#allocation3], %s252
        %p254 = pneg %p63
        %p255 = pneg %p60
        %s256 = sand.u32 %s21, 1
        %s257 = scalar_lea.sflag [#allocation7], %s256
        %s258 = sand.u32 %s78, 1
        %s259 = smul.addr %s258, 256
        %s260 = scalar_lea.vmem [#allocation6], %s259
        %p261 = pneg %p91
        %p262 = pneg %p88
        %p263 = pneg %p117
        %p264 = pneg %p114
        %p265 = pneg %p145
        %p266 = pneg %p142
        %s267 = smul.u32 4, %s28
        %s268 = smul.u32 64, %s28
        %p270 = scmp.eq.s32.totalorder %s28, 0
        // Predicated region
        $region45: #{discriminator_forward.9} parent=31 // pred_check
          %p271 = pneg %p270
        $region46: #{discriminator_forward.9} parent=31 // pred_check_branch
          %273 = sbr.rel (%p271) target = $region48
        $region47: #{discriminator_forward.9} parent=31 // pred_region
          %274 = vst [vmem:[#allocation2] sm:$0xff] 0.0
        $region48: #{discriminator_forward.9} parent=31 // pred_fallthru
          _
        %v275 = vld [vmem:[#allocation2] sm:$0xff]
        %v276 = vld [vmem:[%s231] sm:$0xff]
        %v277 = vld [vmem:[%s231 + $0x8] sm:$0xff]
        %v278 = vld [vmem:[%s240] sm:$0xf]
        %v279 = vld [vmem:[%s240 + $0x4] sm:$0xf]
        %v280 = vld [vmem:[%s240 + $0x8] sm:$0xf]
        %v281 = vld [vmem:[%s240 + $0xc] sm:$0xf]
        %v282 = vld [vmem:[%s240 + $0x10] sm:$0xf]
        %v283 = vld [vmem:[%s240 + $0x14] sm:$0xf]
        %v284 = vld [vmem:[%s240 + $0x18] sm:$0xf]
        %v285 = vld [vmem:[%s240 + $0x1c] sm:$0xf]
        %v286 = vld [vmem:[%s240 + $0x20] sm:$0xf]
        %v287 = vld [vmem:[%s240 + $0x24] sm:$0xf]
        %v288 = vld [vmem:[%s240 + $0x28] sm:$0xf]
        %v289 = vld [vmem:[%s240 + $0x2c] sm:$0xf]
        %v290 = vld [vmem:[%s240 + $0x30] sm:$0xf]
        %v291 = vld [vmem:[%s240 + $0x34] sm:$0xf]
        %v292 = vld [vmem:[%s240 + $0x38] sm:$0xf]
        %v293 = vld [vmem:[%s240 + $0x3c] sm:$0xf]
        %v294 = vld [vmem:[%s240 + $0x40] sm:$0xf]
        %v295 = vld [vmem:[%s240 + $0x44] sm:$0xf]
        %v296 = vld [vmem:[%s240 + $0x48] sm:$0xf]
        %v297 = vld [vmem:[%s240 + $0x4c] sm:$0xf]
        %v298 = vld [vmem:[%s240 + $0x50] sm:$0xf]
        %v299 = vld [vmem:[%s240 + $0x54] sm:$0xf]
        %v300 = vld [vmem:[%s240 + $0x58] sm:$0xf]
        %v301 = vld [vmem:[%s240 + $0x5c] sm:$0xf]
        %v302 = vld [vmem:[%s240 + $0x60] sm:$0xf]
        %v303 = vld [vmem:[%s240 + $0x64] sm:$0xf]
        %v304 = vld [vmem:[%s240 + $0x68] sm:$0xf]
        %v305 = vld [vmem:[%s240 + $0x6c] sm:$0xf]
        %v306 = vld [vmem:[%s240 + $0x70] sm:$0xf]
        %v307 = vld [vmem:[%s240 + $0x74] sm:$0xf]
        %v308 = vld [vmem:[%s240 + $0x78] sm:$0xf]
        %v309 = vld [vmem:[%s240 + $0x7c] sm:$0xf]
        %v310 = vld [vmem:[%s240 + $0x80] sm:$0xf]
        %v311 = vld [vmem:[%s240 + $0x84] sm:$0xf]
        %v312 = vld [vmem:[%s240 + $0x88] sm:$0xf]
        %v313 = vld [vmem:[%s240 + $0x8c] sm:$0xf]
        %v314 = vld [vmem:[%s240 + $0x90] sm:$0xf]
        %v315 = vld [vmem:[%s240 + $0x94] sm:$0xf]
        %v316 = vld [vmem:[%s240 + $0x98] sm:$0xf]
        %v317 = vld [vmem:[%s240 + $0x9c] sm:$0xf]
        %v318 = vld [vmem:[%s240 + $0xa0] sm:$0xf]
        %v319 = vld [vmem:[%s240 + $0xa4] sm:$0xf]
        %v320 = vld [vmem:[%s240 + $0xa8] sm:$0xf]
        %v321 = vld [vmem:[%s240 + $0xac] sm:$0xf]
        %v322 = vld [vmem:[%s240 + $0xb0] sm:$0xf]
        %v323 = vld [vmem:[%s240 + $0xb4] sm:$0xf]
        %v324 = vld [vmem:[%s240 + $0xb8] sm:$0xf]
        %v325 = vld [vmem:[%s240 + $0xbc] sm:$0xf]
        %v326 = vld [vmem:[%s240 + $0xc0] sm:$0xf]
        %v327 = vld [vmem:[%s240 + $0xc4] sm:$0xf]
        %v328 = vld [vmem:[%s240 + $0xc8] sm:$0xf]
        %v329 = vld [vmem:[%s240 + $0xcc] sm:$0xf]
        %v330 = vld [vmem:[%s240 + $0xd0] sm:$0xf]
        %v331 = vld [vmem:[%s240 + $0xd4] sm:$0xf]
        %v332 = vld [vmem:[%s240 + $0xd8] sm:$0xf]
        %v333 = vld [vmem:[%s240 + $0xdc] sm:$0xf]
        %v334 = vld [vmem:[%s240 + $0xe0] sm:$0xf]
        %v335 = vld [vmem:[%s240 + $0xe4] sm:$0xf]
        %v336 = vld [vmem:[%s240 + $0xe8] sm:$0xf]
        %v337 = vld [vmem:[%s240 + $0xec] sm:$0xf]
        %v338 = vld [vmem:[%s240 + $0xf0] sm:$0xf]
        %v339 = vld [vmem:[%s240 + $0xf4] sm:$0xf]
        %v340 = vld [vmem:[%s240 + $0xf8] sm:$0xf]
        %v341 = vld [vmem:[%s240 + $0xfc] sm:$0xf]
        %v344 = vunpack.c.l.b16 %v276
        %v345 = vunpack.c.h.b16 %v276
        %v346 = vunpack.c.l.b16 %v277
        %v347 = vunpack.c.h.b16 %v277
        %v348 = vpack.c.b16 %v344, %v344
        %v349 = vpack.c.b16 %v345, %v345
        %v350 = vpack.c.b16 %v346, %v346
        %v351 = vpack.c.b16 %v347, %v347
        %v420 = vunpack.c.l.b16 %v278
        %v421 = vunpack.c.l.b16 %v279
        %v422 = vunpack.c.l.b16 %v280
        %v423 = vunpack.c.l.b16 %v281
        %v424 = vunpack.c.l.b16 %v282
        %v425 = vunpack.c.l.b16 %v283
        %v426 = vunpack.c.l.b16 %v284
        %v427 = vunpack.c.l.b16 %v285
        %v428 = vunpack.c.l.b16 %v286
        %v429 = vunpack.c.l.b16 %v287
        %v430 = vunpack.c.l.b16 %v288
        %v431 = vunpack.c.l.b16 %v289
        %v432 = vunpack.c.l.b16 %v290
        %v433 = vunpack.c.l.b16 %v291
        %v434 = vunpack.c.l.b16 %v292
        %v435 = vunpack.c.l.b16 %v293
        %v436 = vunpack.c.l.b16 %v294
        %v437 = vunpack.c.l.b16 %v295
        %v438 = vunpack.c.l.b16 %v296
        %v439 = vunpack.c.l.b16 %v297
        %v440 = vunpack.c.l.b16 %v298
        %v441 = vunpack.c.l.b16 %v299
        %v442 = vunpack.c.l.b16 %v300
        %v443 = vunpack.c.l.b16 %v301
        %v444 = vunpack.c.l.b16 %v302
        %v445 = vunpack.c.l.b16 %v303
        %v446 = vunpack.c.l.b16 %v304
        %v447 = vunpack.c.l.b16 %v305
        %v448 = vunpack.c.l.b16 %v306
        %v449 = vunpack.c.l.b16 %v307
        %v450 = vunpack.c.l.b16 %v308
        %v451 = vunpack.c.l.b16 %v309
        %v452 = vunpack.c.l.b16 %v310
        %v453 = vunpack.c.l.b16 %v311
        %v454 = vunpack.c.l.b16 %v312
        %v455 = vunpack.c.l.b16 %v313
        %v456 = vunpack.c.l.b16 %v314
        %v457 = vunpack.c.l.b16 %v315
        %v458 = vunpack.c.l.b16 %v316
        %v459 = vunpack.c.l.b16 %v317
        %v460 = vunpack.c.l.b16 %v318
        %v461 = vunpack.c.l.b16 %v319
        %v462 = vunpack.c.l.b16 %v320
        %v463 = vunpack.c.l.b16 %v321
        %v464 = vunpack.c.l.b16 %v322
        %v465 = vunpack.c.l.b16 %v323
        %v466 = vunpack.c.l.b16 %v324
        %v467 = vunpack.c.l.b16 %v325
        %v468 = vunpack.c.l.b16 %v326
        %v469 = vunpack.c.l.b16 %v327
        %v470 = vunpack.c.l.b16 %v328
        %v471 = vunpack.c.l.b16 %v329
        %v472 = vunpack.c.l.b16 %v330
        %v473 = vunpack.c.l.b16 %v331
        %v474 = vunpack.c.l.b16 %v332
        %v475 = vunpack.c.l.b16 %v333
        %v476 = vunpack.c.l.b16 %v334
        %v477 = vunpack.c.l.b16 %v335
        %v478 = vunpack.c.l.b16 %v336
        %v479 = vunpack.c.l.b16 %v337
        %v480 = vunpack.c.l.b16 %v338
        %v481 = vunpack.c.l.b16 %v339
        %v482 = vunpack.c.l.b16 %v340
        %v483 = vunpack.c.l.b16 %v341
        %v484 = vpack.c.b16 %v421, %v420
        %v485 = vpack.c.b16 %v423, %v422
        %v486 = vpack.c.b16 %v425, %v424
        %v487 = vpack.c.b16 %v427, %v426
        %v488 = vpack.c.b16 %v429, %v428
        %v489 = vpack.c.b16 %v431, %v430
        %v490 = vpack.c.b16 %v433, %v432
        %v491 = vpack.c.b16 %v435, %v434
        %v492 = vpack.c.b16 %v437, %v436
        %v493 = vpack.c.b16 %v439, %v438
        %v494 = vpack.c.b16 %v441, %v440
        %v495 = vpack.c.b16 %v443, %v442
        %v496 = vpack.c.b16 %v445, %v444
        %v497 = vpack.c.b16 %v447, %v446
        %v498 = vpack.c.b16 %v449, %v448
        %v499 = vpack.c.b16 %v451, %v450
        %v500 = vpack.c.b16 %v453, %v452
        %v501 = vpack.c.b16 %v455, %v454
        %v502 = vpack.c.b16 %v457, %v456
        %v503 = vpack.c.b16 %v459, %v458
        %v504 = vpack.c.b16 %v461, %v460
        %v505 = vpack.c.b16 %v463, %v462
        %v506 = vpack.c.b16 %v465, %v464
        %v507 = vpack.c.b16 %v467, %v466
        %v508 = vpack.c.b16 %v469, %v468
        %v509 = vpack.c.b16 %v471, %v470
        %v510 = vpack.c.b16 %v473, %v472
        %v511 = vpack.c.b16 %v475, %v474
        %v512 = vpack.c.b16 %v477, %v476
        %v513 = vpack.c.b16 %v479, %v478
        %v514 = vpack.c.b16 %v481, %v480
        %v515 = vpack.c.b16 %v483, %v482
        %548 = vmatprep.subr.bf16.mxu0 0
        %549 = vmatpush1.bf16.msra.mxu0 %v484
        %550 = vmatprep.subr.bf16.mxu0 0
        %551 = vmatpush1.bf16.msra.mxu0 %v485
        %552 = vmatprep.subr.bf16.mxu0 0
        %553 = vmatpush1.bf16.msra.mxu0 %v486
        %554 = vmatprep.subr.bf16.mxu0 0
        %555 = vmatpush1.bf16.msra.mxu0 %v487
        %556 = vmatprep.subr.bf16.mxu0 0
        %557 = vmatpush1.bf16.msra.mxu0 %v488
        %558 = vmatprep.subr.bf16.mxu0 0
        %559 = vmatpush1.bf16.msra.mxu0 %v489
        %560 = vmatprep.subr.bf16.mxu0 0
        %561 = vmatpush1.bf16.msra.mxu0 %v490
        %562 = vmatprep.subr.bf16.mxu0 0
        %563 = vmatpush1.bf16.msra.mxu0 %v491
        %564 = vmatprep.subr.bf16.mxu0 0
        %565 = vmatpush1.bf16.msra.mxu0 %v492
        %566 = vmatprep.subr.bf16.mxu0 0
        %567 = vmatpush1.bf16.msra.mxu0 %v493
        %568 = vmatprep.subr.bf16.mxu0 0
        %569 = vmatpush1.bf16.msra.mxu0 %v494
        %570 = vmatprep.subr.bf16.mxu0 0
        %571 = vmatpush1.bf16.msra.mxu0 %v495
        %572 = vmatprep.subr.bf16.mxu0 0
        %573 = vmatpush1.bf16.msra.mxu0 %v496
        %574 = vmatprep.subr.bf16.mxu0 0
        %575 = vmatpush1.bf16.msra.mxu0 %v497
        %576 = vmatprep.subr.bf16.mxu0 0
        %577 = vmatpush1.bf16.msra.mxu0 %v498
        %578 = vmatprep.subr.bf16.mxu0 0
        %579 = vmatpush1.bf16.msra.mxu0 %v499
        %580 = vmatprep.mubr.bf16.mxu0 %v349
        %581 = vmatmul.mubr.bf16.gmra.mrb[0].mxu0 %v348
        %v582 = vpop.f32.mrb[0].mxu0
        %v583 = vadd.f32 0.0, %v582
        %v584 = vpop.f32.mrb[0].mxu0
        %v585 = vpop.f32.mrb[0].mxu0
        %v586 = vpop.f32.mrb[0].mxu0
        %587 = vdwg.mxu0
        %588 = vmatprep.subr.bf16.mxu0 0
        %589 = vmatpush1.bf16.msra.mxu0 %v500
        %590 = vmatprep.subr.bf16.mxu0 0
        %591 = vmatpush1.bf16.msra.mxu0 %v501
        %592 = vmatprep.subr.bf16.mxu0 0
        %593 = vmatpush1.bf16.msra.mxu0 %v502
        %594 = vmatprep.subr.bf16.mxu0 0
        %595 = vmatpush1.bf16.msra.mxu0 %v503
        %596 = vmatprep.subr.bf16.mxu0 0
        %597 = vmatpush1.bf16.msra.mxu0 %v504
        %598 = vmatprep.subr.bf16.mxu0 0
        %599 = vmatpush1.bf16.msra.mxu0 %v505
        %600 = vmatprep.subr.bf16.mxu0 0
        %601 = vmatpush1.bf16.msra.mxu0 %v506
        %602 = vmatprep.subr.bf16.mxu0 0
        %603 = vmatpush1.bf16.msra.mxu0 %v507
        %604 = vmatprep.subr.bf16.mxu0 0
        %605 = vmatpush1.bf16.msra.mxu0 %v508
        %606 = vmatprep.subr.bf16.mxu0 0
        %607 = vmatpush1.bf16.msra.mxu0 %v509
        %608 = vmatprep.subr.bf16.mxu0 0
        %609 = vmatpush1.bf16.msra.mxu0 %v510
        %610 = vmatprep.subr.bf16.mxu0 0
        %611 = vmatpush1.bf16.msra.mxu0 %v511
        %612 = vmatprep.subr.bf16.mxu0 0
        %613 = vmatpush1.bf16.msra.mxu0 %v512
        %614 = vmatprep.subr.bf16.mxu0 0
        %615 = vmatpush1.bf16.msra.mxu0 %v513
        %616 = vmatprep.subr.bf16.mxu0 0
        %617 = vmatpush1.bf16.msra.mxu0 %v514
        %618 = vmatprep.subr.bf16.mxu0 0
        %619 = vmatpush1.bf16.msra.mxu0 %v515
        %620 = vmatprep.mubr.bf16.mxu0 %v351
        %621 = vmatmul.mubr.bf16.gmra.mrb[0].mxu0 %v350
        %v622 = vpop.f32.mrb[0].mxu0
        %v623 = vadd.f32 %v583, %v622
        %v624 = vpop.f32.mrb[0].mxu0
        %v625 = vpop.f32.mrb[0].mxu0
        %v626 = vpop.f32.mrb[0].mxu0
        %627 = vdwg.mxu0
        %v628 = vadd.f32 %v275, %v623
        %629 = vst [vmem:[#allocation2] sm:$0xff] %v628
        %p630 = scmp.eq.s32.totalorder %s28, 15
        // Predicated region
        $region49: #{discriminator_forward.9} parent=31 // pred_check
          %p631 = pneg %p630
        $region50: #{discriminator_forward.9} parent=31 // pred_check_branch
          %633 = sbr.rel (%p631) target = $region52
        $region51: #{discriminator_forward.9} parent=31 // pred_region
          %v634 = vld [vmem:[#allocation2] sm:$0xff]
          %v635 = vld [vmem:[#allocation8] sm:$0x1]
          %v637 = vlaneseq
          %v638 = vshrl.u32 %v637, 7
          %v639 = vsub.s32 0, %v638
          %v640 = vrot.slane %v635, %v639
          %v642 = vadd.f32 %v634, %v640
          %v643 = vxor.u32 %v642, 2147483648
          %v644 = vmul.f32 %v643, 1.442695
          %v645 = vpow.pop %v644
          %v646 = vadd.f32 %v645, 1.0
          %v647 = vrcp.pop %v646
          %v648 = vmul.f32 1.0, %v647
          %649 = vst [vmem:[#allocation9] sm:$0xff] %v648
        $region52: #{discriminator_forward.9} parent=31 // pred_fallthru
          _
        // Predicated region
        $region53: #{discriminator_forward.9} parent=31 // pred_check
          %p650 = pneg %p142
        $region54: #{discriminator_forward.9} parent=31 // pred_check_branch
          %652 = sbr.rel (%p650) target = $region56
        $region55: #{discriminator_forward.9} parent=31 // pred_region
          %s654 = ssub.s32 128, 128
          %655 = vsyncadd [#allocation5], %s654
          %s656 = sadd.s32 %s27, %s26
          %s657 = smul.addr %s656, 128
          %s658 = scalar_lea.hbm %s3, %s657
          %s660 = sshll.u32 [#allocation9], 4
          %s661 = int_to_ptr.vmem [resolvable:$true] %s660
          %663 = dma.vmem_to_hbm [thread:$0]  %s661, 128, %s658, [#allocation5]
        $region56: #{discriminator_forward.9} parent=31 // pred_fallthru
          _
        // Predicated region
        $region57: #{discriminator_forward.9} parent=31 // pred_check
          %p664 = pneg %p142
        $region58: #{discriminator_forward.9} parent=31 // pred_check_branch
          %666 = sbr.rel (%p664) target = $region60
        $region59: #{discriminator_forward.9} parent=31 // pred_region
          %667 = dma.done [#allocation5], 128
        $region60: #{discriminator_forward.9} parent=31 // pred_fallthru
          _
      $region32: #{discriminator_forward.9} parent=5 // pred_fallthru
        _
      %p668 = scmp.le.s32.totalorder 2, %s16
      // Predicated region
      $region61: #{discriminator_forward.9} parent=5 // pred_check
        %p669 = pneg %p668
      $region62: #{discriminator_forward.9} parent=5 // pred_check_branch
        %671 = sbr.rel (%p669) target = $region64
      $region63: #{discriminator_forward.9} parent=5 // pred_region
        %s672 = ssub.s32 %s16, 2
      $region64: #{discriminator_forward.9} parent=5 // pred_fallthru
        _
    $region6: #{discriminator_forward.9} parent=1 // loop_footer
      %s20 = sadd.s32 1, %s16
    $region7: #{discriminator_forward.9} parent=1 // loop_footer_branch
      %15 = sbr.rel target = $region3
    $region8: #{discriminator_forward.9} parent=1 // loop_exit
      _
    %673 = vsyncpa [#allocation4], 1
    %s674 = scalar_lea.sflag [#allocation4], 1
    %675 = vsyncpa %s674, 1
    %676 = vsyncpa [#allocation7], 1
    %s677 = scalar_lea.sflag [#allocation7], 1
    %678 = vsyncpa %s677, 1
    %679 = vsyncpa [#allocation5], 1
    %s680 = scalar_lea.sflag [#allocation5], 1
    %681 = vsyncpa %s680, 1

</llo_original>
